<compile_context>
chip_gen: v6e
topology: v6e:2x2x1
jax: 0.10.0
libtpu: 0.0.40
codegen_flags: <defaults>
</compile_context>

<pallas_src>
import jax
import jax.numpy as jnp
from jax.experimental import pallas as pl
from jax.experimental.pallas import tpu as pltpu


LANE = 128
BN_EPS = 1e-5


def _round_up(x, m):
    return -(-x // m) * m


def _pick_tile_h(H, W, max_m=2048):
    """Largest divisor TH of H with TH*W <= max_m and TH*W % 8 == 0."""
    best = None
    for th in range(1, H + 1):
        if H % th:
            continue
        m = th * W
        if m % 8 and th != H:          # keep block 2nd-minor divisible by 8
            continue
        if m <= max_m:
            best = th
    return best if best is not None else H


# ---------------------------------------------------------------------------
# Kernels
# ---------------------------------------------------------------------------
def _conv1_kernel(p_ref, w_ref, b_ref, y_ref, s_ref):
    """Conv1 (+bias) as a single matmul over pre-built im2col patches,
    fused per-image BN1-statistics accumulation.

    p_ref: (1, TH*W, 9*Cin) bf16   patches (SAME zero padding baked in)
    w_ref: (9*Cin, Cp) bf16 ; b_ref: (1, Cp) f32
    y_ref: (1, TH, W, Cp) bf16
    s_ref: (1, 2, Cp) f32          [sum, sum_sq], accumulated over H-tile axis
    """
    t = pl.program_id(1)
    _, th, wd, cp = y_ref.shape

    acc = jnp.dot(p_ref[0], w_ref[...],
                  preferred_element_type=jnp.float32) + b_ref[...]
    y_ref[...] = acc.reshape(1, th, wd, cp).astype(y_ref.dtype)

    @pl.when(t == 0)
    def _():
        s_ref[...] = jnp.zeros_like(s_ref)

    st = jnp.concatenate([jnp.sum(acc, axis=0, keepdims=True),
                          jnp.sum(acc * acc, axis=0, keepdims=True)], axis=0)
    s_ref[...] += st[None]


def _bn_relu_conv2_kernel(top_ref, ctr_ref, bot_ref, sc_ref, sh_ref,
                          w_ref, b_ref, y_ref, s_ref):
    """Fused BN1(batch stats)+ReLU on load, 3x3 conv2 (+bias), BN2-stat accum.

    top_ref/bot_ref: (1, 1, W, Cp) bf16  clamped halo rows (zeroed at edges)
    ctr_ref:         (1, TH, W, Cp) bf16 current y1 row tile
    sc_ref/sh_ref:   (1, Cp) f32         folded BN1 scale / shift
    w_ref: (9*Cp, Cp) bf16 ; b_ref: (1, Cp) f32
    y_ref: (1, TH, W, Cp) bf16 ; s_ref: (1, 2, Cp) f32
    """
    t = pl.program_id(1)
    nt = pl.num_programs(1)
    _, th, wd, cp = y_ref.shape
    scale = sc_ref[...]
    shift = sh_ref[...]

    def bn_relu(v):                                  # (R, W, Cp) bf16 -> bf16
        v = v.astype(jnp.float32) * scale + shift
        return jnp.maximum(v, 0.0).astype(jnp.bfloat16)

    ctr = bn_relu(ctr_ref[0])
    # Conv padding rows must stay exactly zero -> zero the clamped halo rows
    # at the image boundary instead of normalizing them.
    top = jnp.where(t > 0, bn_relu(top_ref[0]), jnp.zeros_like(top_ref[0]))
    bot = jnp.where(t < nt - 1, bn_relu(bot_ref[0]), jnp.zeros_like(bot_ref[0]))

    rows = jnp.concatenate([top, ctr, bot], axis=0)          # (TH+2, W, Cp)
    zcol = jnp.zeros((th + 2, 1, cp), jnp.bfloat16)
    rows = jnp.concatenate([zcol, rows, zcol], axis=1)       # (TH+2, W+2, Cp)

    taps = [rows[dy:dy + th, dx:dx + wd, :]
            for dy in range(3) for dx in range(3)]
    patch = jnp.concatenate(taps, axis=-1).reshape(th * wd, 9 * cp)   # bf16
    acc = jnp.dot(patch, w_ref[...],
                  preferred_element_type=jnp.float32) + b_ref[...]
    y_ref[...] = acc.reshape(1, th, wd, cp).astype(y_ref.dtype)

    @pl.when(t == 0)
    def _():
        s_ref[...] = jnp.zeros_like(s_ref)

    st = jnp.concatenate([jnp.sum(acc, axis=0, keepdims=True),
                          jnp.sum(acc * acc, axis=0, keepdims=True)], axis=0)
    s_ref[...] += st[None]


def _bn_relu_out_kernel(y_ref, sc_ref, sh_ref, o_ref):
    """Final BN2(batch stats)+ReLU; channel padding dropped at the store.

    y_ref: (1, TH, W, Cp) bf16 ; o_ref: (1, TH, W, Cout) f32
    """
    cout = o_ref.shape[-1]
    v = y_ref[0].astype(jnp.float32) * sc_ref[...] + sh_ref[...]
    v = jnp.maximum(v, 0.0)
    o_ref[...] = v[None, :, :, :cout].astype(o_ref.dtype)


# ---------------------------------------------------------------------------
# Wrapper helpers (XLA side)
# ---------------------------------------------------------------------------
def _im2col_patches(x_nhwc):
    """(N,H,W,C) -> (N, H*W, 9*C) with SAME zero padding, tap order (dy,dx,c)."""
    n, h, w, c = x_nhwc.shape
    xp = jnp.pad(x_nhwc, ((0, 0), (1, 1), (1, 1), (0, 0)))
    taps = [xp[:, dy:dy + h, dx:dx + w, :]
            for dy in range(3) for dx in range(3)]
    return jnp.concatenate(taps, axis=-1).reshape(n, h * w, 9 * c)


def _pack_weights(w_oihw, cin_pad, cout_pad):
    co, ci = w_oihw.shape[0], w_oihw.shape[1]
    w = jnp.transpose(w_oihw, (2, 3, 1, 0)).astype(jnp.float32)   # (3,3,ci,co)
    w = jnp.pad(w, ((0, 0), (0, 0), (0, cin_pad - ci), (0, cout_pad - co)))
    return w.reshape(9 * cin_pad, cout_pad).astype(jnp.bfloat16)


def _pad_vec(v, cp):
    return jnp.pad(v.astype(jnp.float32), (0, cp - v.shape[0]))


def _bn_scale_shift(s, gamma_p, beta_p, count):
    """Fold per-image [sum, sum_sq] batch stats into per-channel scale/shift."""
    ssum = jnp.sum(s[:, 0, :], axis=0)
    ssq = jnp.sum(s[:, 1, :], axis=0)
    mean = ssum / count
    # TODO(synk): E[x^2]-E[x]^2 in f32 can cancel for very large counts/means;
    # use a shifted / two-pass variance for production shapes.
    var = jnp.maximum(ssq / count - mean * mean, 0.0)
    scale = jax.lax.rsqrt(var + BN_EPS) * gamma_p      # padded gamma is 0 ->
    shift = beta_p - mean * scale                      # padded lanes stay 0
    return scale.reshape(1, -1), shift.reshape(1, -1)


# ---------------------------------------------------------------------------
# Forward (PyTorch NCHW in / NCHW out)
# ---------------------------------------------------------------------------
def conv_block_forward(x_nchw, w1, b1, g1, be1, w2, b2, g2, be2):
    N, Cin, H, W = x_nchw.shape
    Cout = w1.shape[0]
    Cp = _round_up(max(Cout, LANE), LANE)      # lane-dense padded channels
    TH = _pick_tile_h(H, W)
    n_tiles = H // TH
    TM = TH * W
    K1 = 9 * Cin
    count = float(N * H * W)

    x_nhwc = jnp.transpose(x_nchw, (0, 2, 3, 1)).astype(jnp.bfloat16)
    # Stage-1 input is lane-sparse for tiny Cin -> pre-im2col in XLA so the
    # conv1 kernel is a plain matmul. (For large Cin this 9x blow-up would be
    # a bad trade; this block targets small/medium Cin.)
    patches1 = _im2col_patches(x_nhwc)                      # (N, H*W, 9*Cin)

    w1p = _pack_weights(w1, Cin, Cp)
    w2p = _pack_weights(w2, Cp, Cp)
    b1p = _pad_vec(b1, Cp).reshape(1, Cp)
    b2p = _pad_vec(b2, Cp).reshape(1, Cp)
    g1p, g2p = _pad_vec(g1, Cp), _pad_vec(g2, Cp)
    be1p, be2p = _pad_vec(be1, Cp), _pad_vec(be2, Cp)

    cp_acc = pltpu.CompilerParams(
        dimension_semantics=("parallel", "arbitrary"),
        vmem_limit_bytes=32 * 1024 * 1024)
    cp_par = pltpu.CompilerParams(
        dimension_semantics=("parallel", "parallel"),
        vmem_limit_bytes=32 * 1024 * 1024)
    # TODO(synk): v7x 2-TensorCore split of the H-tile axis (partial stats per
    # half) not implemented; batch axis is the only parallel axis here.

    # ---- stage 1: conv1 (+bias) + BN1 statistics --------------------------
    y1, s1 = pl.pallas_call(
        _conv1_kernel,
        out_shape=(jax.ShapeDtypeStruct((N, H, W, Cp), jnp.bfloat16),
                   jax.ShapeDtypeStruct((N, 2, Cp), jnp.float32)),
        grid=(N, n_tiles),
        in_specs=[
            pl.BlockSpec((1, TM, K1), lambda n, t: (n, t, 0)),
            pl.BlockSpec((K1, Cp), lambda n, t: (0, 0)),
            pl.BlockSpec((1, Cp), lambda n, t: (0, 0)),
        ],
        out_specs=(
            pl.BlockSpec((1, TH, W, Cp), lambda n, t: (n, t, 0, 0)),
            pl.BlockSpec((1, 2, Cp), lambda n, t: (n, 0, 0)),
        ),
        compiler_params=cp_acc,
    )(patches1, w1p, b1p)

    scale1, shift1 = _bn_scale_shift(s1, g1p, be1p, count)

    # ---- stage 2: BN1+ReLU fused into conv2 (+ BN2 statistics) ------------
    # y1 is passed three times: a TH-row center block plus two 1-row halo
    # blocks with clamped element-row indices (halo tiling, no full image).
    y2, s2 = pl.pallas_call(
        _bn_relu_conv2_kernel,
        out_shape=(jax.ShapeDtypeStruct((N, H, W, Cp), jnp.bfloat16),
                   jax.ShapeDtypeStruct((N, 2, Cp), jnp.float32)),
        grid=(N, n_tiles),
        in_specs=[
            pl.BlockSpec((1, 1, W, Cp),
                         lambda n, t: (n, jnp.maximum(t * TH - 1, 0), 0, 0)),
            pl.BlockSpec((1, TH, W, Cp), lambda n, t: (n, t, 0, 0)),
            pl.BlockSpec((1, 1, W, Cp),
                         lambda n, t: (n, jnp.minimum(t * TH + TH, H - 1), 0, 0)),
            pl.BlockSpec((1, Cp), lambda n, t: (0, 0)),
            pl.BlockSpec((1, Cp), lambda n, t: (0, 0)),
            pl.BlockSpec((9 * Cp, Cp), lambda n, t: (0, 0)),
            pl.BlockSpec((1, Cp), lambda n, t: (0, 0)),
        ],
        out_specs=(
            pl.BlockSpec((1, TH, W, Cp), lambda n, t: (n, t, 0, 0)),
            pl.BlockSpec((1, 2, Cp), lambda n, t: (n, 0, 0)),
        ),
        compiler_params=cp_acc,
    )(y1, y1, y1, scale1, shift1, w2p, b2p)

    scale2, shift2 = _bn_scale_shift(s2, g2p, be2p, count)

    # ---- stage 3: BN2 + ReLU, drop channel padding at the store -----------
    out_nhwc = pl.pallas_call(
        _bn_relu_out_kernel,
        out_shape=jax.ShapeDtypeStruct((N, H, W, Cout), jnp.float32),
        grid=(N, n_tiles),
        in_specs=[
            pl.BlockSpec((1, TH, W, Cp), lambda n, t: (n, t, 0, 0)),
            pl.BlockSpec((1, Cp), lambda n, t: (0, 0)),
            pl.BlockSpec((1, Cp), lambda n, t: (0, 0)),
        ],
        out_specs=pl.BlockSpec((1, TH, W, Cout), lambda n, t: (n, t, 0, 0)),
        compiler_params=cp_par,
    )(y2, scale2, shift2)

    # small XLA transpose over real-sized data only (no Cp padding left)
    return jnp.transpose(out_nhwc, (0, 3, 1, 2))


# ---------------------------------------------------------------------------
# Pure-JAX reference (verification only)
# ---------------------------------------------------------------------------
def _reference(x_nchw, w1, b1, g1, be1, w2, b2, g2, be2):
    x = jnp.transpose(x_nchw, (0, 2, 3, 1)).astype(jnp.float32)

    def conv_bn_relu(xin, w, b, g, be):
        wh = jnp.transpose(w, (2, 3, 1, 0))
        y = jax.lax.conv_general_dilated(
            xin, wh, window_strides=(1, 1), padding="SAME",
            dimension_numbers=("NHWC", "HWIO", "NHWC"),
            preferred_element_type=jnp.float32,
            precision=jax.lax.Precision.HIGHEST) + b[None, None, None, :]
        mean = jnp.mean(y, axis=(0, 1, 2), keepdims=True)
        var = jnp.mean((y - mean) ** 2, axis=(0, 1, 2), keepdims=True)
        out = (y - mean) * jax.lax.rsqrt(var + BN_EPS) * g + be
        return jnp.maximum(out, 0.0)

    y = conv_bn_relu(x, w1, b1, g1, be1)
    y = conv_bn_relu(y, w2, b2, g2, be2)
    return jnp.transpose(y, (0, 3, 1, 2))


# ---------------------------------------------------------------------------
if __name__ == "__main__":
    key = jax.random.PRNGKey(0)
    ks = jax.random.split(key, 3)

    N, Cin, H, W = 2, 4, 16, 16
    Cout = 8

    x = jax.random.normal(ks[0], (N, Cin, H, W), dtype=jnp.float32)

    def conv_init(k, co, ci):
        fan_in = ci * 9
        bound = 1.0 / (fan_in ** 0.5)
        kw, kb = jax.random.split(k)
        w = jax.random.uniform(kw, (co, ci, 3, 3), jnp.float32, -bound, bound)
        b = jax.random.uniform(kb, (co,), jnp.float32, -bound, bound)
        return w, b

    w1, b1 = conv_init(ks[1], Cout, Cin)
    w2, b2 = conv_init(ks[2], Cout, Cout)
    g1 = jnp.ones((Cout,), jnp.float32)    # BatchNorm2d default weight
    be1 = jnp.zeros((Cout,), jnp.float32)  # BatchNorm2d default bias
    g2 = jnp.ones((Cout,), jnp.float32)
    be2 = jnp.zeros((Cout,), jnp.float32)

    out = jax.jit(conv_block_forward)(x, w1, b1, g1, be1, w2, b2, g2, be2)
    out = jax.block_until_ready(out)

    ref = _reference(x, w1, b1, g1, be1, w2, b2, g2, be2)
    assert out.shape == (N, Cout, H, W), out.shape
    # bf16 MXU operands + bf16 HBM intermediates -> loose tolerance vs f32 ref
    max_err = float(jnp.max(jnp.abs(out - ref)))
    assert max_err < 1e-1, max_err

    print("KERNEL_OK")
</pallas_src>

<mosaic_0001>
module attributes {stable_mosaic.version = 11 : i64} {
  func.func @_conv1_kernel(%arg0: i32, %arg1: i32, %arg2: memref<1x256x36xbf16, #tpu.memory_space<vmem>>, %arg3: memref<36x128xbf16, #tpu.memory_space<vmem>>, %arg4: memref<1x128xf32, #tpu.memory_space<vmem>>, %arg5: memref<1x16x16x128xbf16, #tpu.memory_space<vmem>>, %arg6: memref<1x2x128xf32, #tpu.memory_space<vmem>>) attributes {dimension_semantics = [#tpu.dimension_semantics<parallel>, #tpu.dimension_semantics<arbitrary>], iteration_bounds = array<i64: 2, 1>, scalar_prefetch = 0 : i64, scratch_operands = 0 : i64, tpu.core_type = #tpu.core_type<tc>, window_params = [{transform_indices = @transform_0, window_bounds = array<i64: 1, 256, 36>}, {pipeline_mode = #tpu.pipeline_mode<synchronous>, transform_indices = @transform_1, window_bounds = array<i64: 36, 128>}, {pipeline_mode = #tpu.pipeline_mode<synchronous>, transform_indices = @transform_2, window_bounds = array<i64: 1, 128>}, {transform_indices = @transform_3, window_bounds = array<i64: 1, 16, 16, 128>}, {transform_indices = @transform_4, window_bounds = array<i64: 1, 2, 128>}]} {
    %c0 = arith.constant 0 : index
    %c0_0 = arith.constant 0 : index
    %c0_1 = arith.constant 0 : index
    %0 = vector.load %arg2[%c0, %c0_0, %c0_1] : memref<1x256x36xbf16, #tpu.memory_space<vmem>>, vector<1x256x36xbf16>
    %1 = vector.shape_cast %0 : vector<1x256x36xbf16> to vector<256x36xbf16>
    %c0_2 = arith.constant 0 : index
    %c0_3 = arith.constant 0 : index
    %2 = vector.load %arg3[%c0_2, %c0_3] : memref<36x128xbf16, #tpu.memory_space<vmem>>, vector<36x128xbf16>
    %cst = arith.constant dense<0.000000e+00> : vector<256x128xf32>
    %3 = tpu.matmul %1, %2, %cst {dimension_numbers = #tpu.dot_dimension_numbers<[1], [0], [0], [1], [0, 0, 1, 1], [], []>} : vector<256x36xbf16>, vector<36x128xbf16>, vector<256x128xf32> -> vector<256x128xf32>
    %c0_4 = arith.constant 0 : index
    %c0_5 = arith.constant 0 : index
    %4 = vector.load %arg4[%c0_4, %c0_5] : memref<1x128xf32, #tpu.memory_space<vmem>>, vector<1x128xf32>
    %5 = vector.broadcast %4 : vector<1x128xf32> to vector<256x128xf32>
    %6 = arith.addf %3, %5 : vector<256x128xf32>
    %7 = vector.shape_cast %6 : vector<256x128xf32> to vector<1x16x16x128xf32>
    %8 = arith.truncf %7 : vector<1x16x16x128xf32> to vector<1x16x16x128xbf16>
    %c0_6 = arith.constant 0 : index
    %c0_7 = arith.constant 0 : index
    %c0_8 = arith.constant 0 : index
    %c0_9 = arith.constant 0 : index
    %9 = vector.load %arg5[%c0_6, %c0_7, %c0_8, %c0_9] : memref<1x16x16x128xbf16, #tpu.memory_space<vmem>>, vector<1x16x16x128xbf16>
    tpu.vector_store %arg5[%c0_6, %c0_7, %c0_8, %c0_9], %8 {strides = array<i32>} : memref<1x16x16x128xbf16, #tpu.memory_space<vmem>>, vector<1x16x16x128xbf16>,
    %c0_i32 = arith.constant 0 : i32
    %10 = arith.cmpi eq, %arg1, %c0_i32 : i32
    %11 = arith.extui %10 : i1 to i32
    %c0_i32_10 = arith.constant 0 : i32
    %12 = arith.cmpi ne, %11, %c0_i32_10 : i32
    scf.if %12 {
      %cst_19 = arith.constant 0.000000e+00 : f32
      %23 = vector.broadcast %cst_19 : f32 to vector<1x2x128xf32>
      %c0_20 = arith.constant 0 : index
      %c0_21 = arith.constant 0 : index
      %c0_22 = arith.constant 0 : index
      %24 = vector.load %arg6[%c0_20, %c0_21, %c0_22] : memref<1x2x128xf32, #tpu.memory_space<vmem>>, vector<1x2x128xf32>
      tpu.vector_store %arg6[%c0_20, %c0_21, %c0_22], %23 {strides = array<i32>} : memref<1x2x128xf32, #tpu.memory_space<vmem>>, vector<1x2x128xf32>,
    } else {
    }
    %cst_11 = arith.constant dense<0.000000e+00> : vector<128xf32>
    %13 = vector.multi_reduction <add>, %6, %cst_11 [0] : vector<256x128xf32> to vector<128xf32>
    %14 = vector.shape_cast %13 : vector<128xf32> to vector<1x128xf32>
    %15 = arith.mulf %6, %6 : vector<256x128xf32>
    %cst_12 = arith.constant dense<0.000000e+00> : vector<128xf32>
    %16 = vector.multi_reduction <add>, %15, %cst_12 [0] : vector<256x128xf32> to vector<128xf32>
    %17 = vector.shape_cast %16 : vector<128xf32> to vector<1x128xf32>
    %18 = tpu.concatenate %14, %17 in 0 : vector<1x128xf32>, vector<1x128xf32> -> vector<2x128xf32>
    %c0_13 = arith.constant 0 : index
    %c0_14 = arith.constant 0 : index
    %c0_15 = arith.constant 0 : index
    %19 = vector.load %arg6[%c0_13, %c0_14, %c0_15] : memref<1x2x128xf32, #tpu.memory_space<vmem>>, vector<1x2x128xf32>
    %20 = vector.shape_cast %18 : vector<2x128xf32> to vector<1x2x128xf32>
    %21 = arith.addf %19, %20 : vector<1x2x128xf32>
    %c0_16 = arith.constant 0 : index
    %c0_17 = arith.constant 0 : index
    %c0_18 = arith.constant 0 : index
    %22 = vector.load %arg6[%c0_16, %c0_17, %c0_18] : memref<1x2x128xf32, #tpu.memory_space<vmem>>, vector<1x2x128xf32>
    tpu.vector_store %arg6[%c0_16, %c0_17, %c0_18], %21 {strides = array<i32>} : memref<1x2x128xf32, #tpu.memory_space<vmem>>, vector<1x2x128xf32>,
    return
  }
  func.func @transform_0(%arg0: i32, %arg1: i32) -> (i32, i32, i32) {
    %c0_i32 = arith.constant 0 : i32
    %c0_i32_0 = arith.constant 0 : i32
    return %arg0, %arg1, %c0_i32 : i32, i32, i32
  }
  func.func @transform_1(%arg0: i32, %arg1: i32) -> (i32, i32) {
    %c0_i32 = arith.constant 0 : i32
    %c0_i32_0 = arith.constant 0 : i32
    %c0_i32_1 = arith.constant 0 : i32
    return %c0_i32, %c0_i32_0 : i32, i32
  }
  func.func @transform_2(%arg0: i32, %arg1: i32) -> (i32, i32) {
    %c0_i32 = arith.constant 0 : i32
    %c0_i32_0 = arith.constant 0 : i32
    %c0_i32_1 = arith.constant 0 : i32
    return %c0_i32, %c0_i32_0 : i32, i32
  }
  func.func @transform_3(%arg0: i32, %arg1: i32) -> (i32, i32, i32, i32) {
    %c0_i32 = arith.constant 0 : i32
    %c0_i32_0 = arith.constant 0 : i32
    %c0_i32_1 = arith.constant 0 : i32
    return %arg0, %arg1, %c0_i32, %c0_i32_0 : i32, i32, i32, i32
  }
  func.func @transform_4(%arg0: i32, %arg1: i32) -> (i32, i32, i32) {
    %c0_i32 = arith.constant 0 : i32
    %c0_i32_0 = arith.constant 0 : i32
    %c0_i32_1 = arith.constant 0 : i32
    return %arg0, %c0_i32, %c0_i32_0 : i32, i32, i32
  }
}

module attributes {stable_mosaic.version = 11 : i64} {
  func.func @_bn_relu_conv2_kernel(%arg0: i32, %arg1: i32, %arg2: memref<1x1x16x128xbf16, #tpu.memory_space<vmem>>, %arg3: memref<1x16x16x128xbf16, #tpu.memory_space<vmem>>, %arg4: memref<1x1x16x128xbf16, #tpu.memory_space<vmem>>, %arg5: memref<1x128xf32, #tpu.memory_space<vmem>>, %arg6: memref<1x128xf32, #tpu.memory_space<vmem>>, %arg7: memref<1152x128xbf16, #tpu.memory_space<vmem>>, %arg8: memref<1x128xf32, #tpu.memory_space<vmem>>, %arg9: memref<1x16x16x128xbf16, #tpu.memory_space<vmem>>, %arg10: memref<1x2x128xf32, #tpu.memory_space<vmem>>) attributes {dimension_semantics = [#tpu.dimension_semantics<parallel>, #tpu.dimension_semantics<arbitrary>], iteration_bounds = array<i64: 2, 1>, scalar_prefetch = 0 : i64, scratch_operands = 0 : i64, tpu.core_type = #tpu.core_type<tc>, window_params = [{transform_indices = @transform_0, window_bounds = array<i64: 1, 1, 16, 128>}, {transform_indices = @transform_1, window_bounds = array<i64: 1, 16, 16, 128>}, {transform_indices = @transform_2, window_bounds = array<i64: 1, 1, 16, 128>}, {pipeline_mode = #tpu.pipeline_mode<synchronous>, transform_indices = @transform_3, window_bounds = array<i64: 1, 128>}, {pipeline_mode = #tpu.pipeline_mode<synchronous>, transform_indices = @transform_4, window_bounds = array<i64: 1, 128>}, {pipeline_mode = #tpu.pipeline_mode<synchronous>, transform_indices = @transform_5, window_bounds = array<i64: 1152, 128>}, {pipeline_mode = #tpu.pipeline_mode<synchronous>, transform_indices = @transform_6, window_bounds = array<i64: 1, 128>}, {transform_indices = @transform_7, window_bounds = array<i64: 1, 16, 16, 128>}, {transform_indices = @transform_8, window_bounds = array<i64: 1, 2, 128>}]} {
    %c0 = arith.constant 0 : index
    %c0_0 = arith.constant 0 : index
    %0 = vector.load %arg5[%c0, %c0_0] : memref<1x128xf32, #tpu.memory_space<vmem>>, vector<1x128xf32>
    %c0_1 = arith.constant 0 : index
    %c0_2 = arith.constant 0 : index
    %1 = vector.load %arg6[%c0_1, %c0_2] : memref<1x128xf32, #tpu.memory_space<vmem>>, vector<1x128xf32>
    %c0_3 = arith.constant 0 : index
    %c0_4 = arith.constant 0 : index
    %c0_5 = arith.constant 0 : index
    %c0_6 = arith.constant 0 : index
    %2 = vector.load %arg3[%c0_3, %c0_4, %c0_5, %c0_6] : memref<1x16x16x128xbf16, #tpu.memory_space<vmem>>, vector<1x16x16x128xbf16>
    %3 = vector.shape_cast %2 : vector<1x16x16x128xbf16> to vector<16x16x128xbf16>
    %4 = arith.extf %3 : vector<16x16x128xbf16> to vector<16x16x128xf32>
    %5 = vector.shape_cast %0 : vector<1x128xf32> to vector<1x1x128xf32>
    %6 = vector.broadcast %5 : vector<1x1x128xf32> to vector<16x16x128xf32>
    %7 = arith.mulf %4, %6 : vector<16x16x128xf32>
    %8 = vector.shape_cast %1 : vector<1x128xf32> to vector<1x1x128xf32>
    %9 = vector.broadcast %8 : vector<1x1x128xf32> to vector<16x16x128xf32>
    %10 = arith.addf %7, %9 : vector<16x16x128xf32>
    %cst = arith.constant 0.000000e+00 : f32
    %11 = vector.broadcast %cst : f32 to vector<16x16x128xf32>
    %12 = arith.maximumf %10, %11 : vector<16x16x128xf32>
    %13 = arith.truncf %12 : vector<16x16x128xf32> to vector<16x16x128xbf16>
    %c0_i32 = arith.constant 0 : i32
    %14 = arith.cmpi sgt, %arg1, %c0_i32 : i32
    %c0_7 = arith.constant 0 : index
    %c0_8 = arith.constant 0 : index
    %c0_9 = arith.constant 0 : index
    %c0_10 = arith.constant 0 : index
    %15 = vector.load %arg2[%c0_7, %c0_8, %c0_9, %c0_10] : memref<1x1x16x128xbf16, #tpu.memory_space<vmem>>, vector<1x1x16x128xbf16>
    %16 = vector.shape_cast %15 : vector<1x1x16x128xbf16> to vector<1x16x128xbf16>
    %17 = arith.extf %16 : vector<1x16x128xbf16> to vector<1x16x128xf32>
    %18 = vector.shape_cast %0 : vector<1x128xf32> to vector<1x1x128xf32>
    %19 = vector.broadcast %18 : vector<1x1x128xf32> to vector<1x16x128xf32>
    %20 = arith.mulf %17, %19 : vector<1x16x128xf32>
    %21 = vector.shape_cast %1 : vector<1x128xf32> to vector<1x1x128xf32>
    %22 = vector.broadcast %21 : vector<1x1x128xf32> to vector<1x16x128xf32>
    %23 = arith.addf %20, %22 : vector<1x16x128xf32>
    %cst_11 = arith.constant 0.000000e+00 : f32
    %24 = vector.broadcast %cst_11 : f32 to vector<1x16x128xf32>
    %25 = arith.maximumf %23, %24 : vector<1x16x128xf32>
    %26 = arith.truncf %25 : vector<1x16x128xf32> to vector<1x16x128xbf16>
    %cst_12 = arith.constant 0.000000e+00 : bf16
    %27 = vector.broadcast %cst_12 : bf16 to vector<1x16x128xbf16>
    %28 = arith.select %14, %26, %27 : vector<1x16x128xbf16>
    %c0_i32_13 = arith.constant 0 : i32
    %29 = arith.cmpi slt, %arg1, %c0_i32_13 : i32
    %c0_14 = arith.constant 0 : index
    %c0_15 = arith.constant 0 : index
    %c0_16 = arith.constant 0 : index
    %c0_17 = arith.constant 0 : index
    %30 = vector.load %arg4[%c0_14, %c0_15, %c0_16, %c0_17] : memref<1x1x16x128xbf16, #tpu.memory_space<vmem>>, vector<1x1x16x128xbf16>
    %31 = vector.shape_cast %30 : vector<1x1x16x128xbf16> to vector<1x16x128xbf16>
    %32 = arith.extf %31 : vector<1x16x128xbf16> to vector<1x16x128xf32>
    %33 = vector.shape_cast %0 : vector<1x128xf32> to vector<1x1x128xf32>
    %34 = vector.broadcast %33 : vector<1x1x128xf32> to vector<1x16x128xf32>
    %35 = arith.mulf %32, %34 : vector<1x16x128xf32>
    %36 = vector.shape_cast %1 : vector<1x128xf32> to vector<1x1x128xf32>
    %37 = vector.broadcast %36 : vector<1x1x128xf32> to vector<1x16x128xf32>
    %38 = arith.addf %35, %37 : vector<1x16x128xf32>
    %cst_18 = arith.constant 0.000000e+00 : f32
    %39 = vector.broadcast %cst_18 : f32 to vector<1x16x128xf32>
    %40 = arith.maximumf %38, %39 : vector<1x16x128xf32>
    %41 = arith.truncf %40 : vector<1x16x128xf32> to vector<1x16x128xbf16>
    %cst_19 = arith.constant 0.000000e+00 : bf16
    %42 = vector.broadcast %cst_19 : bf16 to vector<1x16x128xbf16>
    %43 = arith.select %29, %41, %42 : vector<1x16x128xbf16>
    %44 = tpu.concatenate %28, %13, %43 in 0 : vector<1x16x128xbf16>, vector<16x16x128xbf16>, vector<1x16x128xbf16> -> vector<18x16x128xbf16>
    %cst_20 = arith.constant 0.000000e+00 : bf16
    %45 = vector.broadcast %cst_20 : bf16 to vector<18x1x128xbf16>
    %46 = tpu.concatenate %45, %44, %45 in 1 : vector<18x1x128xbf16>, vector<18x16x128xbf16>, vector<18x1x128xbf16> -> vector<18x18x128xbf16>
    %47 = vector.extract_strided_slice %46 {offsets = [0, 0, 0], sizes = [16, 16, 128], strides = [1, 1, 1]} : vector<18x18x128xbf16> to vector<16x16x128xbf16>
    %48 = vector.extract_strided_slice %46 {offsets = [0, 1, 0], sizes = [16, 16, 128], strides = [1, 1, 1]} : vector<18x18x128xbf16> to vector<16x16x128xbf16>
    %49 = vector.extract_strided_slice %46 {offsets = [0, 2, 0], sizes = [16, 16, 128], strides = [1, 1, 1]} : vector<18x18x128xbf16> to vector<16x16x128xbf16>
    %50 = vector.extract_strided_slice %46 {offsets = [1, 0, 0], sizes = [16, 16, 128], strides = [1, 1, 1]} : vector<18x18x128xbf16> to vector<16x16x128xbf16>
    %51 = vector.extract_strided_slice %46 {offsets = [1, 1, 0], sizes = [16, 16, 128], strides = [1, 1, 1]} : vector<18x18x128xbf16> to vector<16x16x128xbf16>
    %52 = vector.extract_strided_slice %46 {offsets = [1, 2, 0], sizes = [16, 16, 128], strides = [1, 1, 1]} : vector<18x18x128xbf16> to vector<16x16x128xbf16>
    %53 = vector.extract_strided_slice %46 {offsets = [2, 0, 0], sizes = [16, 16, 128], strides = [1, 1, 1]} : vector<18x18x128xbf16> to vector<16x16x128xbf16>
    %54 = vector.extract_strided_slice %46 {offsets = [2, 1, 0], sizes = [16, 16, 128], strides = [1, 1, 1]} : vector<18x18x128xbf16> to vector<16x16x128xbf16>
    %55 = vector.extract_strided_slice %46 {offsets = [2, 2, 0], sizes = [16, 16, 128], strides = [1, 1, 1]} : vector<18x18x128xbf16> to vector<16x16x128xbf16>
    %56 = tpu.concatenate %47, %48, %49, %50, %51, %52, %53, %54, %55 in 2 : vector<16x16x128xbf16>, vector<16x16x128xbf16>, vector<16x16x128xbf16>, vector<16x16x128xbf16>, vector<16x16x128xbf16>, vector<16x16x128xbf16>, vector<16x16x128xbf16>, vector<16x16x128xbf16>, vector<16x16x128xbf16> -> vector<16x16x1152xbf16>
    %57 = vector.shape_cast %56 : vector<16x16x1152xbf16> to vector<256x1152xbf16>
    %c0_21 = arith.constant 0 : index
    %c0_22 = arith.constant 0 : index
    %58 = vector.load %arg7[%c0_21, %c0_22] : memref<1152x128xbf16, #tpu.memory_space<vmem>>, vector<1152x128xbf16>
    %cst_23 = arith.constant dense<0.000000e+00> : vector<256x128xf32>
    %59 = tpu.matmul %57, %58, %cst_23 {dimension_numbers = #tpu.dot_dimension_numbers<[1], [0], [0], [1], [0, 0, 1, 1], [], []>} : vector<256x1152xbf16>, vector<1152x128xbf16>, vector<256x128xf32> -> vector<256x128xf32>
    %c0_24 = arith.constant 0 : index
    %c0_25 = arith.constant 0 : index
    %60 = vector.load %arg8[%c0_24, %c0_25] : memref<1x128xf32, #tpu.memory_space<vmem>>, vector<1x128xf32>
    %61 = vector.broadcast %60 : vector<1x128xf32> to vector<256x128xf32>
    %62 = arith.addf %59, %61 : vector<256x128xf32>
    %63 = vector.shape_cast %62 : vector<256x128xf32> to vector<1x16x16x128xf32>
    %64 = arith.truncf %63 : vector<1x16x16x128xf32> to vector<1x16x16x128xbf16>
    %c0_26 = arith.constant 0 : index
    %c0_27 = arith.constant 0 : index
    %c0_28 = arith.constant 0 : index
    %c0_29 = arith.constant 0 : index
    %65 = vector.load %arg9[%c0_26, %c0_27, %c0_28, %c0_29] : memref<1x16x16x128xbf16, #tpu.memory_space<vmem>>, vector<1x16x16x128xbf16>
    tpu.vector_store %arg9[%c0_26, %c0_27, %c0_28, %c0_29], %64 {strides = array<i32>} : memref<1x16x16x128xbf16, #tpu.memory_space<vmem>>, vector<1x16x16x128xbf16>,
    %c0_i32_30 = arith.constant 0 : i32
    %66 = arith.cmpi eq, %arg1, %c0_i32_30 : i32
    %67 = arith.extui %66 : i1 to i32
    %c0_i32_31 = arith.constant 0 : i32
    %68 = arith.cmpi ne, %67, %c0_i32_31 : i32
    scf.if %68 {
      %cst_40 = arith.constant 0.000000e+00 : f32
      %79 = vector.broadcast %cst_40 : f32 to vector<1x2x128xf32>
      %c0_41 = arith.constant 0 : index
      %c0_42 = arith.constant 0 : index
      %c0_43 = arith.constant 0 : index
      %80 = vector.load %arg10[%c0_41, %c0_42, %c0_43] : memref<1x2x128xf32, #tpu.memory_space<vmem>>, vector<1x2x128xf32>
      tpu.vector_store %arg10[%c0_41, %c0_42, %c0_43], %79 {strides = array<i32>} : memref<1x2x128xf32, #tpu.memory_space<vmem>>, vector<1x2x128xf32>,
    } else {
    }
    %cst_32 = arith.constant dense<0.000000e+00> : vector<128xf32>
    %69 = vector.multi_reduction <add>, %62, %cst_32 [0] : vector<256x128xf32> to vector<128xf32>
    %70 = vector.shape_cast %69 : vector<128xf32> to vector<1x128xf32>
    %71 = arith.mulf %62, %62 : vector<256x128xf32>
    %cst_33 = arith.constant dense<0.000000e+00> : vector<128xf32>
    %72 = vector.multi_reduction <add>, %71, %cst_33 [0] : vector<256x128xf32> to vector<128xf32>
    %73 = vector.shape_cast %72 : vector<128xf32> to vector<1x128xf32>
    %74 = tpu.concatenate %70, %73 in 0 : vector<1x128xf32>, vector<1x128xf32> -> vector<2x128xf32>
    %c0_34 = arith.constant 0 : index
    %c0_35 = arith.constant 0 : index
    %c0_36 = arith.constant 0 : index
    %75 = vector.load %arg10[%c0_34, %c0_35, %c0_36] : memref<1x2x128xf32, #tpu.memory_space<vmem>>, vector<1x2x128xf32>
    %76 = vector.shape_cast %74 : vector<2x128xf32> to vector<1x2x128xf32>
    %77 = arith.addf %75, %76 : vector<1x2x128xf32>
    %c0_37 = arith.constant 0 : index
    %c0_38 = arith.constant 0 : index
    %c0_39 = arith.constant 0 : index
    %78 = vector.load %arg10[%c0_37, %c0_38, %c0_39] : memref<1x2x128xf32, #tpu.memory_space<vmem>>, vector<1x2x128xf32>
    tpu.vector_store %arg10[%c0_37, %c0_38, %c0_39], %77 {strides = array<i32>} : memref<1x2x128xf32, #tpu.memory_space<vmem>>, vector<1x2x128xf32>,
    return
  }
  func.func @transform_0(%arg0: i32, %arg1: i32) -> (i32, i32, i32, i32) {
    %c16_i32 = arith.constant 16 : i32
    %0 = arith.muli %arg1, %c16_i32 : i32
    %c1_i32 = arith.constant 1 : i32
    %1 = arith.subi %0, %c1_i32 : i32
    %c0_i32 = arith.constant 0 : i32
    %2 = arith.maxsi %1, %c0_i32 : i32
    %c0_i32_0 = arith.constant 0 : i32
    %c0_i32_1 = arith.constant 0 : i32
    %c0_i32_2 = arith.constant 0 : i32
    return %arg0, %2, %c0_i32_0, %c0_i32_1 : i32, i32, i32, i32
  }
  func.func @transform_1(%arg0: i32, %arg1: i32) -> (i32, i32, i32, i32) {
    %c0_i32 = arith.constant 0 : i32
    %c0_i32_0 = arith.constant 0 : i32
    %c0_i32_1 = arith.constant 0 : i32
    return %arg0, %arg1, %c0_i32, %c0_i32_0 : i32, i32, i32, i32
  }
  func.func @transform_2(%arg0: i32, %arg1: i32) -> (i32, i32, i32, i32) {
    %c16_i32 = arith.constant 16 : i32
    %0 = arith.muli %arg1, %c16_i32 : i32
    %c16_i32_0 = arith.constant 16 : i32
    %1 = arith.addi %0, %c16_i32_0 : i32
    %c15_i32 = arith.constant 15 : i32
    %2 = arith.minsi %1, %c15_i32 : i32
    %c0_i32 = arith.constant 0 : i32
    %c0_i32_1 = arith.constant 0 : i32
    %c0_i32_2 = arith.constant 0 : i32
    return %arg0, %2, %c0_i32, %c0_i32_1 : i32, i32, i32, i32
  }
  func.func @transform_3(%arg0: i32, %arg1: i32) -> (i32, i32) {
    %c0_i32 = arith.constant 0 : i32
    %c0_i32_0 = arith.constant 0 : i32
    %c0_i32_1 = arith.constant 0 : i32
    return %c0_i32, %c0_i32_0 : i32, i32
  }
  func.func @transform_4(%arg0: i32, %arg1: i32) -> (i32, i32) {
    %c0_i32 = arith.constant 0 : i32
    %c0_i32_0 = arith.constant 0 : i32
    %c0_i32_1 = arith.constant 0 : i32
    return %c0_i32, %c0_i32_0 : i32, i32
  }
  func.func @transform_5(%arg0: i32, %arg1: i32) -> (i32, i32) {
    %c0_i32 = arith.constant 0 : i32
    %c0_i32_0 = arith.constant 0 : i32
    %c0_i32_1 = arith.constant 0 : i32
    return %c0_i32, %c0_i32_0 : i32, i32
  }
  func.func @transform_6(%arg0: i32, %arg1: i32) -> (i32, i32) {
    %c0_i32 = arith.constant 0 : i32
    %c0_i32_0 = arith.constant 0 : i32
    %c0_i32_1 = arith.constant 0 : i32
    return %c0_i32, %c0_i32_0 : i32, i32
  }
  func.func @transform_7(%arg0: i32, %arg1: i32) -> (i32, i32, i32, i32) {
    %c0_i32 = arith.constant 0 : i32
    %c0_i32_0 = arith.constant 0 : i32
    %c0_i32_1 = arith.constant 0 : i32
    return %arg0, %arg1, %c0_i32, %c0_i32_0 : i32, i32, i32, i32
  }
  func.func @transform_8(%arg0: i32, %arg1: i32) -> (i32, i32, i32) {
    %c0_i32 = arith.constant 0 : i32
    %c0_i32_0 = arith.constant 0 : i32
    %c0_i32_1 = arith.constant 0 : i32
    return %arg0, %c0_i32, %c0_i32_0 : i32, i32, i32
  }
}

module attributes {stable_mosaic.version = 11 : i64} {
  func.func @_bn_relu_out_kernel(%arg0: i32, %arg1: i32, %arg2: memref<1x16x16x128xbf16, #tpu.memory_space<vmem>>, %arg3: memref<1x128xf32, #tpu.memory_space<vmem>>, %arg4: memref<1x128xf32, #tpu.memory_space<vmem>>, %arg5: memref<1x16x16x8xf32, #tpu.memory_space<vmem>>) attributes {dimension_semantics = [#tpu.dimension_semantics<parallel>, #tpu.dimension_semantics<parallel>], iteration_bounds = array<i64: 2, 1>, scalar_prefetch = 0 : i64, scratch_operands = 0 : i64, tpu.core_type = #tpu.core_type<tc>, window_params = [{transform_indices = @transform_0, window_bounds = array<i64: 1, 16, 16, 128>}, {pipeline_mode = #tpu.pipeline_mode<synchronous>, transform_indices = @transform_1, window_bounds = array<i64: 1, 128>}, {pipeline_mode = #tpu.pipeline_mode<synchronous>, transform_indices = @transform_2, window_bounds = array<i64: 1, 128>}, {transform_indices = @transform_3, window_bounds = array<i64: 1, 16, 16, 8>}]} {
    %c0 = arith.constant 0 : index
    %c0_0 = arith.constant 0 : index
    %c0_1 = arith.constant 0 : index
    %c0_2 = arith.constant 0 : index
    %0 = vector.load %arg2[%c0, %c0_0, %c0_1, %c0_2] : memref<1x16x16x128xbf16, #tpu.memory_space<vmem>>, vector<1x16x16x128xbf16>
    %1 = vector.shape_cast %0 : vector<1x16x16x128xbf16> to vector<16x16x128xbf16>
    %2 = arith.extf %1 : vector<16x16x128xbf16> to vector<16x16x128xf32>
    %c0_3 = arith.constant 0 : index
    %c0_4 = arith.constant 0 : index
    %3 = vector.load %arg3[%c0_3, %c0_4] : memref<1x128xf32, #tpu.memory_space<vmem>>, vector<1x128xf32>
    %4 = vector.shape_cast %3 : vector<1x128xf32> to vector<1x1x128xf32>
    %5 = vector.broadcast %4 : vector<1x1x128xf32> to vector<16x16x128xf32>
    %6 = arith.mulf %2, %5 : vector<16x16x128xf32>
    %c0_5 = arith.constant 0 : index
    %c0_6 = arith.constant 0 : index
    %7 = vector.load %arg4[%c0_5, %c0_6] : memref<1x128xf32, #tpu.memory_space<vmem>>, vector<1x128xf32>
    %8 = vector.shape_cast %7 : vector<1x128xf32> to vector<1x1x128xf32>
    %9 = vector.broadcast %8 : vector<1x1x128xf32> to vector<16x16x128xf32>
    %10 = arith.addf %6, %9 : vector<16x16x128xf32>
    %cst = arith.constant 0.000000e+00 : f32
    %11 = vector.broadcast %cst : f32 to vector<16x16x128xf32>
    %12 = arith.maximumf %10, %11 : vector<16x16x128xf32>
    %13 = vector.extract_strided_slice %12 {offsets = [0, 0, 0], sizes = [16, 16, 8], strides = [1, 1, 1]} : vector<16x16x128xf32> to vector<16x16x8xf32>
    %14 = vector.shape_cast %13 : vector<16x16x8xf32> to vector<1x16x16x8xf32>
    %c0_7 = arith.constant 0 : index
    %c0_8 = arith.constant 0 : index
    %c0_9 = arith.constant 0 : index
    %c0_10 = arith.constant 0 : index
    %15 = vector.load %arg5[%c0_7, %c0_8, %c0_9, %c0_10] : memref<1x16x16x8xf32, #tpu.memory_space<vmem>>, vector<1x16x16x8xf32>
    tpu.vector_store %arg5[%c0_7, %c0_8, %c0_9, %c0_10], %14 {strides = array<i32>} : memref<1x16x16x8xf32, #tpu.memory_space<vmem>>, vector<1x16x16x8xf32>,
    return
  }
  func.func @transform_0(%arg0: i32, %arg1: i32) -> (i32, i32, i32, i32) {
    %c0_i32 = arith.constant 0 : i32
    %c0_i32_0 = arith.constant 0 : i32
    %c0_i32_1 = arith.constant 0 : i32
    return %arg0, %arg1, %c0_i32, %c0_i32_0 : i32, i32, i32, i32
  }
  func.func @transform_1(%arg0: i32, %arg1: i32) -> (i32, i32) {
    %c0_i32 = arith.constant 0 : i32
    %c0_i32_0 = arith.constant 0 : i32
    %c0_i32_1 = arith.constant 0 : i32
    return %c0_i32, %c0_i32_0 : i32, i32
  }
  func.func @transform_2(%arg0: i32, %arg1: i32) -> (i32, i32) {
    %c0_i32 = arith.constant 0 : i32
    %c0_i32_0 = arith.constant 0 : i32
    %c0_i32_1 = arith.constant 0 : i32
    return %c0_i32, %c0_i32_0 : i32, i32
  }
  func.func @transform_3(%arg0: i32, %arg1: i32) -> (i32, i32, i32, i32) {
    %c0_i32 = arith.constant 0 : i32
    %c0_i32_0 = arith.constant 0 : i32
    %c0_i32_1 = arith.constant 0 : i32
    return %arg0, %arg1, %c0_i32, %c0_i32_0 : i32, i32, i32, i32
  }
}

</mosaic_0001>

<llo_original>
// kernel: conv_block_forward.3
$region0: #{conv_block_forward.3}
  #allocation0 [shape = 'u32[]', space=smem, size = 0x4, offset = 0x4, fixed_abs, tag = 'smem constant byte address 0x4 - core index']
  #allocation1 [shape = 'u32[144,128]{1,0:T(1,128)}', space=vmem, size = 0x12000, scoped, tag = 'internal scratch']
  %s0 = inlined_call_operand.vmem [shape: bf16[2,256,36], index: 0, kind: input, shape index: {}]
  %s1 = inlined_call_operand.vmem [shape: bf16[36,128], index: 1, kind: input, shape index: {}]
  %s2 = inlined_call_operand.vmem [shape: f32[1,128], index: 2, kind: input, shape index: {}]
  %s3 = inlined_call_operand.vmem [shape: bf16[2,16,16,128], index: 3, kind: output, shape index: {0}]
  %s4 = inlined_call_operand.vmem [shape: f32[2,2,128], index: 4, kind: output, shape index: {1}]
  %5 = xla_tuple %s3, %s4
  %s6 = sld [smem:[#allocation0]]
  $region57: #{conv_block_forward.3} parent=0
    _
  %s8 = ssub.s32 1, %s6
  %s9 = scalar_select 0, %s8, %s6
  loop: start=0, step=1, limit=4
  $region2: #{conv_block_forward.3} parent=0 // loop_pre_header
    _
  $region3: #{conv_block_forward.3} parent=0 // loop_header
    %s11 = sphi 0, %s15
    %p12 = scmp.ge.s32.totalorder %s11, 4
    %s18 = sphi 0, %s30
    %s19 = sphi 0, %s26
    %s20 = sphi 0, %s18
    %s21 = sphi 0, %s19
    %s22 = sphi 0, %s20
    %s23 = sphi 0, %s21
    %s35 = sphi 0, %s37
    %s38 = sphi 0, %s35
    %s39 = sphi 0, %s38
    %s55 = sphi 0, %s39
    %s59 = sphi 0, %s59
    %s61 = sphi 0, %s59
    %s62 = sphi 0, %s61
    %s76 = sphi 0, %s62
    %s80 = sphi 0, %s80
    %s82 = sphi 0, %s80
    %s83 = sphi 0, %s82
    %s97 = sphi 0, %s83
    %s105 = sphi 0, %s107
    %s108 = sphi 0, %s105
    %s109 = sphi 0, %s108
    %s125 = sphi 0, %s109
    %s131 = sphi 0, %s133
    %s134 = sphi 0, %s131
    %s135 = sphi 0, %s134
    %s151 = sphi 0, %s135
  $region4: #{conv_block_forward.3} parent=0 // loop_header_branch
    %14 = sbr.rel (%p12) target = $region8
  $region5: #{conv_block_forward.3} parent=0 // loop_body
    %s16 = ssub.s32 %s11, 1
    %s17 = ssub.s32 %s11, 2
    %s24 = sadd.s32 1, %s19
    %p25 = scmp.ge.s32.totalorder %s24, 1
    %s26 = scalar_select %p25, 0, %s24
    %s27 = sadd.s32 1, %s18
    %s28 = scalar_select %p25, %s27, %s18
    %p29 = scmp.ge.s32.totalorder %s28, 2
    %s30 = scalar_select %p29, 0, %s28
    %s31 = ssub.s32 %s18, %s30
    %s32 = ssub.s32 %s19, %s26
    %s33 = sor.u32 %s31, %s32
    %p34 = scmp.eq.s32.totalorder %s33, 0
    %s36 = sadd.s32 %s35, 1
    %s37 = scalar_select %p34, %s35, %s36
    %p40 = pneg %p34
    %p41 = scmp.eq.s32.totalorder %s11, 1
    %p42 = por %p40, %p41
    %p43 = scmp.ne.s32.totalorder %s35, %s38
    %p44 = scmp.eq.s32.totalorder %s11, 0
    %p45 = por %p43, %p44
    %p46 = scmp.ne.s32.totalorder %s35, %s38
    %p47 = scmp.eq.s32.totalorder %s16, 1
    %p48 = por %p46, %p47
    %p49 = scmp.ne.s32.totalorder %s38, %s39
    %p50 = scmp.eq.s32.totalorder %s16, 0
    %p51 = por %p49, %p50
    %p52 = scmp.ne.s32.totalorder %s38, %s39
    %p53 = scmp.eq.s32.totalorder %s17, 1
    %p54 = por %p52, %p53
    %p56 = scmp.ne.s32.totalorder %s39, %s55
    %p57 = scmp.eq.s32.totalorder %s17, 0
    %p58 = por %p56, %p57
    %s60 = sadd.s32 %s59, 1
    %p63 = scmp.eq.s32.totalorder %s11, 1
    %p64 = scmp.ne.s32.totalorder %s59, %s61
    %p65 = scmp.eq.s32.totalorder %s11, 0
    %p66 = por %p64, %p65
    %p67 = scmp.ne.s32.totalorder %s59, %s61
    %p68 = scmp.eq.s32.totalorder %s16, 1
    %p69 = por %p67, %p68
    %p70 = scmp.ne.s32.totalorder %s61, %s62
    %p71 = scmp.eq.s32.totalorder %s16, 0
    %p72 = por %p70, %p71
    %p73 = scmp.ne.s32.totalorder %s61, %s62
    %p74 = scmp.eq.s32.totalorder %s17, 1
    %p75 = por %p73, %p74
    %p77 = scmp.ne.s32.totalorder %s62, %s76
    %p78 = scmp.eq.s32.totalorder %s17, 0
    %p79 = por %p77, %p78
    %s81 = sadd.s32 %s80, 1
    %p84 = scmp.eq.s32.totalorder %s11, 1
    %p85 = scmp.ne.s32.totalorder %s80, %s82
    %p86 = scmp.eq.s32.totalorder %s11, 0
    %p87 = por %p85, %p86
    %p88 = scmp.ne.s32.totalorder %s80, %s82
    %p89 = scmp.eq.s32.totalorder %s16, 1
    %p90 = por %p88, %p89
    %p91 = scmp.ne.s32.totalorder %s82, %s83
    %p92 = scmp.eq.s32.totalorder %s16, 0
    %p93 = por %p91, %p92
    %p94 = scmp.ne.s32.totalorder %s82, %s83
    %p95 = scmp.eq.s32.totalorder %s17, 1
    %p96 = por %p94, %p95
    %p98 = scmp.ne.s32.totalorder %s83, %s97
    %p99 = scmp.eq.s32.totalorder %s17, 0
    %p100 = por %p98, %p99
    %s101 = ssub.s32 %s18, %s30
    %s102 = ssub.s32 %s19, %s26
    %s103 = sor.u32 %s101, %s102
    %p104 = scmp.eq.s32.totalorder %s103, 0
    %s106 = sadd.s32 %s105, 1
    %s107 = scalar_select %p104, %s105, %s106
    %p110 = pneg %p104
    %p111 = scmp.eq.s32.totalorder %s11, 1
    %p112 = por %p110, %p111
    %p113 = scmp.ne.s32.totalorder %s105, %s108
    %p114 = scmp.eq.s32.totalorder %s11, 0
    %p115 = por %p113, %p114
    %p116 = scmp.ne.s32.totalorder %s105, %s108
    %p117 = scmp.eq.s32.totalorder %s16, 1
    %p118 = por %p116, %p117
    %p119 = scmp.ne.s32.totalorder %s108, %s109
    %p120 = scmp.eq.s32.totalorder %s16, 0
    %p121 = por %p119, %p120
    %p122 = scmp.ne.s32.totalorder %s108, %s109
    %p123 = scmp.eq.s32.totalorder %s17, 1
    %p124 = por %p122, %p123
    %p126 = scmp.ne.s32.totalorder %s109, %s125
    %p127 = scmp.eq.s32.totalorder %s17, 0
    %p128 = por %p126, %p127
    %s129 = ssub.s32 %s18, %s30
    %p130 = scmp.eq.s32.totalorder %s129, 0
    %s132 = sadd.s32 %s131, 1
    %s133 = scalar_select %p130, %s131, %s132
    %p136 = pneg %p130
    %p137 = scmp.eq.s32.totalorder %s11, 1
    %p138 = por %p136, %p137
    %p139 = scmp.ne.s32.totalorder %s131, %s134
    %p140 = scmp.eq.s32.totalorder %s11, 0
    %p141 = por %p139, %p140
    %p142 = scmp.ne.s32.totalorder %s131, %s134
    %p143 = scmp.eq.s32.totalorder %s16, 1
    %p144 = por %p142, %p143
    %p145 = scmp.ne.s32.totalorder %s134, %s135
    %p146 = scmp.eq.s32.totalorder %s16, 0
    %p147 = por %p145, %p146
    %p148 = scmp.ne.s32.totalorder %s134, %s135
    %p149 = scmp.eq.s32.totalorder %s17, 1
    %p150 = por %p148, %p149
    %p152 = scmp.ne.s32.totalorder %s135, %s151
    %p153 = scmp.eq.s32.totalorder %s17, 0
    %p154 = por %p152, %p153
    %p155 = scmp.le.s32.totalorder 1, %s11
    %p156 = scmp.lt.s32.totalorder %s11, 3
    %p157 = pnand %p155, %p156
    %p158 = pneg %p157
    // Predicated region
    $region9: #{conv_block_forward.3} parent=5 // pred_check
      _
    $region10: #{conv_block_forward.3} parent=5 // pred_check_branch
      %160 = sbr.rel (%p157) target = $region12
    $region11: #{conv_block_forward.3} parent=5 // pred_region
      %s161 = ssub.s32 %s11, 1
      // Predicated region
      $region13: #{conv_block_forward.3} parent=11 // pred_check
        %p162 = pneg %p72
      $region14: #{conv_block_forward.3} parent=11 // pred_check_branch
        %164 = sbr.rel (%p162) target = $region16
      $region15: #{conv_block_forward.3} parent=11 // pred_region
        _
      $region16: #{conv_block_forward.3} parent=11 // pred_fallthru
        _
      // Predicated region
      $region17: #{conv_block_forward.3} parent=11 // pred_check
        %p165 = pneg %p93
      $region18: #{conv_block_forward.3} parent=11 // pred_check_branch
        %167 = sbr.rel (%p165) target = $region20
      $region19: #{conv_block_forward.3} parent=11 // pred_region
        _
      $region20: #{conv_block_forward.3} parent=11 // pred_fallthru
        _
    $region12: #{conv_block_forward.3} parent=5 // pred_fallthru
      _
    %p168 = scmp.lt.s32.totalorder %s11, 2
    // Predicated region
    $region21: #{conv_block_forward.3} parent=5 // pred_check
      %p169 = pneg %p168
    $region22: #{conv_block_forward.3} parent=5 // pred_check_branch
      %171 = sbr.rel (%p169) target = $region24
    $region23: #{conv_block_forward.3} parent=5 // pred_region
      // Predicated region
      $region25: #{conv_block_forward.3} parent=23 // pred_check
        %p172 = pneg %p45
      $region26: #{conv_block_forward.3} parent=23 // pred_check_branch
        %174 = sbr.rel (%p172) target = $region28
      $region27: #{conv_block_forward.3} parent=23 // pred_region
        %s175 = smul.u32 32, %s19
        %p176 = scmp.lt.s32.totalorder %s18, 1
        %s177 = scalar_select %p176, %s18, 1
        %p178 = scmp.lt.s32.totalorder %s175, 31
        %s179 = scalar_select %p178, %s175, 31
        %s180 = smul.addr %s177, 32
        %s181 = sadd.s32 %s179, %s180
        %s182 = smul.addr %s181, 4
        %s183 = scalar_lea.vmem %s0, %s182
        %s184 = smul.u32 32, %s19
      $region28: #{conv_block_forward.3} parent=23 // pred_fallthru
        _
    $region24: #{conv_block_forward.3} parent=5 // pred_fallthru
      _
    %p185 = scmp.le.s32.totalorder 1, %s11
    %p186 = scmp.lt.s32.totalorder %s11, 3
    %p187 = pnand %p185, %p186
    %p188 = pneg %p187
    // Predicated region
    $region29: #{conv_block_forward.3} parent=5 // pred_check
      _
    $region30: #{conv_block_forward.3} parent=5 // pred_check_branch
      %190 = sbr.rel (%p187) target = $region32
    $region31: #{conv_block_forward.3} parent=5 // pred_region
      %s191 = ssub.s32 %s11, 1
      %s192 = smul.u32 32, %s21
      %p193 = scmp.lt.s32.totalorder %s20, 1
      %s194 = scalar_select %p193, %s20, 1
      %p195 = scmp.lt.s32.totalorder %s192, 31
      %s196 = scalar_select %p195, %s192, 31
      %s197 = smul.addr %s194, 32
      %s198 = sadd.s32 %s196, %s197
      %s199 = smul.addr %s198, 4
      %s200 = scalar_lea.vmem %s0, %s199
      %p201 = pneg %p51
      %p202 = pneg %p48
      %p203 = pneg %p72
      %p204 = pneg %p69
      %p205 = pneg %p93
      %p206 = pneg %p90
      %p207 = pneg %p121
      %p208 = pneg %p118
      %s209 = smul.u32 16, %s21
      %p210 = scmp.lt.s32.totalorder %s20, 1
      %s211 = scalar_select %p210, %s20, 1
      %p212 = scmp.lt.s32.totalorder %s209, 15
      %s213 = scalar_select %p212, %s209, 15
      %s214 = smul.addr %s213, 2
      %s215 = smul.addr %s211, 32
      %s216 = sadd.s32 %s214, %s215
      %s217 = smul.addr %s216, 4
      %s218 = scalar_lea.vmem %s3, %s217
      %p219 = pneg %p147
      %p220 = pneg %p144
      %p221 = scmp.lt.s32.totalorder %s20, 1
      %s222 = scalar_select %p221, %s20, 1
      %s223 = smul.addr %s222, 2
      %s224 = scalar_lea.vmem %s4, %s223
      %s225 = smul.u32 32, %s21
      %p226 = scmp.lt.s32.totalorder %s20, 1
      %s227 = scalar_select %p226, %s20, 1
      %p228 = scmp.lt.s32.totalorder %s225, 31
      %s229 = scalar_select %p228, %s225, 31
      %s230 = smul.addr %s227, 32
      %s231 = sadd.s32 %s229, %s230
      %s232 = smul.addr %s231, 4
      %s233 = scalar_lea.vmem %s0, %s232
      %s234 = smul.u32 32, %s21
      %s235 = smul.u32 16, %s21
      %p236 = scmp.lt.s32.totalorder %s20, 1
      %s237 = scalar_select %p236, %s20, 1
      %p238 = scmp.lt.s32.totalorder %s235, 15
      %s239 = scalar_select %p238, %s235, 15
      %s240 = smul.addr %s239, 2
      %s241 = smul.addr %s237, 32
      %s242 = sadd.s32 %s240, %s241
      %s243 = smul.addr %s242, 4
      %s244 = scalar_lea.vmem %s3, %s243
      %s245 = smul.u32 16, %s21
      %p246 = scmp.lt.s32.totalorder %s20, 1
      %s247 = scalar_select %p246, %s20, 1
      %s248 = smul.addr %s247, 2
      %s249 = scalar_lea.vmem %s4, %s248
      %v251 = vld [vmem:[%s233] sm:$0xf]
      %v252 = vld [vmem:[%s233 + $0x4] sm:$0xf]
      %v253 = vld [vmem:[%s233 + $0x8] sm:$0xf]
      %v254 = vld [vmem:[%s233 + $0xc] sm:$0xf]
      %v255 = vld [vmem:[%s233 + $0x10] sm:$0xf]
      %v256 = vld [vmem:[%s233 + $0x14] sm:$0xf]
      %v257 = vld [vmem:[%s233 + $0x18] sm:$0xf]
      %v258 = vld [vmem:[%s233 + $0x1c] sm:$0xf]
      %v259 = vld [vmem:[%s233 + $0x20] sm:$0xf]
      %v260 = vld [vmem:[%s233 + $0x24] sm:$0xf]
      %v261 = vld [vmem:[%s233 + $0x28] sm:$0xf]
      %v262 = vld [vmem:[%s233 + $0x2c] sm:$0xf]
      %v263 = vld [vmem:[%s233 + $0x30] sm:$0xf]
      %v264 = vld [vmem:[%s233 + $0x34] sm:$0xf]
      %v265 = vld [vmem:[%s233 + $0x38] sm:$0xf]
      %v266 = vld [vmem:[%s233 + $0x3c] sm:$0xf]
      %v267 = vld [vmem:[%s233 + $0x40] sm:$0xf]
      %v268 = vld [vmem:[%s233 + $0x44] sm:$0xf]
      %v269 = vld [vmem:[%s233 + $0x48] sm:$0xf]
      %v270 = vld [vmem:[%s233 + $0x4c] sm:$0xf]
      %v271 = vld [vmem:[%s233 + $0x50] sm:$0xf]
      %v272 = vld [vmem:[%s233 + $0x54] sm:$0xf]
      %v273 = vld [vmem:[%s233 + $0x58] sm:$0xf]
      %v274 = vld [vmem:[%s233 + $0x5c] sm:$0xf]
      %v275 = vld [vmem:[%s233 + $0x60] sm:$0xf]
      %v276 = vld [vmem:[%s233 + $0x64] sm:$0xf]
      %v277 = vld [vmem:[%s233 + $0x68] sm:$0xf]
      %v278 = vld [vmem:[%s233 + $0x6c] sm:$0xf]
      %v279 = vld [vmem:[%s233 + $0x70] sm:$0xf]
      %v280 = vld [vmem:[%s233 + $0x74] sm:$0xf]
      %v281 = vld [vmem:[%s233 + $0x78] sm:$0xf]
      %v282 = vld [vmem:[%s233 + $0x7c] sm:$0xf]
      %v283 = vld [vmem:[%s1] sm:$0xf]
      %v284 = vld [vmem:[%s1 + $0x4] sm:$0xf]
      %v285 = vld [vmem:[%s1 + $0x8] sm:$0xf]
      %v286 = vld [vmem:[%s1 + $0xc] sm:$0xf]
      %v287 = vld [vmem:[%s1 + $0x10] sm:$0x3]
      %v288 = vld [vmem:[%s2] sm:$0x1]
      %v290 = vlaneseq
      %v291 = vshrl.u32 %v290, 7
      %v292 = vsub.s32 0, %v291
      %v293 = vrot.slane %v288, %v292
      %v327 = vunpack.c.l.b16 %v251
      %v328 = vunpack.c.l.b16 %v252
      %v329 = vunpack.c.l.b16 %v253
      %v330 = vunpack.c.l.b16 %v254
      %v331 = vunpack.c.l.b16 %v255
      %v332 = vunpack.c.l.b16 %v256
      %v333 = vunpack.c.l.b16 %v257
      %v334 = vunpack.c.l.b16 %v258
      %v335 = vunpack.c.l.b16 %v259
      %v336 = vunpack.c.l.b16 %v260
      %v337 = vunpack.c.l.b16 %v261
      %v338 = vunpack.c.l.b16 %v262
      %v339 = vunpack.c.l.b16 %v263
      %v340 = vunpack.c.l.b16 %v264
      %v341 = vunpack.c.l.b16 %v265
      %v342 = vunpack.c.l.b16 %v266
      %v343 = vunpack.c.l.b16 %v267
      %v344 = vunpack.c.l.b16 %v268
      %v345 = vunpack.c.l.b16 %v269
      %v346 = vunpack.c.l.b16 %v270
      %v347 = vunpack.c.l.b16 %v271
      %v348 = vunpack.c.l.b16 %v272
      %v349 = vunpack.c.l.b16 %v273
      %v350 = vunpack.c.l.b16 %v274
      %v351 = vunpack.c.l.b16 %v275
      %v352 = vunpack.c.l.b16 %v276
      %v353 = vunpack.c.l.b16 %v277
      %v354 = vunpack.c.l.b16 %v278
      %v355 = vunpack.c.l.b16 %v279
      %v356 = vunpack.c.l.b16 %v280
      %v357 = vunpack.c.l.b16 %v281
      %v358 = vunpack.c.l.b16 %v282
      %v359 = vpack.c.b16 %v328, %v327
      %v360 = vpack.c.b16 %v330, %v329
      %v361 = vpack.c.b16 %v332, %v331
      %v362 = vpack.c.b16 %v334, %v333
      %v363 = vpack.c.b16 %v336, %v335
      %v364 = vpack.c.b16 %v338, %v337
      %v365 = vpack.c.b16 %v340, %v339
      %v366 = vpack.c.b16 %v342, %v341
      %v367 = vpack.c.b16 %v344, %v343
      %v368 = vpack.c.b16 %v346, %v345
      %v369 = vpack.c.b16 %v348, %v347
      %v370 = vpack.c.b16 %v350, %v349
      %v371 = vpack.c.b16 %v352, %v351
      %v372 = vpack.c.b16 %v354, %v353
      %v373 = vpack.c.b16 %v356, %v355
      %v374 = vpack.c.b16 %v358, %v357
      %v380 = vunpack.c.l.b16 %v283
      %v381 = vunpack.c.l.b16 %v284
      %v382 = vunpack.c.l.b16 %v285
      %v383 = vunpack.c.l.b16 %v286
      %v384 = vunpack.c.l.b16 %v287
      %v385 = vpack.c.b16 %v381, %v380
      %v386 = vpack.c.b16 %v383, %v382
      %v387 = vpack.c.b16 %v384, %v384
      %vm390 = vcmask 293888
      %v392 = vsel %vm390, %v359, 0
      %v395 = vsel %vm390, %v360, 0
      %v398 = vsel %vm390, %v361, 0
      %v401 = vsel %vm390, %v362, 0
      %v404 = vsel %vm390, %v363, 0
      %v407 = vsel %vm390, %v364, 0
      %v410 = vsel %vm390, %v365, 0
      %v413 = vsel %vm390, %v366, 0
      %v416 = vsel %vm390, %v367, 0
      %v419 = vsel %vm390, %v368, 0
      %v422 = vsel %vm390, %v369, 0
      %v425 = vsel %vm390, %v370, 0
      %v428 = vsel %vm390, %v371, 0
      %v431 = vsel %vm390, %v372, 0
      %v434 = vsel %vm390, %v373, 0
      %v437 = vsel %vm390, %v374, 0
      %vm439 = vcmask 1041408
      %v441 = vsel %vm439, %v387, 0
      %443 = vmatprep.subr.bf16.mxu0 0
      %444 = vmatpush1.bf16.msra.mxu0 0
      %445 = vmatprep.subr.bf16.mxu0 0
      %446 = vmatpush1.bf16.msra.mxu0 0
      %447 = vmatprep.subr.bf16.mxu0 0
      %448 = vmatpush1.bf16.msra.mxu0 0
      %449 = vmatprep.subr.bf16.mxu0 0
      %450 = vmatpush1.bf16.msra.mxu0 0
      %451 = vmatprep.subr.bf16.mxu0 0
      %452 = vmatpush1.bf16.msra.mxu0 0
      %453 = vmatprep.subr.bf16.mxu0 0
      %454 = vmatpush1.bf16.msra.mxu0 %v441
      %455 = vmatprep.subr.bf16.mxu0 0
      %456 = vmatpush1.bf16.msra.mxu0 %v386
      %457 = vmatprep.subr.bf16.mxu0 0
      %458 = vmatpush1.bf16.msra.mxu0 %v385
      %459 = vmatprep.subr.bf16.mxu0 0
      %460 = vmatpush2.bf16.msra.mxu0 0
      %461 = vmatprep.subr.bf16.mxu0 0
      %462 = vmatpush2.bf16.msra.mxu0 0
      %463 = vmatprep.subr.bf16.mxu0 0
      %464 = vmatpush2.bf16.msra.mxu0 0
      %465 = vmatprep.subr.bf16.mxu0 0
      %466 = vmatpush2.bf16.msra.mxu0 0
      %467 = vmatprep.subr.bf16.mxu0 0
      %468 = vmatpush2.bf16.msra.mxu0 0
      %469 = vmatprep.subr.bf16.mxu0 0
      %470 = vmatpush2.bf16.msra.mxu0 0
      %471 = vmatprep.subr.bf16.mxu0 0
      %472 = vmatpush2.bf16.msra.mxu0 0
      %473 = vmatprep.subr.bf16.mxu0 0
      %474 = vmatpush2.bf16.msra.mxu0 0
      %475 = vmatprep.mubr.bf16.mxu0 0
      %476 = vmatmul.mubr.bf16.gmra.mxu0 %v392
      %v477 = vpop.f32.mrf.mxu0
      %v478 = vadd.f32 %v293, %v477
      %v479 = vpop.f32.mrf.mxu0
      %v480 = vpop.f32.mrf.mxu0
      %v481 = vadd.f32 %v293, %v480
      %v482 = vpop.f32.mrf.mxu0
      %483 = vmatprep.mubr.bf16.mxu0 0
      %484 = vmatmul.mubr.bf16.gmra.mxu0 %v395
      %v485 = vpop.f32.mrf.mxu0
      %v486 = vadd.f32 %v293, %v485
      %v487 = vpop.f32.mrf.mxu0
      %v488 = vpop.f32.mrf.mxu0
      %v489 = vadd.f32 %v293, %v488
      %v490 = vpop.f32.mrf.mxu0
      %491 = vmatprep.mubr.bf16.mxu0 0
      %492 = vmatmul.mubr.bf16.gmra.mxu0 %v398
      %v493 = vpop.f32.mrf.mxu0
      %v494 = vadd.f32 %v293, %v493
      %v495 = vpop.f32.mrf.mxu0
      %v496 = vpop.f32.mrf.mxu0
      %v497 = vadd.f32 %v293, %v496
      %v498 = vpop.f32.mrf.mxu0
      %499 = vmatprep.mubr.bf16.mxu0 0
      %500 = vmatmul.mubr.bf16.gmra.mxu0 %v401
      %v501 = vpop.f32.mrf.mxu0
      %v502 = vadd.f32 %v293, %v501
      %v503 = vpop.f32.mrf.mxu0
      %v504 = vpop.f32.mrf.mxu0
      %v505 = vadd.f32 %v293, %v504
      %v506 = vpop.f32.mrf.mxu0
      %507 = vmatprep.mubr.bf16.mxu0 0
      %508 = vmatmul.mubr.bf16.gmra.mxu0 %v404
      %v509 = vpop.f32.mrf.mxu0
      %v510 = vadd.f32 %v293, %v509
      %v511 = vpop.f32.mrf.mxu0
      %v512 = vpop.f32.mrf.mxu0
      %v513 = vadd.f32 %v293, %v512
      %v514 = vpop.f32.mrf.mxu0
      %515 = vmatprep.mubr.bf16.mxu0 0
      %516 = vmatmul.mubr.bf16.gmra.mxu0 %v407
      %v517 = vpop.f32.mrf.mxu0
      %v518 = vadd.f32 %v293, %v517
      %v519 = vpop.f32.mrf.mxu0
      %v520 = vpop.f32.mrf.mxu0
      %v521 = vadd.f32 %v293, %v520
      %v522 = vpop.f32.mrf.mxu0
      %523 = vmatprep.mubr.bf16.mxu0 0
      %524 = vmatmul.mubr.bf16.gmra.mxu0 %v410
      %v525 = vpop.f32.mrf.mxu0
      %v526 = vadd.f32 %v293, %v525
      %v527 = vpop.f32.mrf.mxu0
      %v528 = vpop.f32.mrf.mxu0
      %v529 = vadd.f32 %v293, %v528
      %v530 = vpop.f32.mrf.mxu0
      %531 = vmatprep.mubr.bf16.mxu0 0
      %532 = vmatmul.mubr.bf16.gmra.mxu0 %v413
      %v533 = vpop.f32.mrf.mxu0
      %v534 = vadd.f32 %v293, %v533
      %v535 = vpop.f32.mrf.mxu0
      %v536 = vpop.f32.mrf.mxu0
      %v537 = vadd.f32 %v293, %v536
      %v538 = vpop.f32.mrf.mxu0
      %539 = vmatprep.mubr.bf16.mxu0 0
      %540 = vmatmul.mubr.bf16.gmra.mxu0 %v416
      %v541 = vpop.f32.mrf.mxu0
      %v542 = vadd.f32 %v293, %v541
      %v543 = vpop.f32.mrf.mxu0
      %v544 = vpop.f32.mrf.mxu0
      %v545 = vadd.f32 %v293, %v544
      %v546 = vpop.f32.mrf.mxu0
      %547 = vmatprep.mubr.bf16.mxu0 0
      %548 = vmatmul.mubr.bf16.gmra.mxu0 %v419
      %v549 = vpop.f32.mrf.mxu0
      %v550 = vadd.f32 %v293, %v549
      %v551 = vpop.f32.mrf.mxu0
      %v552 = vpop.f32.mrf.mxu0
      %v553 = vadd.f32 %v293, %v552
      %v554 = vpop.f32.mrf.mxu0
      %555 = vmatprep.mubr.bf16.mxu0 0
      %556 = vmatmul.mubr.bf16.gmra.mxu0 %v422
      %v557 = vpop.f32.mrf.mxu0
      %v558 = vadd.f32 %v293, %v557
      %v559 = vpop.f32.mrf.mxu0
      %v560 = vpop.f32.mrf.mxu0
      %v561 = vadd.f32 %v293, %v560
      %v562 = vpop.f32.mrf.mxu0
      %563 = vmatprep.mubr.bf16.mxu0 0
      %564 = vmatmul.mubr.bf16.gmra.mxu0 %v425
      %v565 = vpop.f32.mrf.mxu0
      %v566 = vadd.f32 %v293, %v565
      %v567 = vpop.f32.mrf.mxu0
      %v568 = vpop.f32.mrf.mxu0
      %v569 = vadd.f32 %v293, %v568
      %v570 = vpop.f32.mrf.mxu0
      %571 = vmatprep.mubr.bf16.mxu0 0
      %572 = vmatmul.mubr.bf16.gmra.mxu0 %v428
      %v573 = vpop.f32.mrf.mxu0
      %v574 = vadd.f32 %v293, %v573
      %v575 = vpop.f32.mrf.mxu0
      %v576 = vpop.f32.mrf.mxu0
      %v577 = vadd.f32 %v293, %v576
      %v578 = vpop.f32.mrf.mxu0
      %579 = vmatprep.mubr.bf16.mxu0 0
      %580 = vmatmul.mubr.bf16.gmra.mxu0 %v431
      %v581 = vpop.f32.mrf.mxu0
      %v582 = vadd.f32 %v293, %v581
      %v583 = vpop.f32.mrf.mxu0
      %v584 = vpop.f32.mrf.mxu0
      %v585 = vadd.f32 %v293, %v584
      %v586 = vpop.f32.mrf.mxu0
      %587 = vmatprep.mubr.bf16.mxu0 0
      %588 = vmatmul.mubr.bf16.gmra.mxu0 %v434
      %v589 = vpop.f32.mrf.mxu0
      %v590 = vadd.f32 %v293, %v589
      %v591 = vpop.f32.mrf.mxu0
      %v592 = vpop.f32.mrf.mxu0
      %v593 = vadd.f32 %v293, %v592
      %v594 = vpop.f32.mrf.mxu0
      %595 = vmatprep.mubr.bf16.mxu0 0
      %596 = vmatmul.mubr.bf16.gmra.mxu0 %v437
      %v597 = vpop.f32.mrf.mxu0
      %v598 = vadd.f32 %v293, %v597
      %v599 = vpop.f32.mrf.mxu0
      %v600 = vpop.f32.mrf.mxu0
      %v601 = vadd.f32 %v293, %v600
      %v602 = vpop.f32.mrf.mxu0
      %603 = vdwg.mxu0
      %v604 = vpack.c.bf16 %v481, %v478
      %v605 = vpack.c.bf16 %v489, %v486
      %v606 = vpack.c.bf16 %v497, %v494
      %v607 = vpack.c.bf16 %v505, %v502
      %v608 = vpack.c.bf16 %v513, %v510
      %v609 = vpack.c.bf16 %v521, %v518
      %v610 = vpack.c.bf16 %v529, %v526
      %v611 = vpack.c.bf16 %v537, %v534
      %v612 = vpack.c.bf16 %v545, %v542
      %v613 = vpack.c.bf16 %v553, %v550
      %v614 = vpack.c.bf16 %v561, %v558
      %v615 = vpack.c.bf16 %v569, %v566
      %v616 = vpack.c.bf16 %v577, %v574
      %v617 = vpack.c.bf16 %v585, %v582
      %v618 = vpack.c.bf16 %v593, %v590
      %v619 = vpack.c.bf16 %v601, %v598
      %v636 = vunpack.c.l.b16 %v604
      %v637 = vunpack.c.h.b16 %v604
      %v638 = vunpack.c.l.b16 %v605
      %v639 = vunpack.c.h.b16 %v605
      %v640 = vunpack.c.l.b16 %v606
      %v641 = vunpack.c.h.b16 %v606
      %v642 = vunpack.c.l.b16 %v607
      %v643 = vunpack.c.h.b16 %v607
      %v644 = vunpack.c.l.b16 %v608
      %v645 = vunpack.c.h.b16 %v608
      %v646 = vunpack.c.l.b16 %v609
      %v647 = vunpack.c.h.b16 %v609
      %v648 = vunpack.c.l.b16 %v610
      %v649 = vunpack.c.h.b16 %v610
      %v650 = vunpack.c.l.b16 %v611
      %v651 = vunpack.c.h.b16 %v611
      %v652 = vunpack.c.l.b16 %v612
      %v653 = vunpack.c.h.b16 %v612
      %v654 = vunpack.c.l.b16 %v613
      %v655 = vunpack.c.h.b16 %v613
      %v656 = vunpack.c.l.b16 %v614
      %v657 = vunpack.c.h.b16 %v614
      %v658 = vunpack.c.l.b16 %v615
      %v659 = vunpack.c.h.b16 %v615
      %v660 = vunpack.c.l.b16 %v616
      %v661 = vunpack.c.h.b16 %v616
      %v662 = vunpack.c.l.b16 %v617
      %v663 = vunpack.c.h.b16 %v617
      %v664 = vunpack.c.l.b16 %v618
      %v665 = vunpack.c.h.b16 %v618
      %v666 = vunpack.c.l.b16 %v619
      %v667 = vunpack.c.h.b16 %v619
      %v668 = vpack.c.b16 %v636, %v636
      %v669 = vpack.c.b16 %v637, %v637
      %v670 = vpack.c.b16 %v638, %v638
      %v671 = vpack.c.b16 %v639, %v639
      %v672 = vpack.c.b16 %v640, %v640
      %v673 = vpack.c.b16 %v641, %v641
      %v674 = vpack.c.b16 %v642, %v642
      %v675 = vpack.c.b16 %v643, %v643
      %v676 = vpack.c.b16 %v644, %v644
      %v677 = vpack.c.b16 %v645, %v645
      %v678 = vpack.c.b16 %v646, %v646
      %v679 = vpack.c.b16 %v647, %v647
      %v680 = vpack.c.b16 %v648, %v648
      %v681 = vpack.c.b16 %v649, %v649
      %v682 = vpack.c.b16 %v650, %v650
      %v683 = vpack.c.b16 %v651, %v651
      %v684 = vpack.c.b16 %v652, %v652
      %v685 = vpack.c.b16 %v653, %v653
      %v686 = vpack.c.b16 %v654, %v654
      %v687 = vpack.c.b16 %v655, %v655
      %v688 = vpack.c.b16 %v656, %v656
      %v689 = vpack.c.b16 %v657, %v657
      %v690 = vpack.c.b16 %v658, %v658
      %v691 = vpack.c.b16 %v659, %v659
      %v692 = vpack.c.b16 %v660, %v660
      %v693 = vpack.c.b16 %v661, %v661
      %v694 = vpack.c.b16 %v662, %v662
      %v695 = vpack.c.b16 %v663, %v663
      %v696 = vpack.c.b16 %v664, %v664
      %v697 = vpack.c.b16 %v665, %v665
      %v698 = vpack.c.b16 %v666, %v666
      %v699 = vpack.c.b16 %v667, %v667
      %732 = vst [vmem:[%s244] sm:$0xf] %v668
      %733 = vst [vmem:[%s244 + $0x4] sm:$0xf] %v669
      %734 = vst [vmem:[%s244 + $0x8] sm:$0xf] %v670
      %735 = vst [vmem:[%s244 + $0xc] sm:$0xf] %v671
      %736 = vst [vmem:[%s244 + $0x10] sm:$0xf] %v672
      %737 = vst [vmem:[%s244 + $0x14] sm:$0xf] %v673
      %738 = vst [vmem:[%s244 + $0x18] sm:$0xf] %v674
      %739 = vst [vmem:[%s244 + $0x1c] sm:$0xf] %v675
      %740 = vst [vmem:[%s244 + $0x20] sm:$0xf] %v676
      %741 = vst [vmem:[%s244 + $0x24] sm:$0xf] %v677
      %742 = vst [vmem:[%s244 + $0x28] sm:$0xf] %v678
      %743 = vst [vmem:[%s244 + $0x2c] sm:$0xf] %v679
      %744 = vst [vmem:[%s244 + $0x30] sm:$0xf] %v680
      %745 = vst [vmem:[%s244 + $0x34] sm:$0xf] %v681
      %746 = vst [vmem:[%s244 + $0x38] sm:$0xf] %v682
      %747 = vst [vmem:[%s244 + $0x3c] sm:$0xf] %v683
      %748 = vst [vmem:[%s244 + $0x40] sm:$0xf] %v684
      %749 = vst [vmem:[%s244 + $0x44] sm:$0xf] %v685
      %750 = vst [vmem:[%s244 + $0x48] sm:$0xf] %v686
      %751 = vst [vmem:[%s244 + $0x4c] sm:$0xf] %v687
      %752 = vst [vmem:[%s244 + $0x50] sm:$0xf] %v688
      %753 = vst [vmem:[%s244 + $0x54] sm:$0xf] %v689
      %754 = vst [vmem:[%s244 + $0x58] sm:$0xf] %v690
      %755 = vst [vmem:[%s244 + $0x5c] sm:$0xf] %v691
      %756 = vst [vmem:[%s244 + $0x60] sm:$0xf] %v692
      %757 = vst [vmem:[%s244 + $0x64] sm:$0xf] %v693
      %758 = vst [vmem:[%s244 + $0x68] sm:$0xf] %v694
      %759 = vst [vmem:[%s244 + $0x6c] sm:$0xf] %v695
      %760 = vst [vmem:[%s244 + $0x70] sm:$0xf] %v696
      %761 = vst [vmem:[%s244 + $0x74] sm:$0xf] %v697
      %762 = vst [vmem:[%s244 + $0x78] sm:$0xf] %v698
      %763 = vst [vmem:[%s244 + $0x7c] sm:$0xf] %v699
      %p764 = scmp.eq.s32.totalorder %s21, 0
      // Predicated region
      $region33: #{conv_block_forward.3} parent=31 // pred_check
        %p765 = pneg %p764
      $region34: #{conv_block_forward.3} parent=31 // pred_check_branch
        %767 = sbr.rel (%p765) target = $region36
      $region35: #{conv_block_forward.3} parent=31 // pred_region
        %768 = vst [vmem:[%s249] sm:$0x3] 0.0
      $region36: #{conv_block_forward.3} parent=31 // pred_fallthru
        _
      %v769 = vadd.f32 %v478, %v481
      %v770 = vadd.f32 %v769, %v486
      %v771 = vadd.f32 %v770, %v489
      %v772 = vadd.f32 %v771, %v494
      %v773 = vadd.f32 %v772, %v497
      %v774 = vadd.f32 %v773, %v502
      %v775 = vadd.f32 %v774, %v505
      %v776 = vadd.f32 %v775, %v510
      %v777 = vadd.f32 %v776, %v513
      %v778 = vadd.f32 %v777, %v518
      %v779 = vadd.f32 %v778, %v521
      %v780 = vadd.f32 %v779, %v526
      %v781 = vadd.f32 %v780, %v529
      %v782 = vadd.f32 %v781, %v534
      %v783 = vadd.f32 %v782, %v537
      %v784 = vadd.f32 %v783, %v542
      %v785 = vadd.f32 %v784, %v545
      %v786 = vadd.f32 %v785, %v550
      %v787 = vadd.f32 %v786, %v553
      %v788 = vadd.f32 %v787, %v558
      %v789 = vadd.f32 %v788, %v561
      %v790 = vadd.f32 %v789, %v566
      %v791 = vadd.f32 %v790, %v569
      %v792 = vadd.f32 %v791, %v574
      %v793 = vadd.f32 %v792, %v577
      %v794 = vadd.f32 %v793, %v582
      %v795 = vadd.f32 %v794, %v585
      %v796 = vadd.f32 %v795, %v590
      %v797 = vadd.f32 %v796, %v593
      %v798 = vadd.f32 %v797, %v598
      %v799 = vadd.f32 %v798, %v601
      %v800 = vrot.slane %v799, 4
      %v801 = vadd.f32 %v799, %v800
      %v802 = vrot.slane %v801, 2
      %v803 = vadd.f32 %v801, %v802
      %v804 = vrot.slane %v803, 1
      %v805 = vadd.f32 %v803, %v804
      %v806 = vmul.f32 %v478, %v478
      %v807 = vmul.f32 %v481, %v481
      %v808 = vmul.f32 %v486, %v486
      %v809 = vmul.f32 %v489, %v489
      %v810 = vmul.f32 %v494, %v494
      %v811 = vmul.f32 %v497, %v497
      %v812 = vmul.f32 %v502, %v502
      %v813 = vmul.f32 %v505, %v505
      %v814 = vmul.f32 %v510, %v510
      %v815 = vmul.f32 %v513, %v513
      %v816 = vmul.f32 %v518, %v518
      %v817 = vmul.f32 %v521, %v521
      %v818 = vmul.f32 %v526, %v526
      %v819 = vmul.f32 %v529, %v529
      %v820 = vmul.f32 %v534, %v534
      %v821 = vmul.f32 %v537, %v537
      %v822 = vmul.f32 %v542, %v542
      %v823 = vmul.f32 %v545, %v545
      %v824 = vmul.f32 %v550, %v550
      %v825 = vmul.f32 %v553, %v553
      %v826 = vmul.f32 %v558, %v558
      %v827 = vmul.f32 %v561, %v561
      %v828 = vmul.f32 %v566, %v566
      %v829 = vmul.f32 %v569, %v569
      %v830 = vmul.f32 %v574, %v574
      %v831 = vmul.f32 %v577, %v577
      %v832 = vmul.f32 %v582, %v582
      %v833 = vmul.f32 %v585, %v585
      %v834 = vmul.f32 %v590, %v590
      %v835 = vmul.f32 %v593, %v593
      %v836 = vmul.f32 %v598, %v598
      %v837 = vmul.f32 %v601, %v601
      %v838 = vadd.f32 %v806, %v807
      %v839 = vadd.f32 %v838, %v808
      %v840 = vadd.f32 %v839, %v809
      %v841 = vadd.f32 %v840, %v810
      %v842 = vadd.f32 %v841, %v811
      %v843 = vadd.f32 %v842, %v812
      %v844 = vadd.f32 %v843, %v813
      %v845 = vadd.f32 %v844, %v814
      %v846 = vadd.f32 %v845, %v815
      %v847 = vadd.f32 %v846, %v816
      %v848 = vadd.f32 %v847, %v817
      %v849 = vadd.f32 %v848, %v818
      %v850 = vadd.f32 %v849, %v819
      %v851 = vadd.f32 %v850, %v820
      %v852 = vadd.f32 %v851, %v821
      %v853 = vadd.f32 %v852, %v822
      %v854 = vadd.f32 %v853, %v823
      %v855 = vadd.f32 %v854, %v824
      %v856 = vadd.f32 %v855, %v825
      %v857 = vadd.f32 %v856, %v826
      %v858 = vadd.f32 %v857, %v827
      %v859 = vadd.f32 %v858, %v828
      %v860 = vadd.f32 %v859, %v829
      %v861 = vadd.f32 %v860, %v830
      %v862 = vadd.f32 %v861, %v831
      %v863 = vadd.f32 %v862, %v832
      %v864 = vadd.f32 %v863, %v833
      %v865 = vadd.f32 %v864, %v834
      %v866 = vadd.f32 %v865, %v835
      %v867 = vadd.f32 %v866, %v836
      %v868 = vadd.f32 %v867, %v837
      %v869 = vrot.slane %v868, 4
      %v870 = vadd.f32 %v868, %v869
      %v871 = vrot.slane %v870, 2
      %v872 = vadd.f32 %v870, %v871
      %v873 = vrot.slane %v872, 1
      %v874 = vadd.f32 %v872, %v873
      %vm875 = vcmask 1040384
      %v876 = vsel %vm875, %v805, %v874
      %v877 = vld [vmem:[%s249] sm:$0x3]
      %v878 = vadd.f32 %v877, %v876
      %879 = vst [vmem:[%s249] sm:$0x3] %v878
      %s880 = smul.u32 16, %s21
      %p881 = scmp.lt.s32.totalorder %s20, 1
      %s882 = scalar_select %p881, %s20, 1
      %p883 = scmp.lt.s32.totalorder %s880, 15
      %s884 = scalar_select %p883, %s880, 15
      %s885 = smul.addr %s884, 2
      %s886 = smul.addr %s882, 32
      %s887 = sadd.s32 %s885, %s886
      %s888 = smul.addr %s887, 4
      %s889 = scalar_lea.vmem %s3, %s888
      %p890 = scmp.lt.s32.totalorder %s20, 1
      %s891 = scalar_select %p890, %s20, 1
      %s892 = smul.addr %s891, 2
      %s893 = scalar_lea.vmem %s4, %s892
      // Predicated region
      $region37: #{conv_block_forward.3} parent=31 // pred_check
        %p894 = pneg %p118
      $region38: #{conv_block_forward.3} parent=31 // pred_check_branch
        %896 = sbr.rel (%p894) target = $region40
      $region39: #{conv_block_forward.3} parent=31 // pred_region
        %s897 = smul.u32 16, %s21
      $region40: #{conv_block_forward.3} parent=31 // pred_fallthru
        _
      // Predicated region
      $region41: #{conv_block_forward.3} parent=31 // pred_check
        %p898 = pneg %p144
      $region42: #{conv_block_forward.3} parent=31 // pred_check_branch
        %900 = sbr.rel (%p898) target = $region44
      $region43: #{conv_block_forward.3} parent=31 // pred_region
        _
      $region44: #{conv_block_forward.3} parent=31 // pred_fallthru
        _
    $region32: #{conv_block_forward.3} parent=5 // pred_fallthru
      _
    %p901 = scmp.le.s32.totalorder 2, %s11
    // Predicated region
    $region45: #{conv_block_forward.3} parent=5 // pred_check
      %p902 = pneg %p901
    $region46: #{conv_block_forward.3} parent=5 // pred_check_branch
      %904 = sbr.rel (%p902) target = $region48
    $region47: #{conv_block_forward.3} parent=5 // pred_region
      %s905 = ssub.s32 %s11, 2
      // Predicated region
      $region49: #{conv_block_forward.3} parent=47 // pred_check
        %p906 = pneg %p124
      $region50: #{conv_block_forward.3} parent=47 // pred_check_branch
        %908 = sbr.rel (%p906) target = $region52
      $region51: #{conv_block_forward.3} parent=47 // pred_region
        %s909 = smul.u32 16, %s23
        %p910 = scmp.lt.s32.totalorder %s22, 1
        %s911 = scalar_select %p910, %s22, 1
        %p912 = scmp.lt.s32.totalorder %s909, 15
        %s913 = scalar_select %p912, %s909, 15
        %s914 = smul.addr %s913, 2
        %s915 = smul.addr %s911, 32
        %s916 = sadd.s32 %s914, %s915
        %s917 = smul.addr %s916, 4
        %s918 = scalar_lea.vmem %s3, %s917
      $region52: #{conv_block_forward.3} parent=47 // pred_fallthru
        _
      // Predicated region
      $region53: #{conv_block_forward.3} parent=47 // pred_check
        %p919 = pneg %p150
      $region54: #{conv_block_forward.3} parent=47 // pred_check_branch
        %921 = sbr.rel (%p919) target = $region56
      $region55: #{conv_block_forward.3} parent=47 // pred_region
        %p922 = scmp.lt.s32.totalorder %s22, 1
        %s923 = scalar_select %p922, %s22, 1
        %s924 = smul.addr %s923, 2
        %s925 = scalar_lea.vmem %s4, %s924
      $region56: #{conv_block_forward.3} parent=47 // pred_fallthru
        _
    $region48: #{conv_block_forward.3} parent=5 // pred_fallthru
      _
  $region6: #{conv_block_forward.3} parent=0 // loop_footer
    %s15 = sadd.s32 1, %s11
  $region7: #{conv_block_forward.3} parent=0 // loop_footer_branch
    %10 = sbr.rel target = $region3
  $region8: #{conv_block_forward.3} parent=0 // loop_exit
    _

// kernel: conv_block_forward.5
$region0: #{conv_block_forward.5}
  #allocation0 [shape = 'u32[]', space=smem, size = 0x4, offset = 0x4, fixed_abs, tag = 'smem constant byte address 0x4 - core index']
  #allocation1 [shape = 'u32[144,128]{1,0:T(1,128)}', space=vmem, size = 0x12000, scoped, tag = 'internal scratch']
  %s0 = inlined_call_operand.vmem [shape: bf16[2,16,16,128], index: 0, kind: input, shape index: {}]
  %s1 = inlined_call_operand.vmem [shape: f32[1,128], index: 1, kind: input, shape index: {}]
  %s2 = inlined_call_operand.vmem [shape: f32[1,128], index: 2, kind: input, shape index: {}]
  %s3 = inlined_call_operand.vmem [shape: f32[2,16,16,8], index: 3, kind: output, shape index: {}]
  %s4 = sld [smem:[#allocation0]]
  $region45: #{conv_block_forward.5} parent=0
    _
  %s6 = ssub.s32 1, %s4
  %s7 = scalar_select 0, %s6, %s4
  loop: start=0, step=1, limit=4
  $region2: #{conv_block_forward.5} parent=0 // loop_pre_header
    _
  $region3: #{conv_block_forward.5} parent=0 // loop_header
    %s9 = sphi 0, %s13
    %p10 = scmp.ge.s32.totalorder %s9, 4
    %s16 = sphi 0, %s28
    %s17 = sphi 0, %s24
    %s18 = sphi 0, %s16
    %s19 = sphi 0, %s17
    %s20 = sphi 0, %s18
    %s21 = sphi 0, %s19
    %s33 = sphi 0, %s35
    %s36 = sphi 0, %s33
    %s37 = sphi 0, %s36
    %s53 = sphi 0, %s37
    %s57 = sphi 0, %s57
    %s59 = sphi 0, %s57
    %s60 = sphi 0, %s59
    %s74 = sphi 0, %s60
    %s78 = sphi 0, %s78
    %s80 = sphi 0, %s78
    %s81 = sphi 0, %s80
    %s95 = sphi 0, %s81
    %s103 = sphi 0, %s105
    %s106 = sphi 0, %s103
    %s107 = sphi 0, %s106
    %s123 = sphi 0, %s107
  $region4: #{conv_block_forward.5} parent=0 // loop_header_branch
    %12 = sbr.rel (%p10) target = $region8
  $region5: #{conv_block_forward.5} parent=0 // loop_body
    %s14 = ssub.s32 %s9, 1
    %s15 = ssub.s32 %s9, 2
    %s22 = sadd.s32 1, %s17
    %p23 = scmp.ge.s32.totalorder %s22, 1
    %s24 = scalar_select %p23, 0, %s22
    %s25 = sadd.s32 1, %s16
    %s26 = scalar_select %p23, %s25, %s16
    %p27 = scmp.ge.s32.totalorder %s26, 2
    %s28 = scalar_select %p27, 0, %s26
    %s29 = ssub.s32 %s16, %s28
    %s30 = ssub.s32 %s17, %s24
    %s31 = sor.u32 %s29, %s30
    %p32 = scmp.eq.s32.totalorder %s31, 0
    %s34 = sadd.s32 %s33, 1
    %s35 = scalar_select %p32, %s33, %s34
    %p38 = pneg %p32
    %p39 = scmp.eq.s32.totalorder %s9, 1
    %p40 = por %p38, %p39
    %p41 = scmp.ne.s32.totalorder %s33, %s36
    %p42 = scmp.eq.s32.totalorder %s9, 0
    %p43 = por %p41, %p42
    %p44 = scmp.ne.s32.totalorder %s33, %s36
    %p45 = scmp.eq.s32.totalorder %s14, 1
    %p46 = por %p44, %p45
    %p47 = scmp.ne.s32.totalorder %s36, %s37
    %p48 = scmp.eq.s32.totalorder %s14, 0
    %p49 = por %p47, %p48
    %p50 = scmp.ne.s32.totalorder %s36, %s37
    %p51 = scmp.eq.s32.totalorder %s15, 1
    %p52 = por %p50, %p51
    %p54 = scmp.ne.s32.totalorder %s37, %s53
    %p55 = scmp.eq.s32.totalorder %s15, 0
    %p56 = por %p54, %p55
    %s58 = sadd.s32 %s57, 1
    %p61 = scmp.eq.s32.totalorder %s9, 1
    %p62 = scmp.ne.s32.totalorder %s57, %s59
    %p63 = scmp.eq.s32.totalorder %s9, 0
    %p64 = por %p62, %p63
    %p65 = scmp.ne.s32.totalorder %s57, %s59
    %p66 = scmp.eq.s32.totalorder %s14, 1
    %p67 = por %p65, %p66
    %p68 = scmp.ne.s32.totalorder %s59, %s60
    %p69 = scmp.eq.s32.totalorder %s14, 0
    %p70 = por %p68, %p69
    %p71 = scmp.ne.s32.totalorder %s59, %s60
    %p72 = scmp.eq.s32.totalorder %s15, 1
    %p73 = por %p71, %p72
    %p75 = scmp.ne.s32.totalorder %s60, %s74
    %p76 = scmp.eq.s32.totalorder %s15, 0
    %p77 = por %p75, %p76
    %s79 = sadd.s32 %s78, 1
    %p82 = scmp.eq.s32.totalorder %s9, 1
    %p83 = scmp.ne.s32.totalorder %s78, %s80
    %p84 = scmp.eq.s32.totalorder %s9, 0
    %p85 = por %p83, %p84
    %p86 = scmp.ne.s32.totalorder %s78, %s80
    %p87 = scmp.eq.s32.totalorder %s14, 1
    %p88 = por %p86, %p87
    %p89 = scmp.ne.s32.totalorder %s80, %s81
    %p90 = scmp.eq.s32.totalorder %s14, 0
    %p91 = por %p89, %p90
    %p92 = scmp.ne.s32.totalorder %s80, %s81
    %p93 = scmp.eq.s32.totalorder %s15, 1
    %p94 = por %p92, %p93
    %p96 = scmp.ne.s32.totalorder %s81, %s95
    %p97 = scmp.eq.s32.totalorder %s15, 0
    %p98 = por %p96, %p97
    %s99 = ssub.s32 %s16, %s28
    %s100 = ssub.s32 %s17, %s24
    %s101 = sor.u32 %s99, %s100
    %p102 = scmp.eq.s32.totalorder %s101, 0
    %s104 = sadd.s32 %s103, 1
    %s105 = scalar_select %p102, %s103, %s104
    %p108 = pneg %p102
    %p109 = scmp.eq.s32.totalorder %s9, 1
    %p110 = por %p108, %p109
    %p111 = scmp.ne.s32.totalorder %s103, %s106
    %p112 = scmp.eq.s32.totalorder %s9, 0
    %p113 = por %p111, %p112
    %p114 = scmp.ne.s32.totalorder %s103, %s106
    %p115 = scmp.eq.s32.totalorder %s14, 1
    %p116 = por %p114, %p115
    %p117 = scmp.ne.s32.totalorder %s106, %s107
    %p118 = scmp.eq.s32.totalorder %s14, 0
    %p119 = por %p117, %p118
    %p120 = scmp.ne.s32.totalorder %s106, %s107
    %p121 = scmp.eq.s32.totalorder %s15, 1
    %p122 = por %p120, %p121
    %p124 = scmp.ne.s32.totalorder %s107, %s123
    %p125 = scmp.eq.s32.totalorder %s15, 0
    %p126 = por %p124, %p125
    %p127 = scmp.le.s32.totalorder 1, %s9
    %p128 = scmp.lt.s32.totalorder %s9, 3
    %p129 = pnand %p127, %p128
    %p130 = pneg %p129
    // Predicated region
    $region9: #{conv_block_forward.5} parent=5 // pred_check
      _
    $region10: #{conv_block_forward.5} parent=5 // pred_check_branch
      %132 = sbr.rel (%p129) target = $region12
    $region11: #{conv_block_forward.5} parent=5 // pred_region
      %s133 = ssub.s32 %s9, 1
      // Predicated region
      $region13: #{conv_block_forward.5} parent=11 // pred_check
        %p134 = pneg %p70
      $region14: #{conv_block_forward.5} parent=11 // pred_check_branch
        %136 = sbr.rel (%p134) target = $region16
      $region15: #{conv_block_forward.5} parent=11 // pred_region
        _
      $region16: #{conv_block_forward.5} parent=11 // pred_fallthru
        _
      // Predicated region
      $region17: #{conv_block_forward.5} parent=11 // pred_check
        %p137 = pneg %p91
      $region18: #{conv_block_forward.5} parent=11 // pred_check_branch
        %139 = sbr.rel (%p137) target = $region20
      $region19: #{conv_block_forward.5} parent=11 // pred_region
        _
      $region20: #{conv_block_forward.5} parent=11 // pred_fallthru
        _
    $region12: #{conv_block_forward.5} parent=5 // pred_fallthru
      _
    %p140 = scmp.lt.s32.totalorder %s9, 2
    // Predicated region
    $region21: #{conv_block_forward.5} parent=5 // pred_check
      %p141 = pneg %p140
    $region22: #{conv_block_forward.5} parent=5 // pred_check_branch
      %143 = sbr.rel (%p141) target = $region24
    $region23: #{conv_block_forward.5} parent=5 // pred_region
      // Predicated region
      $region25: #{conv_block_forward.5} parent=23 // pred_check
        %p144 = pneg %p43
      $region26: #{conv_block_forward.5} parent=23 // pred_check_branch
        %146 = sbr.rel (%p144) target = $region28
      $region27: #{conv_block_forward.5} parent=23 // pred_region
        %s147 = smul.u32 16, %s17
        %p148 = scmp.lt.s32.totalorder %s16, 1
        %s149 = scalar_select %p148, %s16, 1
        %p150 = scmp.lt.s32.totalorder %s147, 15
        %s151 = scalar_select %p150, %s147, 15
        %s152 = smul.addr %s151, 2
        %s153 = smul.addr %s149, 32
        %s154 = sadd.s32 %s152, %s153
        %s155 = smul.addr %s154, 4
        %s156 = scalar_lea.vmem %s0, %s155
        %s157 = smul.u32 16, %s17
      $region28: #{conv_block_forward.5} parent=23 // pred_fallthru
        _
    $region24: #{conv_block_forward.5} parent=5 // pred_fallthru
      _
    %p158 = scmp.le.s32.totalorder 1, %s9
    %p159 = scmp.lt.s32.totalorder %s9, 3
    %p160 = pnand %p158, %p159
    %p161 = pneg %p160
    // Predicated region
    $region29: #{conv_block_forward.5} parent=5 // pred_check
      _
    $region30: #{conv_block_forward.5} parent=5 // pred_check_branch
      %163 = sbr.rel (%p160) target = $region32
    $region31: #{conv_block_forward.5} parent=5 // pred_region
      %s164 = ssub.s32 %s9, 1
      %s165 = smul.u32 16, %s19
      %p166 = scmp.lt.s32.totalorder %s18, 1
      %s167 = scalar_select %p166, %s18, 1
      %p168 = scmp.lt.s32.totalorder %s165, 15
      %s169 = scalar_select %p168, %s165, 15
      %s170 = smul.addr %s169, 2
      %s171 = smul.addr %s167, 32
      %s172 = sadd.s32 %s170, %s171
      %s173 = smul.addr %s172, 4
      %s174 = scalar_lea.vmem %s0, %s173
      %p175 = pneg %p49
      %p176 = pneg %p46
      %p177 = pneg %p70
      %p178 = pneg %p67
      %p179 = pneg %p91
      %p180 = pneg %p88
      %p181 = pneg %p119
      %p182 = pneg %p116
      %s183 = smul.u32 16, %s19
      %p184 = scmp.lt.s32.totalorder %s18, 1
      %s185 = scalar_select %p184, %s18, 1
      %p186 = scmp.lt.s32.totalorder %s183, 15
      %s187 = scalar_select %p186, %s183, 15
      %s188 = smul.addr %s187, 2
      %s189 = smul.addr %s185, 32
      %s190 = sadd.s32 %s188, %s189
      %s191 = smul.addr %s190, 8
      %s192 = scalar_lea.vmem %s3, %s191
      %s193 = smul.u32 16, %s19
      %p194 = scmp.lt.s32.totalorder %s18, 1
      %s195 = scalar_select %p194, %s18, 1
      %p196 = scmp.lt.s32.totalorder %s193, 15
      %s197 = scalar_select %p196, %s193, 15
      %s198 = smul.addr %s197, 2
      %s199 = smul.addr %s195, 32
      %s200 = sadd.s32 %s198, %s199
      %s201 = smul.addr %s200, 4
      %s202 = scalar_lea.vmem %s0, %s201
      %s203 = smul.u32 16, %s19
      %s204 = smul.u32 16, %s19
      %p205 = scmp.lt.s32.totalorder %s18, 1
      %s206 = scalar_select %p205, %s18, 1
      %p207 = scmp.lt.s32.totalorder %s204, 15
      %s208 = scalar_select %p207, %s204, 15
      %s209 = smul.addr %s208, 2
      %s210 = smul.addr %s206, 32
      %s211 = sadd.s32 %s209, %s210
      %s212 = smul.addr %s211, 8
      %s213 = scalar_lea.vmem %s3, %s212
      %s214 = smul.u32 16, %s19
      %v215 = vld [vmem:[%s202] sm:$0xf]
      %v216 = vld [vmem:[%s202 + $0x4] sm:$0xf]
      %v217 = vld [vmem:[%s202 + $0x8] sm:$0xf]
      %v218 = vld [vmem:[%s202 + $0xc] sm:$0xf]
      %v219 = vld [vmem:[%s202 + $0x10] sm:$0xf]
      %v220 = vld [vmem:[%s202 + $0x14] sm:$0xf]
      %v221 = vld [vmem:[%s202 + $0x18] sm:$0xf]
      %v222 = vld [vmem:[%s202 + $0x1c] sm:$0xf]
      %v223 = vld [vmem:[%s202 + $0x20] sm:$0xf]
      %v224 = vld [vmem:[%s202 + $0x24] sm:$0xf]
      %v225 = vld [vmem:[%s202 + $0x28] sm:$0xf]
      %v226 = vld [vmem:[%s202 + $0x2c] sm:$0xf]
      %v227 = vld [vmem:[%s202 + $0x30] sm:$0xf]
      %v228 = vld [vmem:[%s202 + $0x34] sm:$0xf]
      %v229 = vld [vmem:[%s202 + $0x38] sm:$0xf]
      %v230 = vld [vmem:[%s202 + $0x3c] sm:$0xf]
      %v231 = vld [vmem:[%s202 + $0x40] sm:$0xf]
      %v232 = vld [vmem:[%s202 + $0x44] sm:$0xf]
      %v233 = vld [vmem:[%s202 + $0x48] sm:$0xf]
      %v234 = vld [vmem:[%s202 + $0x4c] sm:$0xf]
      %v235 = vld [vmem:[%s202 + $0x50] sm:$0xf]
      %v236 = vld [vmem:[%s202 + $0x54] sm:$0xf]
      %v237 = vld [vmem:[%s202 + $0x58] sm:$0xf]
      %v238 = vld [vmem:[%s202 + $0x5c] sm:$0xf]
      %v239 = vld [vmem:[%s202 + $0x60] sm:$0xf]
      %v240 = vld [vmem:[%s202 + $0x64] sm:$0xf]
      %v241 = vld [vmem:[%s202 + $0x68] sm:$0xf]
      %v242 = vld [vmem:[%s202 + $0x6c] sm:$0xf]
      %v243 = vld [vmem:[%s202 + $0x70] sm:$0xf]
      %v244 = vld [vmem:[%s202 + $0x74] sm:$0xf]
      %v245 = vld [vmem:[%s202 + $0x78] sm:$0xf]
      %v246 = vld [vmem:[%s202 + $0x7c] sm:$0xf]
      %v247 = vunpack.c.l.bf16 %v215
      %v248 = vunpack.c.l.bf16 %v216
      %v249 = vunpack.c.l.bf16 %v217
      %v250 = vunpack.c.l.bf16 %v218
      %v251 = vunpack.c.l.bf16 %v219
      %v252 = vunpack.c.l.bf16 %v220
      %v253 = vunpack.c.l.bf16 %v221
      %v254 = vunpack.c.l.bf16 %v222
      %v255 = vunpack.c.l.bf16 %v223
      %v256 = vunpack.c.l.bf16 %v224
      %v257 = vunpack.c.l.bf16 %v225
      %v258 = vunpack.c.l.bf16 %v226
      %v259 = vunpack.c.l.bf16 %v227
      %v260 = vunpack.c.l.bf16 %v228
      %v261 = vunpack.c.l.bf16 %v229
      %v262 = vunpack.c.l.bf16 %v230
      %v263 = vunpack.c.l.bf16 %v231
      %v264 = vunpack.c.l.bf16 %v232
      %v265 = vunpack.c.l.bf16 %v233
      %v266 = vunpack.c.l.bf16 %v234
      %v267 = vunpack.c.l.bf16 %v235
      %v268 = vunpack.c.l.bf16 %v236
      %v269 = vunpack.c.l.bf16 %v237
      %v270 = vunpack.c.l.bf16 %v238
      %v271 = vunpack.c.l.bf16 %v239
      %v272 = vunpack.c.l.bf16 %v240
      %v273 = vunpack.c.l.bf16 %v241
      %v274 = vunpack.c.l.bf16 %v242
      %v275 = vunpack.c.l.bf16 %v243
      %v276 = vunpack.c.l.bf16 %v244
      %v277 = vunpack.c.l.bf16 %v245
      %v278 = vunpack.c.l.bf16 %v246
      %v279 = vld [vmem:[%s1] sm:$0x1]
      %v281 = vlaneseq
      %v282 = vshrl.u32 %v281, 7
      %v283 = vsub.s32 0, %v282
      %v284 = vrot.slane %v279, %v283
      %v286 = vmul.f32 %v247, %v284
      %v287 = vmul.f32 %v248, %v284
      %v288 = vmul.f32 %v249, %v284
      %v289 = vmul.f32 %v250, %v284
      %v290 = vmul.f32 %v251, %v284
      %v291 = vmul.f32 %v252, %v284
      %v292 = vmul.f32 %v253, %v284
      %v293 = vmul.f32 %v254, %v284
      %v294 = vmul.f32 %v255, %v284
      %v295 = vmul.f32 %v256, %v284
      %v296 = vmul.f32 %v257, %v284
      %v297 = vmul.f32 %v258, %v284
      %v298 = vmul.f32 %v259, %v284
      %v299 = vmul.f32 %v260, %v284
      %v300 = vmul.f32 %v261, %v284
      %v301 = vmul.f32 %v262, %v284
      %v302 = vmul.f32 %v263, %v284
      %v303 = vmul.f32 %v264, %v284
      %v304 = vmul.f32 %v265, %v284
      %v305 = vmul.f32 %v266, %v284
      %v306 = vmul.f32 %v267, %v284
      %v307 = vmul.f32 %v268, %v284
      %v308 = vmul.f32 %v269, %v284
      %v309 = vmul.f32 %v270, %v284
      %v310 = vmul.f32 %v271, %v284
      %v311 = vmul.f32 %v272, %v284
      %v312 = vmul.f32 %v273, %v284
      %v313 = vmul.f32 %v274, %v284
      %v314 = vmul.f32 %v275, %v284
      %v315 = vmul.f32 %v276, %v284
      %v316 = vmul.f32 %v277, %v284
      %v317 = vmul.f32 %v278, %v284
      %v318 = vld [vmem:[%s2] sm:$0x1]
      %v320 = vlaneseq
      %v321 = vshrl.u32 %v320, 7
      %v322 = vsub.s32 0, %v321
      %v323 = vrot.slane %v318, %v322
      %v325 = vadd.f32 %v286, %v323
      %v326 = vadd.f32 %v287, %v323
      %v327 = vadd.f32 %v288, %v323
      %v328 = vadd.f32 %v289, %v323
      %v329 = vadd.f32 %v290, %v323
      %v330 = vadd.f32 %v291, %v323
      %v331 = vadd.f32 %v292, %v323
      %v332 = vadd.f32 %v293, %v323
      %v333 = vadd.f32 %v294, %v323
      %v334 = vadd.f32 %v295, %v323
      %v335 = vadd.f32 %v296, %v323
      %v336 = vadd.f32 %v297, %v323
      %v337 = vadd.f32 %v298, %v323
      %v338 = vadd.f32 %v299, %v323
      %v339 = vadd.f32 %v300, %v323
      %v340 = vadd.f32 %v301, %v323
      %v341 = vadd.f32 %v302, %v323
      %v342 = vadd.f32 %v303, %v323
      %v343 = vadd.f32 %v304, %v323
      %v344 = vadd.f32 %v305, %v323
      %v345 = vadd.f32 %v306, %v323
      %v346 = vadd.f32 %v307, %v323
      %v347 = vadd.f32 %v308, %v323
      %v348 = vadd.f32 %v309, %v323
      %v349 = vadd.f32 %v310, %v323
      %v350 = vadd.f32 %v311, %v323
      %v351 = vadd.f32 %v312, %v323
      %v352 = vadd.f32 %v313, %v323
      %v353 = vadd.f32 %v314, %v323
      %v354 = vadd.f32 %v315, %v323
      %v355 = vadd.f32 %v316, %v323
      %v356 = vadd.f32 %v317, %v323
      %v357 = vmax.f32 %v325, 0.0
      %v358 = vmax.f32 %v326, 0.0
      %v359 = vmax.f32 %v327, 0.0
      %v360 = vmax.f32 %v328, 0.0
      %v361 = vmax.f32 %v329, 0.0
      %v362 = vmax.f32 %v330, 0.0
      %v363 = vmax.f32 %v331, 0.0
      %v364 = vmax.f32 %v332, 0.0
      %v365 = vmax.f32 %v333, 0.0
      %v366 = vmax.f32 %v334, 0.0
      %v367 = vmax.f32 %v335, 0.0
      %v368 = vmax.f32 %v336, 0.0
      %v369 = vmax.f32 %v337, 0.0
      %v370 = vmax.f32 %v338, 0.0
      %v371 = vmax.f32 %v339, 0.0
      %v372 = vmax.f32 %v340, 0.0
      %v373 = vmax.f32 %v341, 0.0
      %v374 = vmax.f32 %v342, 0.0
      %v375 = vmax.f32 %v343, 0.0
      %v376 = vmax.f32 %v344, 0.0
      %v377 = vmax.f32 %v345, 0.0
      %v378 = vmax.f32 %v346, 0.0
      %v379 = vmax.f32 %v347, 0.0
      %v380 = vmax.f32 %v348, 0.0
      %v381 = vmax.f32 %v349, 0.0
      %v382 = vmax.f32 %v350, 0.0
      %v383 = vmax.f32 %v351, 0.0
      %v384 = vmax.f32 %v352, 0.0
      %v385 = vmax.f32 %v353, 0.0
      %v386 = vmax.f32 %v354, 0.0
      %v387 = vmax.f32 %v355, 0.0
      %v388 = vmax.f32 %v356, 0.0
      %vm389 = vcmask 64512
      %390 = vst.msk [vmem:[%s213] sm:$0xff] %vm389, %v357
      %391 = vst.msk [vmem:[%s213 + $0x8] sm:$0xff] %vm389, %v358
      %392 = vst.msk [vmem:[%s213 + $0x10] sm:$0xff] %vm389, %v359
      %393 = vst.msk [vmem:[%s213 + $0x18] sm:$0xff] %vm389, %v360
      %394 = vst.msk [vmem:[%s213 + $0x20] sm:$0xff] %vm389, %v361
      %395 = vst.msk [vmem:[%s213 + $0x28] sm:$0xff] %vm389, %v362
      %396 = vst.msk [vmem:[%s213 + $0x30] sm:$0xff] %vm389, %v363
      %397 = vst.msk [vmem:[%s213 + $0x38] sm:$0xff] %vm389, %v364
      %398 = vst.msk [vmem:[%s213 + $0x40] sm:$0xff] %vm389, %v365
      %399 = vst.msk [vmem:[%s213 + $0x48] sm:$0xff] %vm389, %v366
      %400 = vst.msk [vmem:[%s213 + $0x50] sm:$0xff] %vm389, %v367
      %401 = vst.msk [vmem:[%s213 + $0x58] sm:$0xff] %vm389, %v368
      %402 = vst.msk [vmem:[%s213 + $0x60] sm:$0xff] %vm389, %v369
      %403 = vst.msk [vmem:[%s213 + $0x68] sm:$0xff] %vm389, %v370
      %404 = vst.msk [vmem:[%s213 + $0x70] sm:$0xff] %vm389, %v371
      %405 = vst.msk [vmem:[%s213 + $0x78] sm:$0xff] %vm389, %v372
      %406 = vst.msk [vmem:[%s213 + $0x80] sm:$0xff] %vm389, %v373
      %407 = vst.msk [vmem:[%s213 + $0x88] sm:$0xff] %vm389, %v374
      %408 = vst.msk [vmem:[%s213 + $0x90] sm:$0xff] %vm389, %v375
      %409 = vst.msk [vmem:[%s213 + $0x98] sm:$0xff] %vm389, %v376
      %410 = vst.msk [vmem:[%s213 + $0xa0] sm:$0xff] %vm389, %v377
      %411 = vst.msk [vmem:[%s213 + $0xa8] sm:$0xff] %vm389, %v378
      %412 = vst.msk [vmem:[%s213 + $0xb0] sm:$0xff] %vm389, %v379
      %413 = vst.msk [vmem:[%s213 + $0xb8] sm:$0xff] %vm389, %v380
      %414 = vst.msk [vmem:[%s213 + $0xc0] sm:$0xff] %vm389, %v381
      %415 = vst.msk [vmem:[%s213 + $0xc8] sm:$0xff] %vm389, %v382
      %416 = vst.msk [vmem:[%s213 + $0xd0] sm:$0xff] %vm389, %v383
      %417 = vst.msk [vmem:[%s213 + $0xd8] sm:$0xff] %vm389, %v384
      %418 = vst.msk [vmem:[%s213 + $0xe0] sm:$0xff] %vm389, %v385
      %419 = vst.msk [vmem:[%s213 + $0xe8] sm:$0xff] %vm389, %v386
      %420 = vst.msk [vmem:[%s213 + $0xf0] sm:$0xff] %vm389, %v387
      %421 = vst.msk [vmem:[%s213 + $0xf8] sm:$0xff] %vm389, %v388
      %s422 = smul.u32 16, %s19
      %p423 = scmp.lt.s32.totalorder %s18, 1
      %s424 = scalar_select %p423, %s18, 1
      %p425 = scmp.lt.s32.totalorder %s422, 15
      %s426 = scalar_select %p425, %s422, 15
      %s427 = smul.addr %s426, 2
      %s428 = smul.addr %s424, 32
      %s429 = sadd.s32 %s427, %s428
      %s430 = smul.addr %s429, 8
      %s431 = scalar_lea.vmem %s3, %s430
      // Predicated region
      $region33: #{conv_block_forward.5} parent=31 // pred_check
        %p432 = pneg %p116
      $region34: #{conv_block_forward.5} parent=31 // pred_check_branch
        %434 = sbr.rel (%p432) target = $region36
      $region35: #{conv_block_forward.5} parent=31 // pred_region
        %s435 = smul.u32 16, %s19
      $region36: #{conv_block_forward.5} parent=31 // pred_fallthru
        _
    $region32: #{conv_block_forward.5} parent=5 // pred_fallthru
      _
    %p436 = scmp.le.s32.totalorder 2, %s9
    // Predicated region
    $region37: #{conv_block_forward.5} parent=5 // pred_check
      %p437 = pneg %p436
    $region38: #{conv_block_forward.5} parent=5 // pred_check_branch
      %439 = sbr.rel (%p437) target = $region40
    $region39: #{conv_block_forward.5} parent=5 // pred_region
      %s440 = ssub.s32 %s9, 2
      // Predicated region
      $region41: #{conv_block_forward.5} parent=39 // pred_check
        %p441 = pneg %p122
      $region42: #{conv_block_forward.5} parent=39 // pred_check_branch
        %443 = sbr.rel (%p441) target = $region44
      $region43: #{conv_block_forward.5} parent=39 // pred_region
        %s444 = smul.u32 16, %s21
        %p445 = scmp.lt.s32.totalorder %s20, 1
        %s446 = scalar_select %p445, %s20, 1
        %p447 = scmp.lt.s32.totalorder %s444, 15
        %s448 = scalar_select %p447, %s444, 15
        %s449 = smul.addr %s448, 2
        %s450 = smul.addr %s446, 32
        %s451 = sadd.s32 %s449, %s450
        %s452 = smul.addr %s451, 8
        %s453 = scalar_lea.vmem %s3, %s452
      $region44: #{conv_block_forward.5} parent=39 // pred_fallthru
        _
    $region40: #{conv_block_forward.5} parent=5 // pred_fallthru
      _
  $region6: #{conv_block_forward.5} parent=0 // loop_footer
    %s13 = sadd.s32 1, %s9
  $region7: #{conv_block_forward.5} parent=0 // loop_footer_branch
    %8 = sbr.rel target = $region3
  $region8: #{conv_block_forward.5} parent=0 // loop_exit
    _

// kernel: conv_block_forward.4
$region0: #{conv_block_forward.4}
  #allocation0 [shape = 'u32[]', space=smem, size = 0x4, offset = 0x4, fixed_abs, tag = 'smem constant byte address 0x4 - core index']
  #allocation1 [shape = 'u32[144,128]{1,0:T(1,128)}', space=vmem, size = 0x12000, scoped, tag = 'internal scratch']
  %s0 = inlined_call_operand.vmem [shape: bf16[2,16,16,128], index: 0, kind: input, shape index: {}, may-alias: {0,1,2}]
  %s1 = inlined_call_operand.vmem [shape: bf16[2,16,16,128], index: 1, kind: input, shape index: {}, may-alias: {0,1,2}]
  %s2 = inlined_call_operand.vmem [shape: bf16[2,16,16,128], index: 2, kind: input, shape index: {}, may-alias: {0,1,2}]
  %s3 = inlined_call_operand.vmem [shape: f32[1,128], index: 3, kind: input, shape index: {}]
  %s4 = inlined_call_operand.vmem [shape: f32[1,128], index: 4, kind: input, shape index: {}]
  %s5 = inlined_call_operand.vmem [shape: bf16[1152,128], index: 5, kind: input, shape index: {}]
  %s6 = inlined_call_operand.vmem [shape: f32[1,128], index: 6, kind: input, shape index: {}]
  %s7 = inlined_call_operand.vmem [shape: bf16[2,16,16,128], index: 7, kind: output, shape index: {0}]
  %s8 = inlined_call_operand.vmem [shape: f32[2,2,128], index: 8, kind: output, shape index: {1}]
  %9 = xla_tuple %s7, %s8
  %s10 = sld [smem:[#allocation0]]
  $region73: #{conv_block_forward.4} parent=0
    _
  %s12 = ssub.s32 1, %s10
  %s13 = scalar_select 0, %s12, %s10
  loop: start=0, step=1, limit=4
  $region2: #{conv_block_forward.4} parent=0 // loop_pre_header
    _
  $region3: #{conv_block_forward.4} parent=0 // loop_header
    %s15 = sphi 0, %s19
    %p16 = scmp.ge.s32.totalorder %s15, 4
    %s22 = sphi 0, %s34
    %s23 = sphi 0, %s30
    %s24 = sphi 0, %s22
    %s25 = sphi 0, %s23
    %s26 = sphi 0, %s24
    %s27 = sphi 0, %s25
    %s47 = sphi 0, %s49
    %s50 = sphi 0, %s47
    %s51 = sphi 0, %s50
    %s67 = sphi 0, %s51
    %s75 = sphi 0, %s77
    %s78 = sphi 0, %s75
    %s79 = sphi 0, %s78
    %s95 = sphi 0, %s79
    %s111 = sphi 0, %s113
    %s114 = sphi 0, %s111
    %s115 = sphi 0, %s114
    %s131 = sphi 0, %s115
    %s135 = sphi 0, %s135
    %s137 = sphi 0, %s135
    %s138 = sphi 0, %s137
    %s152 = sphi 0, %s138
    %s156 = sphi 0, %s156
    %s158 = sphi 0, %s156
    %s159 = sphi 0, %s158
    %s173 = sphi 0, %s159
    %s177 = sphi 0, %s177
    %s179 = sphi 0, %s177
    %s180 = sphi 0, %s179
    %s194 = sphi 0, %s180
    %s198 = sphi 0, %s198
    %s200 = sphi 0, %s198
    %s201 = sphi 0, %s200
    %s215 = sphi 0, %s201
    %s223 = sphi 0, %s225
    %s226 = sphi 0, %s223
    %s227 = sphi 0, %s226
    %s243 = sphi 0, %s227
    %s249 = sphi 0, %s251
    %s252 = sphi 0, %s249
    %s253 = sphi 0, %s252
    %s269 = sphi 0, %s253
  $region4: #{conv_block_forward.4} parent=0 // loop_header_branch
    %18 = sbr.rel (%p16) target = $region8
  $region5: #{conv_block_forward.4} parent=0 // loop_body
    %s20 = ssub.s32 %s15, 1
    %s21 = ssub.s32 %s15, 2
    %s28 = sadd.s32 1, %s23
    %p29 = scmp.ge.s32.totalorder %s28, 1
    %s30 = scalar_select %p29, 0, %s28
    %s31 = sadd.s32 1, %s22
    %s32 = scalar_select %p29, %s31, %s22
    %p33 = scmp.ge.s32.totalorder %s32, 2
    %s34 = scalar_select %p33, 0, %s32
    %s35 = smul.u32 %s23, 16
    %s36 = ssub.s32 %s35, 1
    %p37 = scmp.gt.s32.totalorder %s36, 0
    %s38 = scalar_select %p37, %s36, 0
    %s39 = smul.u32 %s30, 16
    %s40 = ssub.s32 %s39, 1
    %p41 = scmp.gt.s32.totalorder %s40, 0
    %s42 = scalar_select %p41, %s40, 0
    %s43 = ssub.s32 %s22, %s34
    %s44 = ssub.s32 %s38, %s42
    %s45 = sor.u32 %s43, %s44
    %p46 = scmp.eq.s32.totalorder %s45, 0
    %s48 = sadd.s32 %s47, 1
    %s49 = scalar_select %p46, %s47, %s48
    %p52 = pneg %p46
    %p53 = scmp.eq.s32.totalorder %s15, 1
    %p54 = por %p52, %p53
    %p55 = scmp.ne.s32.totalorder %s47, %s50
    %p56 = scmp.eq.s32.totalorder %s15, 0
    %p57 = por %p55, %p56
    %p58 = scmp.ne.s32.totalorder %s47, %s50
    %p59 = scmp.eq.s32.totalorder %s20, 1
    %p60 = por %p58, %p59
    %p61 = scmp.ne.s32.totalorder %s50, %s51
    %p62 = scmp.eq.s32.totalorder %s20, 0
    %p63 = por %p61, %p62
    %p64 = scmp.ne.s32.totalorder %s50, %s51
    %p65 = scmp.eq.s32.totalorder %s21, 1
    %p66 = por %p64, %p65
    %p68 = scmp.ne.s32.totalorder %s51, %s67
    %p69 = scmp.eq.s32.totalorder %s21, 0
    %p70 = por %p68, %p69
    %s71 = ssub.s32 %s22, %s34
    %s72 = ssub.s32 %s23, %s30
    %s73 = sor.u32 %s71, %s72
    %p74 = scmp.eq.s32.totalorder %s73, 0
    %s76 = sadd.s32 %s75, 1
    %s77 = scalar_select %p74, %s75, %s76
    %p80 = pneg %p74
    %p81 = scmp.eq.s32.totalorder %s15, 1
    %p82 = por %p80, %p81
    %p83 = scmp.ne.s32.totalorder %s75, %s78
    %p84 = scmp.eq.s32.totalorder %s15, 0
    %p85 = por %p83, %p84
    %p86 = scmp.ne.s32.totalorder %s75, %s78
    %p87 = scmp.eq.s32.totalorder %s20, 1
    %p88 = por %p86, %p87
    %p89 = scmp.ne.s32.totalorder %s78, %s79
    %p90 = scmp.eq.s32.totalorder %s20, 0
    %p91 = por %p89, %p90
    %p92 = scmp.ne.s32.totalorder %s78, %s79
    %p93 = scmp.eq.s32.totalorder %s21, 1
    %p94 = por %p92, %p93
    %p96 = scmp.ne.s32.totalorder %s79, %s95
    %p97 = scmp.eq.s32.totalorder %s21, 0
    %p98 = por %p96, %p97
    %s99 = smul.u32 %s23, 16
    %s100 = sadd.s32 %s99, 16
    %p101 = scmp.lt.s32.totalorder %s100, 15
    %s102 = scalar_select %p101, %s100, 15
    %s103 = smul.u32 %s30, 16
    %s104 = sadd.s32 %s103, 16
    %p105 = scmp.lt.s32.totalorder %s104, 15
    %s106 = scalar_select %p105, %s104, 15
    %s107 = ssub.s32 %s22, %s34
    %s108 = ssub.s32 %s102, %s106
    %s109 = sor.u32 %s107, %s108
    %p110 = scmp.eq.s32.totalorder %s109, 0
    %s112 = sadd.s32 %s111, 1
    %s113 = scalar_select %p110, %s111, %s112
    %p116 = pneg %p110
    %p117 = scmp.eq.s32.totalorder %s15, 1
    %p118 = por %p116, %p117
    %p119 = scmp.ne.s32.totalorder %s111, %s114
    %p120 = scmp.eq.s32.totalorder %s15, 0
    %p121 = por %p119, %p120
    %p122 = scmp.ne.s32.totalorder %s111, %s114
    %p123 = scmp.eq.s32.totalorder %s20, 1
    %p124 = por %p122, %p123
    %p125 = scmp.ne.s32.totalorder %s114, %s115
    %p126 = scmp.eq.s32.totalorder %s20, 0
    %p127 = por %p125, %p126
    %p128 = scmp.ne.s32.totalorder %s114, %s115
    %p129 = scmp.eq.s32.totalorder %s21, 1
    %p130 = por %p128, %p129
    %p132 = scmp.ne.s32.totalorder %s115, %s131
    %p133 = scmp.eq.s32.totalorder %s21, 0
    %p134 = por %p132, %p133
    %s136 = sadd.s32 %s135, 1
    %p139 = scmp.eq.s32.totalorder %s15, 1
    %p140 = scmp.ne.s32.totalorder %s135, %s137
    %p141 = scmp.eq.s32.totalorder %s15, 0
    %p142 = por %p140, %p141
    %p143 = scmp.ne.s32.totalorder %s135, %s137
    %p144 = scmp.eq.s32.totalorder %s20, 1
    %p145 = por %p143, %p144
    %p146 = scmp.ne.s32.totalorder %s137, %s138
    %p147 = scmp.eq.s32.totalorder %s20, 0
    %p148 = por %p146, %p147
    %p149 = scmp.ne.s32.totalorder %s137, %s138
    %p150 = scmp.eq.s32.totalorder %s21, 1
    %p151 = por %p149, %p150
    %p153 = scmp.ne.s32.totalorder %s138, %s152
    %p154 = scmp.eq.s32.totalorder %s21, 0
    %p155 = por %p153, %p154
    %s157 = sadd.s32 %s156, 1
    %p160 = scmp.eq.s32.totalorder %s15, 1
    %p161 = scmp.ne.s32.totalorder %s156, %s158
    %p162 = scmp.eq.s32.totalorder %s15, 0
    %p163 = por %p161, %p162
    %p164 = scmp.ne.s32.totalorder %s156, %s158
    %p165 = scmp.eq.s32.totalorder %s20, 1
    %p166 = por %p164, %p165
    %p167 = scmp.ne.s32.totalorder %s158, %s159
    %p168 = scmp.eq.s32.totalorder %s20, 0
    %p169 = por %p167, %p168
    %p170 = scmp.ne.s32.totalorder %s158, %s159
    %p171 = scmp.eq.s32.totalorder %s21, 1
    %p172 = por %p170, %p171
    %p174 = scmp.ne.s32.totalorder %s159, %s173
    %p175 = scmp.eq.s32.totalorder %s21, 0
    %p176 = por %p174, %p175
    %s178 = sadd.s32 %s177, 1
    %p181 = scmp.eq.s32.totalorder %s15, 1
    %p182 = scmp.ne.s32.totalorder %s177, %s179
    %p183 = scmp.eq.s32.totalorder %s15, 0
    %p184 = por %p182, %p183
    %p185 = scmp.ne.s32.totalorder %s177, %s179
    %p186 = scmp.eq.s32.totalorder %s20, 1
    %p187 = por %p185, %p186
    %p188 = scmp.ne.s32.totalorder %s179, %s180
    %p189 = scmp.eq.s32.totalorder %s20, 0
    %p190 = por %p188, %p189
    %p191 = scmp.ne.s32.totalorder %s179, %s180
    %p192 = scmp.eq.s32.totalorder %s21, 1
    %p193 = por %p191, %p192
    %p195 = scmp.ne.s32.totalorder %s180, %s194
    %p196 = scmp.eq.s32.totalorder %s21, 0
    %p197 = por %p195, %p196
    %s199 = sadd.s32 %s198, 1
    %p202 = scmp.eq.s32.totalorder %s15, 1
    %p203 = scmp.ne.s32.totalorder %s198, %s200
    %p204 = scmp.eq.s32.totalorder %s15, 0
    %p205 = por %p203, %p204
    %p206 = scmp.ne.s32.totalorder %s198, %s200
    %p207 = scmp.eq.s32.totalorder %s20, 1
    %p208 = por %p206, %p207
    %p209 = scmp.ne.s32.totalorder %s200, %s201
    %p210 = scmp.eq.s32.totalorder %s20, 0
    %p211 = por %p209, %p210
    %p212 = scmp.ne.s32.totalorder %s200, %s201
    %p213 = scmp.eq.s32.totalorder %s21, 1
    %p214 = por %p212, %p213
    %p216 = scmp.ne.s32.totalorder %s201, %s215
    %p217 = scmp.eq.s32.totalorder %s21, 0
    %p218 = por %p216, %p217
    %s219 = ssub.s32 %s22, %s34
    %s220 = ssub.s32 %s23, %s30
    %s221 = sor.u32 %s219, %s220
    %p222 = scmp.eq.s32.totalorder %s221, 0
    %s224 = sadd.s32 %s223, 1
    %s225 = scalar_select %p222, %s223, %s224
    %p228 = pneg %p222
    %p229 = scmp.eq.s32.totalorder %s15, 1
    %p230 = por %p228, %p229
    %p231 = scmp.ne.s32.totalorder %s223, %s226
    %p232 = scmp.eq.s32.totalorder %s15, 0
    %p233 = por %p231, %p232
    %p234 = scmp.ne.s32.totalorder %s223, %s226
    %p235 = scmp.eq.s32.totalorder %s20, 1
    %p236 = por %p234, %p235
    %p237 = scmp.ne.s32.totalorder %s226, %s227
    %p238 = scmp.eq.s32.totalorder %s20, 0
    %p239 = por %p237, %p238
    %p240 = scmp.ne.s32.totalorder %s226, %s227
    %p241 = scmp.eq.s32.totalorder %s21, 1
    %p242 = por %p240, %p241
    %p244 = scmp.ne.s32.totalorder %s227, %s243
    %p245 = scmp.eq.s32.totalorder %s21, 0
    %p246 = por %p244, %p245
    %s247 = ssub.s32 %s22, %s34
    %p248 = scmp.eq.s32.totalorder %s247, 0
    %s250 = sadd.s32 %s249, 1
    %s251 = scalar_select %p248, %s249, %s250
    %p254 = pneg %p248
    %p255 = scmp.eq.s32.totalorder %s15, 1
    %p256 = por %p254, %p255
    %p257 = scmp.ne.s32.totalorder %s249, %s252
    %p258 = scmp.eq.s32.totalorder %s15, 0
    %p259 = por %p257, %p258
    %p260 = scmp.ne.s32.totalorder %s249, %s252
    %p261 = scmp.eq.s32.totalorder %s20, 1
    %p262 = por %p260, %p261
    %p263 = scmp.ne.s32.totalorder %s252, %s253
    %p264 = scmp.eq.s32.totalorder %s20, 0
    %p265 = por %p263, %p264
    %p266 = scmp.ne.s32.totalorder %s252, %s253
    %p267 = scmp.eq.s32.totalorder %s21, 1
    %p268 = por %p266, %p267
    %p270 = scmp.ne.s32.totalorder %s253, %s269
    %p271 = scmp.eq.s32.totalorder %s21, 0
    %p272 = por %p270, %p271
    %p273 = scmp.le.s32.totalorder 1, %s15
    %p274 = scmp.lt.s32.totalorder %s15, 3
    %p275 = pnand %p273, %p274
    %p276 = pneg %p275
    // Predicated region
    $region9: #{conv_block_forward.4} parent=5 // pred_check
      _
    $region10: #{conv_block_forward.4} parent=5 // pred_check_branch
      %278 = sbr.rel (%p275) target = $region12
    $region11: #{conv_block_forward.4} parent=5 // pred_region
      %s279 = ssub.s32 %s15, 1
      // Predicated region
      $region13: #{conv_block_forward.4} parent=11 // pred_check
        %p280 = pneg %p148
      $region14: #{conv_block_forward.4} parent=11 // pred_check_branch
        %282 = sbr.rel (%p280) target = $region16
      $region15: #{conv_block_forward.4} parent=11 // pred_region
        _
      $region16: #{conv_block_forward.4} parent=11 // pred_fallthru
        _
      // Predicated region
      $region17: #{conv_block_forward.4} parent=11 // pred_check
        %p283 = pneg %p169
      $region18: #{conv_block_forward.4} parent=11 // pred_check_branch
        %285 = sbr.rel (%p283) target = $region20
      $region19: #{conv_block_forward.4} parent=11 // pred_region
        _
      $region20: #{conv_block_forward.4} parent=11 // pred_fallthru
        _
      // Predicated region
      $region21: #{conv_block_forward.4} parent=11 // pred_check
        %p286 = pneg %p190
      $region22: #{conv_block_forward.4} parent=11 // pred_check_branch
        %288 = sbr.rel (%p286) target = $region24
      $region23: #{conv_block_forward.4} parent=11 // pred_region
        _
      $region24: #{conv_block_forward.4} parent=11 // pred_fallthru
        _
      // Predicated region
      $region25: #{conv_block_forward.4} parent=11 // pred_check
        %p289 = pneg %p211
      $region26: #{conv_block_forward.4} parent=11 // pred_check_branch
        %291 = sbr.rel (%p289) target = $region28
      $region27: #{conv_block_forward.4} parent=11 // pred_region
        _
      $region28: #{conv_block_forward.4} parent=11 // pred_fallthru
        _
    $region12: #{conv_block_forward.4} parent=5 // pred_fallthru
      _
    %p292 = scmp.lt.s32.totalorder %s15, 2
    // Predicated region
    $region29: #{conv_block_forward.4} parent=5 // pred_check
      %p293 = pneg %p292
    $region30: #{conv_block_forward.4} parent=5 // pred_check_branch
      %295 = sbr.rel (%p293) target = $region32
    $region31: #{conv_block_forward.4} parent=5 // pred_region
      // Predicated region
      $region33: #{conv_block_forward.4} parent=31 // pred_check
        %p296 = pneg %p57
      $region34: #{conv_block_forward.4} parent=31 // pred_check_branch
        %298 = sbr.rel (%p296) target = $region36
      $region35: #{conv_block_forward.4} parent=31 // pred_region
        %s299 = smul.u32 %s23, 16
        %s300 = ssub.s32 %s299, 1
        %p301 = scmp.gt.s32.totalorder %s300, 0
        %s302 = scalar_select %p301, %s300, 0
        %p303 = scmp.lt.s32.totalorder %s22, 1
        %s304 = scalar_select %p303, %s22, 1
        %p305 = scmp.lt.s32.totalorder %s302, 15
        %s306 = scalar_select %p305, %s302, 15
        %s307 = smul.addr %s306, 2
        %s308 = smul.addr %s304, 32
        %s309 = sadd.s32 %s307, %s308
        %s310 = smul.addr %s309, 4
        %s311 = scalar_lea.vmem %s0, %s310
        %s312 = smul.u32 %s23, 16
        %s313 = ssub.s32 %s312, 1
        %p314 = scmp.gt.s32.totalorder %s313, 0
        %s315 = scalar_select %p314, %s313, 0
      $region36: #{conv_block_forward.4} parent=31 // pred_fallthru
        _
      // Predicated region
      $region37: #{conv_block_forward.4} parent=31 // pred_check
        %p316 = pneg %p85
      $region38: #{conv_block_forward.4} parent=31 // pred_check_branch
        %318 = sbr.rel (%p316) target = $region40
      $region39: #{conv_block_forward.4} parent=31 // pred_region
        %s319 = smul.u32 16, %s23
        %p320 = scmp.lt.s32.totalorder %s22, 1
        %s321 = scalar_select %p320, %s22, 1
        %p322 = scmp.lt.s32.totalorder %s319, 15
        %s323 = scalar_select %p322, %s319, 15
        %s324 = smul.addr %s323, 2
        %s325 = smul.addr %s321, 32
        %s326 = sadd.s32 %s324, %s325
        %s327 = smul.addr %s326, 4
        %s328 = scalar_lea.vmem %s1, %s327
        %s329 = smul.u32 16, %s23
      $region40: #{conv_block_forward.4} parent=31 // pred_fallthru
        _
      // Predicated region
      $region41: #{conv_block_forward.4} parent=31 // pred_check
        %p330 = pneg %p121
      $region42: #{conv_block_forward.4} parent=31 // pred_check_branch
        %332 = sbr.rel (%p330) target = $region44
      $region43: #{conv_block_forward.4} parent=31 // pred_region
        %s333 = smul.u32 %s23, 16
        %s334 = sadd.s32 %s333, 16
        %p335 = scmp.lt.s32.totalorder %s334, 15
        %s336 = scalar_select %p335, %s334, 15
        %p337 = scmp.lt.s32.totalorder %s22, 1
        %s338 = scalar_select %p337, %s22, 1
        %p339 = scmp.lt.s32.totalorder %s336, 15
        %s340 = scalar_select %p339, %s336, 15
        %s341 = smul.addr %s340, 2
        %s342 = smul.addr %s338, 32
        %s343 = sadd.s32 %s341, %s342
        %s344 = smul.addr %s343, 4
        %s345 = scalar_lea.vmem %s2, %s344
        %s346 = smul.u32 %s23, 16
        %s347 = sadd.s32 %s346, 16
        %p348 = scmp.lt.s32.totalorder %s347, 15
        %s349 = scalar_select %p348, %s347, 15
      $region44: #{conv_block_forward.4} parent=31 // pred_fallthru
        _
    $region32: #{conv_block_forward.4} parent=5 // pred_fallthru
      _
    %p350 = scmp.le.s32.totalorder 1, %s15
    %p351 = scmp.lt.s32.totalorder %s15, 3
    %p352 = pnand %p350, %p351
    %p353 = pneg %p352
    // Predicated region
    $region45: #{conv_block_forward.4} parent=5 // pred_check
      _
    $region46: #{conv_block_forward.4} parent=5 // pred_check_branch
      %355 = sbr.rel (%p352) target = $region48
    $region47: #{conv_block_forward.4} parent=5 // pred_region
      %s356 = ssub.s32 %s15, 1
      %s357 = smul.u32 %s25, 16
      %s358 = ssub.s32 %s357, 1
      %p359 = scmp.gt.s32.totalorder %s358, 0
      %s360 = scalar_select %p359, %s358, 0
      %p361 = scmp.lt.s32.totalorder %s24, 1
      %s362 = scalar_select %p361, %s24, 1
      %p363 = scmp.lt.s32.totalorder %s360, 15
      %s364 = scalar_select %p363, %s360, 15
      %s365 = smul.addr %s364, 2
      %s366 = smul.addr %s362, 32
      %s367 = sadd.s32 %s365, %s366
      %s368 = smul.addr %s367, 4
      %s369 = scalar_lea.vmem %s0, %s368
      %p370 = pneg %p63
      %p371 = pneg %p60
      %s372 = smul.u32 16, %s25
      %p373 = scmp.lt.s32.totalorder %s24, 1
      %s374 = scalar_select %p373, %s24, 1
      %p375 = scmp.lt.s32.totalorder %s372, 15
      %s376 = scalar_select %p375, %s372, 15
      %s377 = smul.addr %s376, 2
      %s378 = smul.addr %s374, 32
      %s379 = sadd.s32 %s377, %s378
      %s380 = smul.addr %s379, 4
      %s381 = scalar_lea.vmem %s1, %s380
      %p382 = pneg %p91
      %p383 = pneg %p88
      %s384 = smul.u32 %s25, 16
      %s385 = sadd.s32 %s384, 16
      %p386 = scmp.lt.s32.totalorder %s385, 15
      %s387 = scalar_select %p386, %s385, 15
      %p388 = scmp.lt.s32.totalorder %s24, 1
      %s389 = scalar_select %p388, %s24, 1
      %p390 = scmp.lt.s32.totalorder %s387, 15
      %s391 = scalar_select %p390, %s387, 15
      %s392 = smul.addr %s391, 2
      %s393 = smul.addr %s389, 32
      %s394 = sadd.s32 %s392, %s393
      %s395 = smul.addr %s394, 4
      %s396 = scalar_lea.vmem %s2, %s395
      %p397 = pneg %p127
      %p398 = pneg %p124
      %p399 = pneg %p148
      %p400 = pneg %p145
      %p401 = pneg %p169
      %p402 = pneg %p166
      %p403 = pneg %p190
      %p404 = pneg %p187
      %p405 = pneg %p211
      %p406 = pneg %p208
      %p407 = pneg %p239
      %p408 = pneg %p236
      %s409 = smul.u32 16, %s25
      %p410 = scmp.lt.s32.totalorder %s24, 1
      %s411 = scalar_select %p410, %s24, 1
      %p412 = scmp.lt.s32.totalorder %s409, 15
      %s413 = scalar_select %p412, %s409, 15
      %s414 = smul.addr %s413, 2
      %s415 = smul.addr %s411, 32
      %s416 = sadd.s32 %s414, %s415
      %s417 = smul.addr %s416, 4
      %s418 = scalar_lea.vmem %s7, %s417
      %p419 = pneg %p265
      %p420 = pneg %p262
      %p421 = scmp.lt.s32.totalorder %s24, 1
      %s422 = scalar_select %p421, %s24, 1
      %s423 = smul.addr %s422, 2
      %s424 = scalar_lea.vmem %s8, %s423
      %s425 = smul.u32 %s25, 16
      %s426 = ssub.s32 %s425, 1
      %p427 = scmp.gt.s32.totalorder %s426, 0
      %s428 = scalar_select %p427, %s426, 0
      %p429 = scmp.lt.s32.totalorder %s24, 1
      %s430 = scalar_select %p429, %s24, 1
      %p431 = scmp.lt.s32.totalorder %s428, 15
      %s432 = scalar_select %p431, %s428, 15
      %s433 = smul.addr %s432, 2
      %s434 = smul.addr %s430, 32
      %s435 = sadd.s32 %s433, %s434
      %s436 = smul.addr %s435, 4
      %s437 = scalar_lea.vmem %s0, %s436
      %s438 = smul.u32 %s25, 16
      %s439 = ssub.s32 %s438, 1
      %p440 = scmp.gt.s32.totalorder %s439, 0
      %s441 = scalar_select %p440, %s439, 0
      %s442 = smul.u32 16, %s25
      %p443 = scmp.lt.s32.totalorder %s24, 1
      %s444 = scalar_select %p443, %s24, 1
      %p445 = scmp.lt.s32.totalorder %s442, 15
      %s446 = scalar_select %p445, %s442, 15
      %s447 = smul.addr %s446, 2
      %s448 = smul.addr %s444, 32
      %s449 = sadd.s32 %s447, %s448
      %s450 = smul.addr %s449, 4
      %s451 = scalar_lea.vmem %s1, %s450
      %s452 = smul.u32 16, %s25
      %s453 = smul.u32 %s25, 16
      %s454 = sadd.s32 %s453, 16
      %p455 = scmp.lt.s32.totalorder %s454, 15
      %s456 = scalar_select %p455, %s454, 15
      %p457 = scmp.lt.s32.totalorder %s24, 1
      %s458 = scalar_select %p457, %s24, 1
      %p459 = scmp.lt.s32.totalorder %s456, 15
      %s460 = scalar_select %p459, %s456, 15
      %s461 = smul.addr %s460, 2
      %s462 = smul.addr %s458, 32
      %s463 = sadd.s32 %s461, %s462
      %s464 = smul.addr %s463, 4
      %s465 = scalar_lea.vmem %s2, %s464
      %s466 = smul.u32 %s25, 16
      %s467 = sadd.s32 %s466, 16
      %p468 = scmp.lt.s32.totalorder %s467, 15
      %s469 = scalar_select %p468, %s467, 15
      %s470 = smul.u32 16, %s25
      %p471 = scmp.lt.s32.totalorder %s24, 1
      %s472 = scalar_select %p471, %s24, 1
      %p473 = scmp.lt.s32.totalorder %s470, 15
      %s474 = scalar_select %p473, %s470, 15
      %s475 = smul.addr %s474, 2
      %s476 = smul.addr %s472, 32
      %s477 = sadd.s32 %s475, %s476
      %s478 = smul.addr %s477, 4
      %s479 = scalar_lea.vmem %s7, %s478
      %s480 = smul.u32 16, %s25
      %p481 = scmp.lt.s32.totalorder %s24, 1
      %s482 = scalar_select %p481, %s24, 1
      %s483 = smul.addr %s482, 2
      %s484 = scalar_lea.vmem %s8, %s483
      %v486 = vld [vmem:[%s3] sm:$0x1]
      %v487 = vld [vmem:[%s4] sm:$0x1]
      %v488 = vld [vmem:[%s451] sm:$0xf]
      %v489 = vld [vmem:[%s451 + $0x4] sm:$0xf]
      %v490 = vld [vmem:[%s451 + $0x8] sm:$0xf]
      %v491 = vld [vmem:[%s451 + $0xc] sm:$0xf]
      %v492 = vld [vmem:[%s451 + $0x10] sm:$0xf]
      %v493 = vld [vmem:[%s451 + $0x14] sm:$0xf]
      %v494 = vld [vmem:[%s451 + $0x18] sm:$0xf]
      %v495 = vld [vmem:[%s451 + $0x1c] sm:$0xf]
      %v496 = vld [vmem:[%s451 + $0x20] sm:$0xf]
      %v497 = vld [vmem:[%s451 + $0x24] sm:$0xf]
      %v498 = vld [vmem:[%s451 + $0x28] sm:$0xf]
      %v499 = vld [vmem:[%s451 + $0x2c] sm:$0xf]
      %v500 = vld [vmem:[%s451 + $0x30] sm:$0xf]
      %v501 = vld [vmem:[%s451 + $0x34] sm:$0xf]
      %v502 = vld [vmem:[%s451 + $0x38] sm:$0xf]
      %v503 = vld [vmem:[%s451 + $0x3c] sm:$0xf]
      %v504 = vld [vmem:[%s451 + $0x40] sm:$0xf]
      %v505 = vld [vmem:[%s451 + $0x44] sm:$0xf]
      %v506 = vld [vmem:[%s451 + $0x48] sm:$0xf]
      %v507 = vld [vmem:[%s451 + $0x4c] sm:$0xf]
      %v508 = vld [vmem:[%s451 + $0x50] sm:$0xf]
      %v509 = vld [vmem:[%s451 + $0x54] sm:$0xf]
      %v510 = vld [vmem:[%s451 + $0x58] sm:$0xf]
      %v511 = vld [vmem:[%s451 + $0x5c] sm:$0xf]
      %v512 = vld [vmem:[%s451 + $0x60] sm:$0xf]
      %v513 = vld [vmem:[%s451 + $0x64] sm:$0xf]
      %v514 = vld [vmem:[%s451 + $0x68] sm:$0xf]
      %v515 = vld [vmem:[%s451 + $0x6c] sm:$0xf]
      %v516 = vld [vmem:[%s451 + $0x70] sm:$0xf]
      %v517 = vld [vmem:[%s451 + $0x74] sm:$0xf]
      %v518 = vld [vmem:[%s451 + $0x78] sm:$0xf]
      %v519 = vld [vmem:[%s451 + $0x7c] sm:$0xf]
      %v520 = vunpack.c.l.bf16 %v488
      %v521 = vunpack.c.l.bf16 %v489
      %v522 = vunpack.c.l.bf16 %v490
      %v523 = vunpack.c.l.bf16 %v491
      %v524 = vunpack.c.l.bf16 %v492
      %v525 = vunpack.c.l.bf16 %v493
      %v526 = vunpack.c.l.bf16 %v494
      %v527 = vunpack.c.l.bf16 %v495
      %v528 = vunpack.c.l.bf16 %v496
      %v529 = vunpack.c.l.bf16 %v497
      %v530 = vunpack.c.l.bf16 %v498
      %v531 = vunpack.c.l.bf16 %v499
      %v532 = vunpack.c.l.bf16 %v500
      %v533 = vunpack.c.l.bf16 %v501
      %v534 = vunpack.c.l.bf16 %v502
      %v535 = vunpack.c.l.bf16 %v503
      %v536 = vunpack.c.l.bf16 %v504
      %v537 = vunpack.c.l.bf16 %v505
      %v538 = vunpack.c.l.bf16 %v506
      %v539 = vunpack.c.l.bf16 %v507
      %v540 = vunpack.c.l.bf16 %v508
      %v541 = vunpack.c.l.bf16 %v509
      %v542 = vunpack.c.l.bf16 %v510
      %v543 = vunpack.c.l.bf16 %v511
      %v544 = vunpack.c.l.bf16 %v512
      %v545 = vunpack.c.l.bf16 %v513
      %v546 = vunpack.c.l.bf16 %v514
      %v547 = vunpack.c.l.bf16 %v515
      %v548 = vunpack.c.l.bf16 %v516
      %v549 = vunpack.c.l.bf16 %v517
      %v550 = vunpack.c.l.bf16 %v518
      %v551 = vunpack.c.l.bf16 %v519
      %v553 = vlaneseq
      %v554 = vshrl.u32 %v553, 7
      %v555 = vsub.s32 0, %v554
      %v556 = vrot.slane %v486, %v555
      %v558 = vmul.f32 %v520, %v556
      %v559 = vmul.f32 %v521, %v556
      %v560 = vmul.f32 %v522, %v556
      %v561 = vmul.f32 %v523, %v556
      %v562 = vmul.f32 %v524, %v556
      %v563 = vmul.f32 %v525, %v556
      %v564 = vmul.f32 %v526, %v556
      %v565 = vmul.f32 %v527, %v556
      %v566 = vmul.f32 %v528, %v556
      %v567 = vmul.f32 %v529, %v556
      %v568 = vmul.f32 %v530, %v556
      %v569 = vmul.f32 %v531, %v556
      %v570 = vmul.f32 %v532, %v556
      %v571 = vmul.f32 %v533, %v556
      %v572 = vmul.f32 %v534, %v556
      %v573 = vmul.f32 %v535, %v556
      %v574 = vmul.f32 %v536, %v556
      %v575 = vmul.f32 %v537, %v556
      %v576 = vmul.f32 %v538, %v556
      %v577 = vmul.f32 %v539, %v556
      %v578 = vmul.f32 %v540, %v556
      %v579 = vmul.f32 %v541, %v556
      %v580 = vmul.f32 %v542, %v556
      %v581 = vmul.f32 %v543, %v556
      %v582 = vmul.f32 %v544, %v556
      %v583 = vmul.f32 %v545, %v556
      %v584 = vmul.f32 %v546, %v556
      %v585 = vmul.f32 %v547, %v556
      %v586 = vmul.f32 %v548, %v556
      %v587 = vmul.f32 %v549, %v556
      %v588 = vmul.f32 %v550, %v556
      %v589 = vmul.f32 %v551, %v556
      %v591 = vlaneseq
      %v592 = vshrl.u32 %v591, 7
      %v593 = vsub.s32 0, %v592
      %v594 = vrot.slane %v487, %v593
      %v596 = vadd.f32 %v558, %v594
      %v597 = vadd.f32 %v559, %v594
      %v598 = vadd.f32 %v560, %v594
      %v599 = vadd.f32 %v561, %v594
      %v600 = vadd.f32 %v562, %v594
      %v601 = vadd.f32 %v563, %v594
      %v602 = vadd.f32 %v564, %v594
      %v603 = vadd.f32 %v565, %v594
      %v604 = vadd.f32 %v566, %v594
      %v605 = vadd.f32 %v567, %v594
      %v606 = vadd.f32 %v568, %v594
      %v607 = vadd.f32 %v569, %v594
      %v608 = vadd.f32 %v570, %v594
      %v609 = vadd.f32 %v571, %v594
      %v610 = vadd.f32 %v572, %v594
      %v611 = vadd.f32 %v573, %v594
      %v612 = vadd.f32 %v574, %v594
      %v613 = vadd.f32 %v575, %v594
      %v614 = vadd.f32 %v576, %v594
      %v615 = vadd.f32 %v577, %v594
      %v616 = vadd.f32 %v578, %v594
      %v617 = vadd.f32 %v579, %v594
      %v618 = vadd.f32 %v580, %v594
      %v619 = vadd.f32 %v581, %v594
      %v620 = vadd.f32 %v582, %v594
      %v621 = vadd.f32 %v583, %v594
      %v622 = vadd.f32 %v584, %v594
      %v623 = vadd.f32 %v585, %v594
      %v624 = vadd.f32 %v586, %v594
      %v625 = vadd.f32 %v587, %v594
      %v626 = vadd.f32 %v588, %v594
      %v627 = vadd.f32 %v589, %v594
      %v628 = vmax.f32 %v596, 0.0
      %v629 = vmax.f32 %v597, 0.0
      %v630 = vmax.f32 %v598, 0.0
      %v631 = vmax.f32 %v599, 0.0
      %v632 = vmax.f32 %v600, 0.0
      %v633 = vmax.f32 %v601, 0.0
      %v634 = vmax.f32 %v602, 0.0
      %v635 = vmax.f32 %v603, 0.0
      %v636 = vmax.f32 %v604, 0.0
      %v637 = vmax.f32 %v605, 0.0
      %v638 = vmax.f32 %v606, 0.0
      %v639 = vmax.f32 %v607, 0.0
      %v640 = vmax.f32 %v608, 0.0
      %v641 = vmax.f32 %v609, 0.0
      %v642 = vmax.f32 %v610, 0.0
      %v643 = vmax.f32 %v611, 0.0
      %v644 = vmax.f32 %v612, 0.0
      %v645 = vmax.f32 %v613, 0.0
      %v646 = vmax.f32 %v614, 0.0
      %v647 = vmax.f32 %v615, 0.0
      %v648 = vmax.f32 %v616, 0.0
      %v649 = vmax.f32 %v617, 0.0
      %v650 = vmax.f32 %v618, 0.0
      %v651 = vmax.f32 %v619, 0.0
      %v652 = vmax.f32 %v620, 0.0
      %v653 = vmax.f32 %v621, 0.0
      %v654 = vmax.f32 %v622, 0.0
      %v655 = vmax.f32 %v623, 0.0
      %v656 = vmax.f32 %v624, 0.0
      %v657 = vmax.f32 %v625, 0.0
      %v658 = vmax.f32 %v626, 0.0
      %v659 = vmax.f32 %v627, 0.0
      %v660 = vpack.c.bf16 %v629, %v628
      %v661 = vpack.c.bf16 %v631, %v630
      %v662 = vpack.c.bf16 %v633, %v632
      %v663 = vpack.c.bf16 %v635, %v634
      %v664 = vpack.c.bf16 %v637, %v636
      %v665 = vpack.c.bf16 %v639, %v638
      %v666 = vpack.c.bf16 %v641, %v640
      %v667 = vpack.c.bf16 %v643, %v642
      %v668 = vpack.c.bf16 %v645, %v644
      %v669 = vpack.c.bf16 %v647, %v646
      %v670 = vpack.c.bf16 %v649, %v648
      %v671 = vpack.c.bf16 %v651, %v650
      %v672 = vpack.c.bf16 %v653, %v652
      %v673 = vpack.c.bf16 %v655, %v654
      %v674 = vpack.c.bf16 %v657, %v656
      %v675 = vpack.c.bf16 %v659, %v658
      %p676 = scmp.gt.s32.totalorder %s25, 0
      %v677 = vld [vmem:[%s437] sm:$0xf]
      %v678 = vld [vmem:[%s437 + $0x4] sm:$0xf]
      %v679 = vunpack.c.l.bf16 %v677
      %v680 = vunpack.c.l.bf16 %v678
      %v681 = vmul.f32 %v679, %v556
      %v682 = vmul.f32 %v680, %v556
      %v683 = vadd.f32 %v681, %v594
      %v684 = vadd.f32 %v682, %v594
      %v685 = vmax.f32 %v683, 0.0
      %v686 = vmax.f32 %v684, 0.0
      %v687 = vpack.c.bf16 %v686, %v685
      %s688 = scalar_select %p676, 1, 0
      %v689 = vstv %s688
      %vm690 = vcmp.eq.s32.totalorder %v689, 1
      %v691 = vsel %vm690, %v687, 0
      %p692 = scmp.lt.s32.totalorder %s25, 0
      %v693 = vld [vmem:[%s465] sm:$0xf]
      %v694 = vld [vmem:[%s465 + $0x4] sm:$0xf]
      %v695 = vunpack.c.l.bf16 %v693
      %v696 = vunpack.c.l.bf16 %v694
      %v697 = vmul.f32 %v695, %v556
      %v698 = vmul.f32 %v696, %v556
      %v699 = vadd.f32 %v697, %v594
      %v700 = vadd.f32 %v698, %v594
      %v701 = vmax.f32 %v699, 0.0
      %v702 = vmax.f32 %v700, 0.0
      %v703 = vpack.c.bf16 %v702, %v701
      %s704 = scalar_select %p692, 1, 0
      %v705 = vstv %s704
      %vm706 = vcmp.eq.s32.totalorder %v705, 1
      %v707 = vsel %vm706, %v703, 0
      %v709 = vshrl.u32 %v691, 16
      %v711 = vrot.slane %v709, 7
      %v712 = vshll.u32 %v691, 16
      %v714 = vor.u32 %v711, %v712
      %v716 = vshrl.u32 %v660, 16
      %v718 = vrot.slane %v716, 7
      %v719 = vshll.u32 %v660, 16
      %v721 = vor.u32 %v718, %v719
      %v723 = vshrl.u32 %v661, 16
      %v725 = vrot.slane %v723, 7
      %v726 = vshll.u32 %v661, 16
      %v728 = vor.u32 %v725, %v726
      %v730 = vshrl.u32 %v662, 16
      %v732 = vrot.slane %v730, 7
      %v733 = vshll.u32 %v662, 16
      %v735 = vor.u32 %v732, %v733
      %v737 = vshrl.u32 %v663, 16
      %v739 = vrot.slane %v737, 7
      %v740 = vshll.u32 %v663, 16
      %v742 = vor.u32 %v739, %v740
      %v744 = vshrl.u32 %v664, 16
      %v746 = vrot.slane %v744, 7
      %v747 = vshll.u32 %v664, 16
      %v749 = vor.u32 %v746, %v747
      %v751 = vshrl.u32 %v665, 16
      %v753 = vrot.slane %v751, 7
      %v754 = vshll.u32 %v665, 16
      %v756 = vor.u32 %v753, %v754
      %v758 = vshrl.u32 %v666, 16
      %v760 = vrot.slane %v758, 7
      %v761 = vshll.u32 %v666, 16
      %v763 = vor.u32 %v760, %v761
      %v765 = vshrl.u32 %v667, 16
      %v767 = vrot.slane %v765, 7
      %v768 = vshll.u32 %v667, 16
      %v770 = vor.u32 %v767, %v768
      %v772 = vshrl.u32 %v668, 16
      %v774 = vrot.slane %v772, 7
      %v775 = vshll.u32 %v668, 16
      %v777 = vor.u32 %v774, %v775
      %v779 = vshrl.u32 %v669, 16
      %v781 = vrot.slane %v779, 7
      %v782 = vshll.u32 %v669, 16
      %v784 = vor.u32 %v781, %v782
      %v786 = vshrl.u32 %v670, 16
      %v788 = vrot.slane %v786, 7
      %v789 = vshll.u32 %v670, 16
      %v791 = vor.u32 %v788, %v789
      %v793 = vshrl.u32 %v671, 16
      %v795 = vrot.slane %v793, 7
      %v796 = vshll.u32 %v671, 16
      %v798 = vor.u32 %v795, %v796
      %v800 = vshrl.u32 %v672, 16
      %v802 = vrot.slane %v800, 7
      %v803 = vshll.u32 %v672, 16
      %v805 = vor.u32 %v802, %v803
      %v807 = vshrl.u32 %v673, 16
      %v809 = vrot.slane %v807, 7
      %v810 = vshll.u32 %v673, 16
      %v812 = vor.u32 %v809, %v810
      %v814 = vshrl.u32 %v674, 16
      %v816 = vrot.slane %v814, 7
      %v817 = vshll.u32 %v674, 16
      %v819 = vor.u32 %v816, %v817
      %v821 = vshrl.u32 %v675, 16
      %v823 = vrot.slane %v821, 7
      %v824 = vshll.u32 %v675, 16
      %v826 = vor.u32 %v823, %v824
      %v828 = vshrl.u32 %v707, 16
      %v830 = vrot.slane %v828, 7
      %v831 = vshll.u32 %v707, 16
      %v833 = vor.u32 %v830, %v831
      %vm870 = vcmask 1040384
      %vm871 = vsmask.f32 256
      %vm872 = vmand %vm870, %vm871
      %v873 = vsel %vm872, 0, %v714
      %v874 = vsel %vm872, 0, %v721
      %v875 = vsel %vm872, 0, %v728
      %v876 = vsel %vm872, 0, %v735
      %v877 = vsel %vm872, 0, %v742
      %v878 = vsel %vm872, 0, %v749
      %v879 = vsel %vm872, 0, %v756
      %v880 = vsel %vm872, 0, %v763
      %v881 = vsel %vm872, 0, %v770
      %v882 = vsel %vm872, 0, %v777
      %v883 = vsel %vm872, 0, %v784
      %v884 = vsel %vm872, 0, %v791
      %v885 = vsel %vm872, 0, %v798
      %v886 = vsel %vm872, 0, %v805
      %v887 = vsel %vm872, 0, %v812
      %v888 = vsel %vm872, 0, %v819
      %v889 = vsel %vm872, 0, %v826
      %v890 = vsel %vm872, 0, %v833
      %v891 = vsel %vm872, %v711, 0
      %v892 = vsel %vm872, %v718, 0
      %v893 = vsel %vm872, %v725, 0
      %v894 = vsel %vm872, %v732, 0
      %v895 = vsel %vm872, %v739, 0
      %v896 = vsel %vm872, %v746, 0
      %v897 = vsel %vm872, %v753, 0
      %v898 = vsel %vm872, %v760, 0
      %v899 = vsel %vm872, %v767, 0
      %v900 = vsel %vm872, %v774, 0
      %v901 = vsel %vm872, %v781, 0
      %v902 = vsel %vm872, %v788, 0
      %v903 = vsel %vm872, %v795, 0
      %v904 = vsel %vm872, %v802, 0
      %v905 = vsel %vm872, %v809, 0
      %v906 = vsel %vm872, %v816, 0
      %v907 = vsel %vm872, %v823, 0
      %v908 = vsel %vm872, %v830, 0
      %vm909 = vsmask.f32 7424
      %v911 = vshrl.u32 %v873, 16
      %v913 = vshll.u32 %v873, 16
      %v915 = vrot.slane %v913, 1
      %v916 = vor.u32 %v911, %v915
      %v918 = vshll.u32 %v891, 16
      %v920 = vrot.slane %v918, 1
      %v921 = vsel %vm909, %v916, %v920
      %v923 = vshrl.u32 %v874, 16
      %v925 = vshll.u32 %v874, 16
      %v927 = vrot.slane %v925, 1
      %v928 = vor.u32 %v923, %v927
      %v930 = vshll.u32 %v892, 16
      %v932 = vrot.slane %v930, 1
      %v933 = vsel %vm909, %v928, %v932
      %v935 = vshrl.u32 %v875, 16
      %v937 = vshll.u32 %v875, 16
      %v939 = vrot.slane %v937, 1
      %v940 = vor.u32 %v935, %v939
      %v942 = vshll.u32 %v893, 16
      %v944 = vrot.slane %v942, 1
      %v945 = vsel %vm909, %v940, %v944
      %v947 = vshrl.u32 %v876, 16
      %v949 = vshll.u32 %v876, 16
      %v951 = vrot.slane %v949, 1
      %v952 = vor.u32 %v947, %v951
      %v954 = vshll.u32 %v894, 16
      %v956 = vrot.slane %v954, 1
      %v957 = vsel %vm909, %v952, %v956
      %v959 = vshrl.u32 %v877, 16
      %v961 = vshll.u32 %v877, 16
      %v963 = vrot.slane %v961, 1
      %v964 = vor.u32 %v959, %v963
      %v966 = vshll.u32 %v895, 16
      %v968 = vrot.slane %v966, 1
      %v969 = vsel %vm909, %v964, %v968
      %v971 = vshrl.u32 %v878, 16
      %v973 = vshll.u32 %v878, 16
      %v975 = vrot.slane %v973, 1
      %v976 = vor.u32 %v971, %v975
      %v978 = vshll.u32 %v896, 16
      %v980 = vrot.slane %v978, 1
      %v981 = vsel %vm909, %v976, %v980
      %v983 = vshrl.u32 %v879, 16
      %v985 = vshll.u32 %v879, 16
      %v987 = vrot.slane %v985, 1
      %v988 = vor.u32 %v983, %v987
      %v990 = vshll.u32 %v897, 16
      %v992 = vrot.slane %v990, 1
      %v993 = vsel %vm909, %v988, %v992
      %v995 = vshrl.u32 %v880, 16
      %v997 = vshll.u32 %v880, 16
      %v999 = vrot.slane %v997, 1
      %v1000 = vor.u32 %v995, %v999
      %v1002 = vshll.u32 %v898, 16
      %v1004 = vrot.slane %v1002, 1
      %v1005 = vsel %vm909, %v1000, %v1004
      %v1007 = vshrl.u32 %v881, 16
      %v1009 = vshll.u32 %v881, 16
      %v1011 = vrot.slane %v1009, 1
      %v1012 = vor.u32 %v1007, %v1011
      %v1014 = vshll.u32 %v899, 16
      %v1016 = vrot.slane %v1014, 1
      %v1017 = vsel %vm909, %v1012, %v1016
      %v1019 = vshrl.u32 %v882, 16
      %v1021 = vshll.u32 %v882, 16
      %v1023 = vrot.slane %v1021, 1
      %v1024 = vor.u32 %v1019, %v1023
      %v1026 = vshll.u32 %v900, 16
      %v1028 = vrot.slane %v1026, 1
      %v1029 = vsel %vm909, %v1024, %v1028
      %v1031 = vshrl.u32 %v883, 16
      %v1033 = vshll.u32 %v883, 16
      %v1035 = vrot.slane %v1033, 1
      %v1036 = vor.u32 %v1031, %v1035
      %v1038 = vshll.u32 %v901, 16
      %v1040 = vrot.slane %v1038, 1
      %v1041 = vsel %vm909, %v1036, %v1040
      %v1043 = vshrl.u32 %v884, 16
      %v1045 = vshll.u32 %v884, 16
      %v1047 = vrot.slane %v1045, 1
      %v1048 = vor.u32 %v1043, %v1047
      %v1050 = vshll.u32 %v902, 16
      %v1052 = vrot.slane %v1050, 1
      %v1053 = vsel %vm909, %v1048, %v1052
      %v1055 = vshrl.u32 %v885, 16
      %v1057 = vshll.u32 %v885, 16
      %v1059 = vrot.slane %v1057, 1
      %v1060 = vor.u32 %v1055, %v1059
      %v1062 = vshll.u32 %v903, 16
      %v1064 = vrot.slane %v1062, 1
      %v1065 = vsel %vm909, %v1060, %v1064
      %v1067 = vshrl.u32 %v886, 16
      %v1069 = vshll.u32 %v886, 16
      %v1071 = vrot.slane %v1069, 1
      %v1072 = vor.u32 %v1067, %v1071
      %v1074 = vshll.u32 %v904, 16
      %v1076 = vrot.slane %v1074, 1
      %v1077 = vsel %vm909, %v1072, %v1076
      %v1079 = vshrl.u32 %v887, 16
      %v1081 = vshll.u32 %v887, 16
      %v1083 = vrot.slane %v1081, 1
      %v1084 = vor.u32 %v1079, %v1083
      %v1086 = vshll.u32 %v905, 16
      %v1088 = vrot.slane %v1086, 1
      %v1089 = vsel %vm909, %v1084, %v1088
      %v1091 = vshrl.u32 %v888, 16
      %v1093 = vshll.u32 %v888, 16
      %v1095 = vrot.slane %v1093, 1
      %v1096 = vor.u32 %v1091, %v1095
      %v1098 = vshll.u32 %v906, 16
      %v1100 = vrot.slane %v1098, 1
      %v1101 = vsel %vm909, %v1096, %v1100
      %vm1150 = vcmask 1046528
      %v1151 = vrot.slane %v873, 1
      %v1152 = vrot.slane %v891, 1
      %v1153 = vsel %vm1150, %v1151, %v1152
      %v1154 = vrot.slane %v874, 1
      %v1155 = vrot.slane %v892, 1
      %v1156 = vsel %vm1150, %v1154, %v1155
      %v1157 = vrot.slane %v875, 1
      %v1158 = vrot.slane %v893, 1
      %v1159 = vsel %vm1150, %v1157, %v1158
      %v1160 = vrot.slane %v876, 1
      %v1161 = vrot.slane %v894, 1
      %v1162 = vsel %vm1150, %v1160, %v1161
      %v1163 = vrot.slane %v877, 1
      %v1164 = vrot.slane %v895, 1
      %v1165 = vsel %vm1150, %v1163, %v1164
      %v1166 = vrot.slane %v878, 1
      %v1167 = vrot.slane %v896, 1
      %v1168 = vsel %vm1150, %v1166, %v1167
      %v1169 = vrot.slane %v879, 1
      %v1170 = vrot.slane %v897, 1
      %v1171 = vsel %vm1150, %v1169, %v1170
      %v1172 = vrot.slane %v880, 1
      %v1173 = vrot.slane %v898, 1
      %v1174 = vsel %vm1150, %v1172, %v1173
      %v1175 = vrot.slane %v881, 1
      %v1176 = vrot.slane %v899, 1
      %v1177 = vsel %vm1150, %v1175, %v1176
      %v1178 = vrot.slane %v882, 1
      %v1179 = vrot.slane %v900, 1
      %v1180 = vsel %vm1150, %v1178, %v1179
      %v1181 = vrot.slane %v883, 1
      %v1182 = vrot.slane %v901, 1
      %v1183 = vsel %vm1150, %v1181, %v1182
      %v1184 = vrot.slane %v884, 1
      %v1185 = vrot.slane %v902, 1
      %v1186 = vsel %vm1150, %v1184, %v1185
      %v1187 = vrot.slane %v885, 1
      %v1188 = vrot.slane %v903, 1
      %v1189 = vsel %vm1150, %v1187, %v1188
      %v1190 = vrot.slane %v886, 1
      %v1191 = vrot.slane %v904, 1
      %v1192 = vsel %vm1150, %v1190, %v1191
      %v1193 = vrot.slane %v887, 1
      %v1194 = vrot.slane %v905, 1
      %v1195 = vsel %vm1150, %v1193, %v1194
      %v1196 = vrot.slane %v888, 1
      %v1197 = vrot.slane %v906, 1
      %v1198 = vsel %vm1150, %v1196, %v1197
      %v1216 = vshrl.u32 %v889, 16
      %v1218 = vshll.u32 %v889, 16
      %v1220 = vrot.slane %v1218, 1
      %v1221 = vor.u32 %v1216, %v1220
      %v1223 = vshll.u32 %v907, 16
      %v1225 = vrot.slane %v1223, 1
      %v1226 = vsel %vm909, %v1221, %v1225
      %v1230 = vrot.slane %v889, 1
      %v1231 = vrot.slane %v907, 1
      %v1232 = vsel %vm1150, %v1230, %v1231
      %v1235 = vshrl.u32 %v890, 16
      %v1237 = vshll.u32 %v890, 16
      %v1239 = vrot.slane %v1237, 1
      %v1240 = vor.u32 %v1235, %v1239
      %v1242 = vshll.u32 %v908, 16
      %v1244 = vrot.slane %v1242, 1
      %v1245 = vsel %vm909, %v1240, %v1244
      %v1249 = vrot.slane %v890, 1
      %v1250 = vrot.slane %v908, 1
      %v1251 = vsel %vm1150, %v1249, %v1250
      %v1253 = vld [vmem:[%s5] sm:$0xf]
      %v1254 = vld [vmem:[%s5 + $0x4] sm:$0xf]
      %v1255 = vld [vmem:[%s5 + $0x8] sm:$0xf]
      %v1256 = vld [vmem:[%s5 + $0xc] sm:$0xf]
      %v1257 = vld [vmem:[%s5 + $0x10] sm:$0xf]
      %v1258 = vld [vmem:[%s5 + $0x14] sm:$0xf]
      %v1259 = vld [vmem:[%s5 + $0x18] sm:$0xf]
      %v1260 = vld [vmem:[%s5 + $0x1c] sm:$0xf]
      %v1261 = vld [vmem:[%s5 + $0x20] sm:$0xf]
      %v1262 = vld [vmem:[%s5 + $0x24] sm:$0xf]
      %v1263 = vld [vmem:[%s5 + $0x28] sm:$0xf]
      %v1264 = vld [vmem:[%s5 + $0x2c] sm:$0xf]
      %v1265 = vld [vmem:[%s5 + $0x30] sm:$0xf]
      %v1266 = vld [vmem:[%s5 + $0x34] sm:$0xf]
      %v1267 = vld [vmem:[%s5 + $0x38] sm:$0xf]
      %v1268 = vld [vmem:[%s5 + $0x3c] sm:$0xf]
      %v1269 = vld [vmem:[%s5 + $0x40] sm:$0xf]
      %v1270 = vld [vmem:[%s5 + $0x44] sm:$0xf]
      %v1271 = vld [vmem:[%s5 + $0x48] sm:$0xf]
      %v1272 = vld [vmem:[%s5 + $0x4c] sm:$0xf]
      %v1273 = vld [vmem:[%s5 + $0x50] sm:$0xf]
      %v1274 = vld [vmem:[%s5 + $0x54] sm:$0xf]
      %v1275 = vld [vmem:[%s5 + $0x58] sm:$0xf]
      %v1276 = vld [vmem:[%s5 + $0x5c] sm:$0xf]
      %v1277 = vld [vmem:[%s5 + $0x60] sm:$0xf]
      %v1278 = vld [vmem:[%s5 + $0x64] sm:$0xf]
      %v1279 = vld [vmem:[%s5 + $0x68] sm:$0xf]
      %v1280 = vld [vmem:[%s5 + $0x6c] sm:$0xf]
      %v1281 = vld [vmem:[%s5 + $0x70] sm:$0xf]
      %v1282 = vld [vmem:[%s5 + $0x74] sm:$0xf]
      %v1283 = vld [vmem:[%s5 + $0x78] sm:$0xf]
      %v1284 = vld [vmem:[%s5 + $0x7c] sm:$0xf]
      %v1285 = vld [vmem:[%s5 + $0x80] sm:$0xf]
      %v1286 = vld [vmem:[%s5 + $0x84] sm:$0xf]
      %v1287 = vld [vmem:[%s5 + $0x88] sm:$0xf]
      %v1288 = vld [vmem:[%s5 + $0x8c] sm:$0xf]
      %v1289 = vld [vmem:[%s5 + $0x90] sm:$0xf]
      %v1290 = vld [vmem:[%s5 + $0x94] sm:$0xf]
      %v1291 = vld [vmem:[%s5 + $0x98] sm:$0xf]
      %v1292 = vld [vmem:[%s5 + $0x9c] sm:$0xf]
      %v1293 = vld [vmem:[%s5 + $0xa0] sm:$0xf]
      %v1294 = vld [vmem:[%s5 + $0xa4] sm:$0xf]
      %v1295 = vld [vmem:[%s5 + $0xa8] sm:$0xf]
      %v1296 = vld [vmem:[%s5 + $0xac] sm:$0xf]
      %v1297 = vld [vmem:[%s5 + $0xb0] sm:$0xf]
      %v1298 = vld [vmem:[%s5 + $0xb4] sm:$0xf]
      %v1299 = vld [vmem:[%s5 + $0xb8] sm:$0xf]
      %v1300 = vld [vmem:[%s5 + $0xbc] sm:$0xf]
      %v1301 = vld [vmem:[%s5 + $0xc0] sm:$0xf]
      %v1302 = vld [vmem:[%s5 + $0xc4] sm:$0xf]
      %v1303 = vld [vmem:[%s5 + $0xc8] sm:$0xf]
      %v1304 = vld [vmem:[%s5 + $0xcc] sm:$0xf]
      %v1305 = vld [vmem:[%s5 + $0xd0] sm:$0xf]
      %v1306 = vld [vmem:[%s5 + $0xd4] sm:$0xf]
      %v1307 = vld [vmem:[%s5 + $0xd8] sm:$0xf]
      %v1308 = vld [vmem:[%s5 + $0xdc] sm:$0xf]
      %v1309 = vld [vmem:[%s5 + $0xe0] sm:$0xf]
      %v1310 = vld [vmem:[%s5 + $0xe4] sm:$0xf]
      %v1311 = vld [vmem:[%s5 + $0xe8] sm:$0xf]
      %v1312 = vld [vmem:[%s5 + $0xec] sm:$0xf]
      %v1313 = vld [vmem:[%s5 + $0xf0] sm:$0xf]
      %v1314 = vld [vmem:[%s5 + $0xf4] sm:$0xf]
      %v1315 = vld [vmem:[%s5 + $0xf8] sm:$0xf]
      %v1316 = vld [vmem:[%s5 + $0xfc] sm:$0xf]
      %v1317 = vld [vmem:[%s5 + $0x100] sm:$0xf]
      %v1318 = vld [vmem:[%s5 + $0x104] sm:$0xf]
      %v1319 = vld [vmem:[%s5 + $0x108] sm:$0xf]
      %v1320 = vld [vmem:[%s5 + $0x10c] sm:$0xf]
      %v1321 = vld [vmem:[%s5 + $0x110] sm:$0xf]
      %v1322 = vld [vmem:[%s5 + $0x114] sm:$0xf]
      %v1323 = vld [vmem:[%s5 + $0x118] sm:$0xf]
      %v1324 = vld [vmem:[%s5 + $0x11c] sm:$0xf]
      %v1325 = vld [vmem:[%s5 + $0x120] sm:$0xf]
      %v1326 = vld [vmem:[%s5 + $0x124] sm:$0xf]
      %v1327 = vld [vmem:[%s5 + $0x128] sm:$0xf]
      %v1328 = vld [vmem:[%s5 + $0x12c] sm:$0xf]
      %v1329 = vld [vmem:[%s5 + $0x130] sm:$0xf]
      %v1330 = vld [vmem:[%s5 + $0x134] sm:$0xf]
      %v1331 = vld [vmem:[%s5 + $0x138] sm:$0xf]
      %v1332 = vld [vmem:[%s5 + $0x13c] sm:$0xf]
      %v1333 = vld [vmem:[%s5 + $0x140] sm:$0xf]
      %v1334 = vld [vmem:[%s5 + $0x144] sm:$0xf]
      %v1335 = vld [vmem:[%s5 + $0x148] sm:$0xf]
      %v1336 = vld [vmem:[%s5 + $0x14c] sm:$0xf]
      %v1337 = vld [vmem:[%s5 + $0x150] sm:$0xf]
      %v1338 = vld [vmem:[%s5 + $0x154] sm:$0xf]
      %v1339 = vld [vmem:[%s5 + $0x158] sm:$0xf]
      %v1340 = vld [vmem:[%s5 + $0x15c] sm:$0xf]
      %v1341 = vld [vmem:[%s5 + $0x160] sm:$0xf]
      %v1342 = vld [vmem:[%s5 + $0x164] sm:$0xf]
      %v1343 = vld [vmem:[%s5 + $0x168] sm:$0xf]
      %v1344 = vld [vmem:[%s5 + $0x16c] sm:$0xf]
      %v1345 = vld [vmem:[%s5 + $0x170] sm:$0xf]
      %v1346 = vld [vmem:[%s5 + $0x174] sm:$0xf]
      %v1347 = vld [vmem:[%s5 + $0x178] sm:$0xf]
      %v1348 = vld [vmem:[%s5 + $0x17c] sm:$0xf]
      %v1349 = vld [vmem:[%s5 + $0x180] sm:$0xf]
      %v1350 = vld [vmem:[%s5 + $0x184] sm:$0xf]
      %v1351 = vld [vmem:[%s5 + $0x188] sm:$0xf]
      %v1352 = vld [vmem:[%s5 + $0x18c] sm:$0xf]
      %v1353 = vld [vmem:[%s5 + $0x190] sm:$0xf]
      %v1354 = vld [vmem:[%s5 + $0x194] sm:$0xf]
      %v1355 = vld [vmem:[%s5 + $0x198] sm:$0xf]
      %v1356 = vld [vmem:[%s5 + $0x19c] sm:$0xf]
      %v1357 = vld [vmem:[%s5 + $0x1a0] sm:$0xf]
      %v1358 = vld [vmem:[%s5 + $0x1a4] sm:$0xf]
      %v1359 = vld [vmem:[%s5 + $0x1a8] sm:$0xf]
      %v1360 = vld [vmem:[%s5 + $0x1ac] sm:$0xf]
      %v1361 = vld [vmem:[%s5 + $0x1b0] sm:$0xf]
      %v1362 = vld [vmem:[%s5 + $0x1b4] sm:$0xf]
      %v1363 = vld [vmem:[%s5 + $0x1b8] sm:$0xf]
      %v1364 = vld [vmem:[%s5 + $0x1bc] sm:$0xf]
      %v1365 = vld [vmem:[%s5 + $0x1c0] sm:$0xf]
      %v1366 = vld [vmem:[%s5 + $0x1c4] sm:$0xf]
      %v1367 = vld [vmem:[%s5 + $0x1c8] sm:$0xf]
      %v1368 = vld [vmem:[%s5 + $0x1cc] sm:$0xf]
      %v1369 = vld [vmem:[%s5 + $0x1d0] sm:$0xf]
      %v1370 = vld [vmem:[%s5 + $0x1d4] sm:$0xf]
      %v1371 = vld [vmem:[%s5 + $0x1d8] sm:$0xf]
      %v1372 = vld [vmem:[%s5 + $0x1dc] sm:$0xf]
      %v1373 = vld [vmem:[%s5 + $0x1e0] sm:$0xf]
      %v1374 = vld [vmem:[%s5 + $0x1e4] sm:$0xf]
      %v1375 = vld [vmem:[%s5 + $0x1e8] sm:$0xf]
      %v1376 = vld [vmem:[%s5 + $0x1ec] sm:$0xf]
      %v1377 = vld [vmem:[%s5 + $0x1f0] sm:$0xf]
      %v1378 = vld [vmem:[%s5 + $0x1f4] sm:$0xf]
      %v1379 = vld [vmem:[%s5 + $0x1f8] sm:$0xf]
      %v1380 = vld [vmem:[%s5 + $0x1fc] sm:$0xf]
      %v1381 = vld [vmem:[%s5 + $0x200] sm:$0xf]
      %v1382 = vld [vmem:[%s5 + $0x204] sm:$0xf]
      %v1383 = vld [vmem:[%s5 + $0x208] sm:$0xf]
      %v1384 = vld [vmem:[%s5 + $0x20c] sm:$0xf]
      %v1385 = vld [vmem:[%s5 + $0x210] sm:$0xf]
      %v1386 = vld [vmem:[%s5 + $0x214] sm:$0xf]
      %v1387 = vld [vmem:[%s5 + $0x218] sm:$0xf]
      %v1388 = vld [vmem:[%s5 + $0x21c] sm:$0xf]
      %v1389 = vld [vmem:[%s5 + $0x220] sm:$0xf]
      %v1390 = vld [vmem:[%s5 + $0x224] sm:$0xf]
      %v1391 = vld [vmem:[%s5 + $0x228] sm:$0xf]
      %v1392 = vld [vmem:[%s5 + $0x22c] sm:$0xf]
      %v1393 = vld [vmem:[%s5 + $0x230] sm:$0xf]
      %v1394 = vld [vmem:[%s5 + $0x234] sm:$0xf]
      %v1395 = vld [vmem:[%s5 + $0x238] sm:$0xf]
      %v1396 = vld [vmem:[%s5 + $0x23c] sm:$0xf]
      %v1397 = vld [vmem:[%s6] sm:$0x1]
      %v1399 = vlaneseq
      %v1400 = vshrl.u32 %v1399, 7
      %v1401 = vsub.s32 0, %v1400
      %v1402 = vrot.slane %v1397, %v1401
      %v1548 = vunpack.c.l.b16 %v1253
      %v1549 = vunpack.c.l.b16 %v1254
      %v1550 = vunpack.c.l.b16 %v1255
      %v1551 = vunpack.c.l.b16 %v1256
      %v1552 = vunpack.c.l.b16 %v1257
      %v1553 = vunpack.c.l.b16 %v1258
      %v1554 = vunpack.c.l.b16 %v1259
      %v1555 = vunpack.c.l.b16 %v1260
      %v1556 = vunpack.c.l.b16 %v1261
      %v1557 = vunpack.c.l.b16 %v1262
      %v1558 = vunpack.c.l.b16 %v1263
      %v1559 = vunpack.c.l.b16 %v1264
      %v1560 = vunpack.c.l.b16 %v1265
      %v1561 = vunpack.c.l.b16 %v1266
      %v1562 = vunpack.c.l.b16 %v1267
      %v1563 = vunpack.c.l.b16 %v1268
      %v1564 = vunpack.c.l.b16 %v1269
      %v1565 = vunpack.c.l.b16 %v1270
      %v1566 = vunpack.c.l.b16 %v1271
      %v1567 = vunpack.c.l.b16 %v1272
      %v1568 = vunpack.c.l.b16 %v1273
      %v1569 = vunpack.c.l.b16 %v1274
      %v1570 = vunpack.c.l.b16 %v1275
      %v1571 = vunpack.c.l.b16 %v1276
      %v1572 = vunpack.c.l.b16 %v1277
      %v1573 = vunpack.c.l.b16 %v1278
      %v1574 = vunpack.c.l.b16 %v1279
      %v1575 = vunpack.c.l.b16 %v1280
      %v1576 = vunpack.c.l.b16 %v1281
      %v1577 = vunpack.c.l.b16 %v1282
      %v1578 = vunpack.c.l.b16 %v1283
      %v1579 = vunpack.c.l.b16 %v1284
      %v1580 = vunpack.c.l.b16 %v1285
      %v1581 = vunpack.c.l.b16 %v1286
      %v1582 = vunpack.c.l.b16 %v1287
      %v1583 = vunpack.c.l.b16 %v1288
      %v1584 = vunpack.c.l.b16 %v1289
      %v1585 = vunpack.c.l.b16 %v1290
      %v1586 = vunpack.c.l.b16 %v1291
      %v1587 = vunpack.c.l.b16 %v1292
      %v1588 = vunpack.c.l.b16 %v1293
      %v1589 = vunpack.c.l.b16 %v1294
      %v1590 = vunpack.c.l.b16 %v1295
      %v1591 = vunpack.c.l.b16 %v1296
      %v1592 = vunpack.c.l.b16 %v1297
      %v1593 = vunpack.c.l.b16 %v1298
      %v1594 = vunpack.c.l.b16 %v1299
      %v1595 = vunpack.c.l.b16 %v1300
      %v1596 = vunpack.c.l.b16 %v1301
      %v1597 = vunpack.c.l.b16 %v1302
      %v1598 = vunpack.c.l.b16 %v1303
      %v1599 = vunpack.c.l.b16 %v1304
      %v1600 = vunpack.c.l.b16 %v1305
      %v1601 = vunpack.c.l.b16 %v1306
      %v1602 = vunpack.c.l.b16 %v1307
      %v1603 = vunpack.c.l.b16 %v1308
      %v1604 = vunpack.c.l.b16 %v1309
      %v1605 = vunpack.c.l.b16 %v1310
      %v1606 = vunpack.c.l.b16 %v1311
      %v1607 = vunpack.c.l.b16 %v1312
      %v1608 = vunpack.c.l.b16 %v1313
      %v1609 = vunpack.c.l.b16 %v1314
      %v1610 = vunpack.c.l.b16 %v1315
      %v1611 = vunpack.c.l.b16 %v1316
      %v1612 = vunpack.c.l.b16 %v1317
      %v1613 = vunpack.c.l.b16 %v1318
      %v1614 = vunpack.c.l.b16 %v1319
      %v1615 = vunpack.c.l.b16 %v1320
      %v1616 = vunpack.c.l.b16 %v1321
      %v1617 = vunpack.c.l.b16 %v1322
      %v1618 = vunpack.c.l.b16 %v1323
      %v1619 = vunpack.c.l.b16 %v1324
      %v1620 = vunpack.c.l.b16 %v1325
      %v1621 = vunpack.c.l.b16 %v1326
      %v1622 = vunpack.c.l.b16 %v1327
      %v1623 = vunpack.c.l.b16 %v1328
      %v1624 = vunpack.c.l.b16 %v1329
      %v1625 = vunpack.c.l.b16 %v1330
      %v1626 = vunpack.c.l.b16 %v1331
      %v1627 = vunpack.c.l.b16 %v1332
      %v1628 = vunpack.c.l.b16 %v1333
      %v1629 = vunpack.c.l.b16 %v1334
      %v1630 = vunpack.c.l.b16 %v1335
      %v1631 = vunpack.c.l.b16 %v1336
      %v1632 = vunpack.c.l.b16 %v1337
      %v1633 = vunpack.c.l.b16 %v1338
      %v1634 = vunpack.c.l.b16 %v1339
      %v1635 = vunpack.c.l.b16 %v1340
      %v1636 = vunpack.c.l.b16 %v1341
      %v1637 = vunpack.c.l.b16 %v1342
      %v1638 = vunpack.c.l.b16 %v1343
      %v1639 = vunpack.c.l.b16 %v1344
      %v1640 = vunpack.c.l.b16 %v1345
      %v1641 = vunpack.c.l.b16 %v1346
      %v1642 = vunpack.c.l.b16 %v1347
      %v1643 = vunpack.c.l.b16 %v1348
      %v1644 = vunpack.c.l.b16 %v1349
      %v1645 = vunpack.c.l.b16 %v1350
      %v1646 = vunpack.c.l.b16 %v1351
      %v1647 = vunpack.c.l.b16 %v1352
      %v1648 = vunpack.c.l.b16 %v1353
      %v1649 = vunpack.c.l.b16 %v1354
      %v1650 = vunpack.c.l.b16 %v1355
      %v1651 = vunpack.c.l.b16 %v1356
      %v1652 = vunpack.c.l.b16 %v1357
      %v1653 = vunpack.c.l.b16 %v1358
      %v1654 = vunpack.c.l.b16 %v1359
      %v1655 = vunpack.c.l.b16 %v1360
      %v1656 = vunpack.c.l.b16 %v1361
      %v1657 = vunpack.c.l.b16 %v1362
      %v1658 = vunpack.c.l.b16 %v1363
      %v1659 = vunpack.c.l.b16 %v1364
      %v1660 = vunpack.c.l.b16 %v1365
      %v1661 = vunpack.c.l.b16 %v1366
      %v1662 = vunpack.c.l.b16 %v1367
      %v1663 = vunpack.c.l.b16 %v1368
      %v1664 = vunpack.c.l.b16 %v1369
      %v1665 = vunpack.c.l.b16 %v1370
      %v1666 = vunpack.c.l.b16 %v1371
      %v1667 = vunpack.c.l.b16 %v1372
      %v1668 = vunpack.c.l.b16 %v1373
      %v1669 = vunpack.c.l.b16 %v1374
      %v1670 = vunpack.c.l.b16 %v1375
      %v1671 = vunpack.c.l.b16 %v1376
      %v1672 = vunpack.c.l.b16 %v1377
      %v1673 = vunpack.c.l.b16 %v1378
      %v1674 = vunpack.c.l.b16 %v1379
      %v1675 = vunpack.c.l.b16 %v1380
      %v1676 = vunpack.c.l.b16 %v1381
      %v1677 = vunpack.c.l.b16 %v1382
      %v1678 = vunpack.c.l.b16 %v1383
      %v1679 = vunpack.c.l.b16 %v1384
      %v1680 = vunpack.c.l.b16 %v1385
      %v1681 = vunpack.c.l.b16 %v1386
      %v1682 = vunpack.c.l.b16 %v1387
      %v1683 = vunpack.c.l.b16 %v1388
      %v1684 = vunpack.c.l.b16 %v1389
      %v1685 = vunpack.c.l.b16 %v1390
      %v1686 = vunpack.c.l.b16 %v1391
      %v1687 = vunpack.c.l.b16 %v1392
      %v1688 = vunpack.c.l.b16 %v1393
      %v1689 = vunpack.c.l.b16 %v1394
      %v1690 = vunpack.c.l.b16 %v1395
      %v1691 = vunpack.c.l.b16 %v1396
      %v1692 = vpack.c.b16 %v1549, %v1548
      %v1693 = vpack.c.b16 %v1551, %v1550
      %v1694 = vpack.c.b16 %v1553, %v1552
      %v1695 = vpack.c.b16 %v1555, %v1554
      %v1696 = vpack.c.b16 %v1557, %v1556
      %v1697 = vpack.c.b16 %v1559, %v1558
      %v1698 = vpack.c.b16 %v1561, %v1560
      %v1699 = vpack.c.b16 %v1563, %v1562
      %v1700 = vpack.c.b16 %v1565, %v1564
      %v1701 = vpack.c.b16 %v1567, %v1566
      %v1702 = vpack.c.b16 %v1569, %v1568
      %v1703 = vpack.c.b16 %v1571, %v1570
      %v1704 = vpack.c.b16 %v1573, %v1572
      %v1705 = vpack.c.b16 %v1575, %v1574
      %v1706 = vpack.c.b16 %v1577, %v1576
      %v1707 = vpack.c.b16 %v1579, %v1578
      %v1708 = vpack.c.b16 %v1581, %v1580
      %v1709 = vpack.c.b16 %v1583, %v1582
      %v1710 = vpack.c.b16 %v1585, %v1584
      %v1711 = vpack.c.b16 %v1587, %v1586
      %v1712 = vpack.c.b16 %v1589, %v1588
      %v1713 = vpack.c.b16 %v1591, %v1590
      %v1714 = vpack.c.b16 %v1593, %v1592
      %v1715 = vpack.c.b16 %v1595, %v1594
      %v1716 = vpack.c.b16 %v1597, %v1596
      %v1717 = vpack.c.b16 %v1599, %v1598
      %v1718 = vpack.c.b16 %v1601, %v1600
      %v1719 = vpack.c.b16 %v1603, %v1602
      %v1720 = vpack.c.b16 %v1605, %v1604
      %v1721 = vpack.c.b16 %v1607, %v1606
      %v1722 = vpack.c.b16 %v1609, %v1608
      %v1723 = vpack.c.b16 %v1611, %v1610
      %v1724 = vpack.c.b16 %v1613, %v1612
      %v1725 = vpack.c.b16 %v1615, %v1614
      %v1726 = vpack.c.b16 %v1617, %v1616
      %v1727 = vpack.c.b16 %v1619, %v1618
      %v1728 = vpack.c.b16 %v1621, %v1620
      %v1729 = vpack.c.b16 %v1623, %v1622
      %v1730 = vpack.c.b16 %v1625, %v1624
      %v1731 = vpack.c.b16 %v1627, %v1626
      %v1732 = vpack.c.b16 %v1629, %v1628
      %v1733 = vpack.c.b16 %v1631, %v1630
      %v1734 = vpack.c.b16 %v1633, %v1632
      %v1735 = vpack.c.b16 %v1635, %v1634
      %v1736 = vpack.c.b16 %v1637, %v1636
      %v1737 = vpack.c.b16 %v1639, %v1638
      %v1738 = vpack.c.b16 %v1641, %v1640
      %v1739 = vpack.c.b16 %v1643, %v1642
      %v1740 = vpack.c.b16 %v1645, %v1644
      %v1741 = vpack.c.b16 %v1647, %v1646
      %v1742 = vpack.c.b16 %v1649, %v1648
      %v1743 = vpack.c.b16 %v1651, %v1650
      %v1744 = vpack.c.b16 %v1653, %v1652
      %v1745 = vpack.c.b16 %v1655, %v1654
      %v1746 = vpack.c.b16 %v1657, %v1656
      %v1747 = vpack.c.b16 %v1659, %v1658
      %v1748 = vpack.c.b16 %v1661, %v1660
      %v1749 = vpack.c.b16 %v1663, %v1662
      %v1750 = vpack.c.b16 %v1665, %v1664
      %v1751 = vpack.c.b16 %v1667, %v1666
      %v1752 = vpack.c.b16 %v1669, %v1668
      %v1753 = vpack.c.b16 %v1671, %v1670
      %v1754 = vpack.c.b16 %v1673, %v1672
      %v1755 = vpack.c.b16 %v1675, %v1674
      %v1756 = vpack.c.b16 %v1677, %v1676
      %v1757 = vpack.c.b16 %v1679, %v1678
      %v1758 = vpack.c.b16 %v1681, %v1680
      %v1759 = vpack.c.b16 %v1683, %v1682
      %v1760 = vpack.c.b16 %v1685, %v1684
      %v1761 = vpack.c.b16 %v1687, %v1686
      %v1762 = vpack.c.b16 %v1689, %v1688
      %v1763 = vpack.c.b16 %v1691, %v1690
      %1836 = vmatprep.subr.bf16.mxu0 0
      %1837 = vmatpush1.bf16.msra.mxu0 %v1699
      %1838 = vmatprep.subr.bf16.mxu0 0
      %1839 = vmatpush1.bf16.msra.mxu0 %v1698
      %1840 = vmatprep.subr.bf16.mxu0 0
      %1841 = vmatpush1.bf16.msra.mxu0 %v1697
      %1842 = vmatprep.subr.bf16.mxu0 0
      %1843 = vmatpush1.bf16.msra.mxu0 %v1696
      %1844 = vmatprep.subr.bf16.mxu0 0
      %1845 = vmatpush1.bf16.msra.mxu0 %v1695
      %1846 = vmatprep.subr.bf16.mxu0 0
      %1847 = vmatpush1.bf16.msra.mxu0 %v1694
      %1848 = vmatprep.subr.bf16.mxu0 0
      %1849 = vmatpush1.bf16.msra.mxu0 %v1693
      %1850 = vmatprep.subr.bf16.mxu0 0
      %1851 = vmatpush1.bf16.msra.mxu0 %v1692
      %1852 = vmatprep.subr.bf16.mxu0 0
      %1853 = vmatpush2.bf16.msra.mxu0 %v1707
      %1854 = vmatprep.subr.bf16.mxu0 0
      %1855 = vmatpush2.bf16.msra.mxu0 %v1706
      %1856 = vmatprep.subr.bf16.mxu0 0
      %1857 = vmatpush2.bf16.msra.mxu0 %v1705
      %1858 = vmatprep.subr.bf16.mxu0 0
      %1859 = vmatpush2.bf16.msra.mxu0 %v1704
      %1860 = vmatprep.subr.bf16.mxu0 0
      %1861 = vmatpush2.bf16.msra.mxu0 %v1703
      %1862 = vmatprep.subr.bf16.mxu0 0
      %1863 = vmatpush2.bf16.msra.mxu0 %v1702
      %1864 = vmatprep.subr.bf16.mxu0 0
      %1865 = vmatpush2.bf16.msra.mxu0 %v1701
      %1866 = vmatprep.subr.bf16.mxu0 0
      %1867 = vmatpush2.bf16.msra.mxu0 %v1700
      %1868 = vmatprep.mubr.bf16.mxu0 %v921
      %1869 = vmatmul.mubr.bf16.gmra.mxu0 %v873
      %v1870 = vpop.f32.mrf.mxu0
      %v1871 = vadd.f32 %v1402, %v1870
      %v1872 = vpop.f32.mrf.mxu0
      %v1873 = vpop.f32.mrf.mxu0
      %v1874 = vadd.f32 %v1402, %v1873
      %v1875 = vpop.f32.mrf.mxu0
      %1876 = vmatprep.mubr.bf16.mxu0 %v933
      %1877 = vmatmul.mubr.bf16.gmra.mxu0 %v874
      %v1878 = vpop.f32.mrf.mxu0
      %v1879 = vadd.f32 %v1402, %v1878
      %v1880 = vpop.f32.mrf.mxu0
      %v1881 = vpop.f32.mrf.mxu0
      %v1882 = vadd.f32 %v1402, %v1881
      %v1883 = vpop.f32.mrf.mxu0
      %1884 = vmatprep.mubr.bf16.mxu0 %v945
      %1885 = vmatmul.mubr.bf16.gmra.mxu0 %v875
      %v1886 = vpop.f32.mrf.mxu0
      %v1887 = vadd.f32 %v1402, %v1886
      %v1888 = vpop.f32.mrf.mxu0
      %v1889 = vpop.f32.mrf.mxu0
      %v1890 = vadd.f32 %v1402, %v1889
      %v1891 = vpop.f32.mrf.mxu0
      %1892 = vmatprep.mubr.bf16.mxu0 %v957
      %1893 = vmatmul.mubr.bf16.gmra.mxu0 %v876
      %v1894 = vpop.f32.mrf.mxu0
      %v1895 = vadd.f32 %v1402, %v1894
      %v1896 = vpop.f32.mrf.mxu0
      %v1897 = vpop.f32.mrf.mxu0
      %v1898 = vadd.f32 %v1402, %v1897
      %v1899 = vpop.f32.mrf.mxu0
      %1900 = vmatprep.mubr.bf16.mxu0 %v969
      %1901 = vmatmul.mubr.bf16.gmra.mxu0 %v877
      %v1902 = vpop.f32.mrf.mxu0
      %v1903 = vadd.f32 %v1402, %v1902
      %v1904 = vpop.f32.mrf.mxu0
      %v1905 = vpop.f32.mrf.mxu0
      %v1906 = vadd.f32 %v1402, %v1905
      %v1907 = vpop.f32.mrf.mxu0
      %1908 = vmatprep.mubr.bf16.mxu0 %v981
      %1909 = vmatmul.mubr.bf16.gmra.mxu0 %v878
      %v1910 = vpop.f32.mrf.mxu0
      %v1911 = vadd.f32 %v1402, %v1910
      %v1912 = vpop.f32.mrf.mxu0
      %v1913 = vpop.f32.mrf.mxu0
      %v1914 = vadd.f32 %v1402, %v1913
      %v1915 = vpop.f32.mrf.mxu0
      %1916 = vmatprep.mubr.bf16.mxu0 %v993
      %1917 = vmatmul.mubr.bf16.gmra.mxu0 %v879
      %v1918 = vpop.f32.mrf.mxu0
      %v1919 = vadd.f32 %v1402, %v1918
      %v1920 = vpop.f32.mrf.mxu0
      %v1921 = vpop.f32.mrf.mxu0
      %v1922 = vadd.f32 %v1402, %v1921
      %v1923 = vpop.f32.mrf.mxu0
      %1924 = vmatprep.mubr.bf16.mxu0 %v1005
      %1925 = vmatmul.mubr.bf16.gmra.mxu0 %v880
      %v1926 = vpop.f32.mrf.mxu0
      %v1927 = vadd.f32 %v1402, %v1926
      %v1928 = vpop.f32.mrf.mxu0
      %v1929 = vpop.f32.mrf.mxu0
      %v1930 = vadd.f32 %v1402, %v1929
      %v1931 = vpop.f32.mrf.mxu0
      %1932 = vmatprep.mubr.bf16.mxu0 %v1017
      %1933 = vmatmul.mubr.bf16.gmra.mxu0 %v881
      %v1934 = vpop.f32.mrf.mxu0
      %v1935 = vadd.f32 %v1402, %v1934
      %v1936 = vpop.f32.mrf.mxu0
      %v1937 = vpop.f32.mrf.mxu0
      %v1938 = vadd.f32 %v1402, %v1937
      %v1939 = vpop.f32.mrf.mxu0
      %1940 = vmatprep.mubr.bf16.mxu0 %v1029
      %1941 = vmatmul.mubr.bf16.gmra.mxu0 %v882
      %v1942 = vpop.f32.mrf.mxu0
      %v1943 = vadd.f32 %v1402, %v1942
      %v1944 = vpop.f32.mrf.mxu0
      %v1945 = vpop.f32.mrf.mxu0
      %v1946 = vadd.f32 %v1402, %v1945
      %v1947 = vpop.f32.mrf.mxu0
      %1948 = vmatprep.mubr.bf16.mxu0 %v1041
      %1949 = vmatmul.mubr.bf16.gmra.mxu0 %v883
      %v1950 = vpop.f32.mrf.mxu0
      %v1951 = vadd.f32 %v1402, %v1950
      %v1952 = vpop.f32.mrf.mxu0
      %v1953 = vpop.f32.mrf.mxu0
      %v1954 = vadd.f32 %v1402, %v1953
      %v1955 = vpop.f32.mrf.mxu0
      %1956 = vmatprep.mubr.bf16.mxu0 %v1053
      %1957 = vmatmul.mubr.bf16.gmra.mxu0 %v884
      %v1958 = vpop.f32.mrf.mxu0
      %v1959 = vadd.f32 %v1402, %v1958
      %v1960 = vpop.f32.mrf.mxu0
      %v1961 = vpop.f32.mrf.mxu0
      %v1962 = vadd.f32 %v1402, %v1961
      %v1963 = vpop.f32.mrf.mxu0
      %1964 = vmatprep.mubr.bf16.mxu0 %v1065
      %1965 = vmatmul.mubr.bf16.gmra.mxu0 %v885
      %v1966 = vpop.f32.mrf.mxu0
      %v1967 = vadd.f32 %v1402, %v1966
      %v1968 = vpop.f32.mrf.mxu0
      %v1969 = vpop.f32.mrf.mxu0
      %v1970 = vadd.f32 %v1402, %v1969
      %v1971 = vpop.f32.mrf.mxu0
      %1972 = vmatprep.mubr.bf16.mxu0 %v1077
      %1973 = vmatmul.mubr.bf16.gmra.mxu0 %v886
      %v1974 = vpop.f32.mrf.mxu0
      %v1975 = vadd.f32 %v1402, %v1974
      %v1976 = vpop.f32.mrf.mxu0
      %v1977 = vpop.f32.mrf.mxu0
      %v1978 = vadd.f32 %v1402, %v1977
      %v1979 = vpop.f32.mrf.mxu0
      %1980 = vmatprep.mubr.bf16.mxu0 %v1089
      %1981 = vmatmul.mubr.bf16.gmra.mxu0 %v887
      %v1982 = vpop.f32.mrf.mxu0
      %v1983 = vadd.f32 %v1402, %v1982
      %v1984 = vpop.f32.mrf.mxu0
      %v1985 = vpop.f32.mrf.mxu0
      %v1986 = vadd.f32 %v1402, %v1985
      %v1987 = vpop.f32.mrf.mxu0
      %1988 = vmatprep.mubr.bf16.mxu0 %v1101
      %1989 = vmatmul.mubr.bf16.gmra.mxu0 %v888
      %v1990 = vpop.f32.mrf.mxu0
      %v1991 = vadd.f32 %v1402, %v1990
      %v1992 = vpop.f32.mrf.mxu0
      %v1993 = vpop.f32.mrf.mxu0
      %v1994 = vadd.f32 %v1402, %v1993
      %v1995 = vpop.f32.mrf.mxu0
      %1996 = vdwg.mxu0
      %1997 = vmatprep.subr.bf16.mxu0 0
      %1998 = vmatpush1.bf16.msra.mxu0 %v1715
      %1999 = vmatprep.subr.bf16.mxu0 0
      %2000 = vmatpush1.bf16.msra.mxu0 %v1714
      %2001 = vmatprep.subr.bf16.mxu0 0
      %2002 = vmatpush1.bf16.msra.mxu0 %v1713
      %2003 = vmatprep.subr.bf16.mxu0 0
      %2004 = vmatpush1.bf16.msra.mxu0 %v1712
      %2005 = vmatprep.subr.bf16.mxu0 0
      %2006 = vmatpush1.bf16.msra.mxu0 %v1711
      %2007 = vmatprep.subr.bf16.mxu0 0
      %2008 = vmatpush1.bf16.msra.mxu0 %v1710
      %2009 = vmatprep.subr.bf16.mxu0 0
      %2010 = vmatpush1.bf16.msra.mxu0 %v1709
      %2011 = vmatprep.subr.bf16.mxu0 0
      %2012 = vmatpush1.bf16.msra.mxu0 %v1708
      %2013 = vmatprep.subr.bf16.mxu0 0
      %2014 = vmatpush2.bf16.msra.mxu0 %v1723
      %2015 = vmatprep.subr.bf16.mxu0 0
      %2016 = vmatpush2.bf16.msra.mxu0 %v1722
      %2017 = vmatprep.subr.bf16.mxu0 0
      %2018 = vmatpush2.bf16.msra.mxu0 %v1721
      %2019 = vmatprep.subr.bf16.mxu0 0
      %2020 = vmatpush2.bf16.msra.mxu0 %v1720
      %2021 = vmatprep.subr.bf16.mxu0 0
      %2022 = vmatpush2.bf16.msra.mxu0 %v1719
      %2023 = vmatprep.subr.bf16.mxu0 0
      %2024 = vmatpush2.bf16.msra.mxu0 %v1718
      %2025 = vmatprep.subr.bf16.mxu0 0
      %2026 = vmatpush2.bf16.msra.mxu0 %v1717
      %2027 = vmatprep.subr.bf16.mxu0 0
      %2028 = vmatpush2.bf16.msra.mxu0 %v1716
      %2029 = vmatprep.mubr.bf16.mxu0 %v874
      %2030 = vmatmul.mubr.bf16.gmra.mxu0 %v1153
      %v2031 = vpop.f32.mrf.mxu0
      %v2032 = vadd.f32 %v1871, %v2031
      %v2033 = vpop.f32.mrf.mxu0
      %v2034 = vpop.f32.mrf.mxu0
      %v2035 = vadd.f32 %v1874, %v2034
      %v2036 = vpop.f32.mrf.mxu0
      %2037 = vmatprep.mubr.bf16.mxu0 %v875
      %2038 = vmatmul.mubr.bf16.gmra.mxu0 %v1156
      %v2039 = vpop.f32.mrf.mxu0
      %v2040 = vadd.f32 %v1879, %v2039
      %v2041 = vpop.f32.mrf.mxu0
      %v2042 = vpop.f32.mrf.mxu0
      %v2043 = vadd.f32 %v1882, %v2042
      %v2044 = vpop.f32.mrf.mxu0
      %2045 = vmatprep.mubr.bf16.mxu0 %v876
      %2046 = vmatmul.mubr.bf16.gmra.mxu0 %v1159
      %v2047 = vpop.f32.mrf.mxu0
      %v2048 = vadd.f32 %v1887, %v2047
      %v2049 = vpop.f32.mrf.mxu0
      %v2050 = vpop.f32.mrf.mxu0
      %v2051 = vadd.f32 %v1890, %v2050
      %v2052 = vpop.f32.mrf.mxu0
      %2053 = vmatprep.mubr.bf16.mxu0 %v877
      %2054 = vmatmul.mubr.bf16.gmra.mxu0 %v1162
      %v2055 = vpop.f32.mrf.mxu0
      %v2056 = vadd.f32 %v1895, %v2055
      %v2057 = vpop.f32.mrf.mxu0
      %v2058 = vpop.f32.mrf.mxu0
      %v2059 = vadd.f32 %v1898, %v2058
      %v2060 = vpop.f32.mrf.mxu0
      %2061 = vmatprep.mubr.bf16.mxu0 %v878
      %2062 = vmatmul.mubr.bf16.gmra.mxu0 %v1165
      %v2063 = vpop.f32.mrf.mxu0
      %v2064 = vadd.f32 %v1903, %v2063
      %v2065 = vpop.f32.mrf.mxu0
      %v2066 = vpop.f32.mrf.mxu0
      %v2067 = vadd.f32 %v1906, %v2066
      %v2068 = vpop.f32.mrf.mxu0
      %2069 = vmatprep.mubr.bf16.mxu0 %v879
      %2070 = vmatmul.mubr.bf16.gmra.mxu0 %v1168
      %v2071 = vpop.f32.mrf.mxu0
      %v2072 = vadd.f32 %v1911, %v2071
      %v2073 = vpop.f32.mrf.mxu0
      %v2074 = vpop.f32.mrf.mxu0
      %v2075 = vadd.f32 %v1914, %v2074
      %v2076 = vpop.f32.mrf.mxu0
      %2077 = vmatprep.mubr.bf16.mxu0 %v880
      %2078 = vmatmul.mubr.bf16.gmra.mxu0 %v1171
      %v2079 = vpop.f32.mrf.mxu0
      %v2080 = vadd.f32 %v1919, %v2079
      %v2081 = vpop.f32.mrf.mxu0
      %v2082 = vpop.f32.mrf.mxu0
      %v2083 = vadd.f32 %v1922, %v2082
      %v2084 = vpop.f32.mrf.mxu0
      %2085 = vmatprep.mubr.bf16.mxu0 %v881
      %2086 = vmatmul.mubr.bf16.gmra.mxu0 %v1174
      %v2087 = vpop.f32.mrf.mxu0
      %v2088 = vadd.f32 %v1927, %v2087
      %v2089 = vpop.f32.mrf.mxu0
      %v2090 = vpop.f32.mrf.mxu0
      %v2091 = vadd.f32 %v1930, %v2090
      %v2092 = vpop.f32.mrf.mxu0
      %2093 = vmatprep.mubr.bf16.mxu0 %v882
      %2094 = vmatmul.mubr.bf16.gmra.mxu0 %v1177
      %v2095 = vpop.f32.mrf.mxu0
      %v2096 = vadd.f32 %v1935, %v2095
      %v2097 = vpop.f32.mrf.mxu0
      %v2098 = vpop.f32.mrf.mxu0
      %v2099 = vadd.f32 %v1938, %v2098
      %v2100 = vpop.f32.mrf.mxu0
      %2101 = vmatprep.mubr.bf16.mxu0 %v883
      %2102 = vmatmul.mubr.bf16.gmra.mxu0 %v1180
      %v2103 = vpop.f32.mrf.mxu0
      %v2104 = vadd.f32 %v1943, %v2103
      %v2105 = vpop.f32.mrf.mxu0
      %v2106 = vpop.f32.mrf.mxu0
      %v2107 = vadd.f32 %v1946, %v2106
      %v2108 = vpop.f32.mrf.mxu0
      %2109 = vmatprep.mubr.bf16.mxu0 %v884
      %2110 = vmatmul.mubr.bf16.gmra.mxu0 %v1183
      %v2111 = vpop.f32.mrf.mxu0
      %v2112 = vadd.f32 %v1951, %v2111
      %v2113 = vpop.f32.mrf.mxu0
      %v2114 = vpop.f32.mrf.mxu0
      %v2115 = vadd.f32 %v1954, %v2114
      %v2116 = vpop.f32.mrf.mxu0
      %2117 = vmatprep.mubr.bf16.mxu0 %v885
      %2118 = vmatmul.mubr.bf16.gmra.mxu0 %v1186
      %v2119 = vpop.f32.mrf.mxu0
      %v2120 = vadd.f32 %v1959, %v2119
      %v2121 = vpop.f32.mrf.mxu0
      %v2122 = vpop.f32.mrf.mxu0
      %v2123 = vadd.f32 %v1962, %v2122
      %v2124 = vpop.f32.mrf.mxu0
      %2125 = vmatprep.mubr.bf16.mxu0 %v886
      %2126 = vmatmul.mubr.bf16.gmra.mxu0 %v1189
      %v2127 = vpop.f32.mrf.mxu0
      %v2128 = vadd.f32 %v1967, %v2127
      %v2129 = vpop.f32.mrf.mxu0
      %v2130 = vpop.f32.mrf.mxu0
      %v2131 = vadd.f32 %v1970, %v2130
      %v2132 = vpop.f32.mrf.mxu0
      %2133 = vmatprep.mubr.bf16.mxu0 %v887
      %2134 = vmatmul.mubr.bf16.gmra.mxu0 %v1192
      %v2135 = vpop.f32.mrf.mxu0
      %v2136 = vadd.f32 %v1975, %v2135
      %v2137 = vpop.f32.mrf.mxu0
      %v2138 = vpop.f32.mrf.mxu0
      %v2139 = vadd.f32 %v1978, %v2138
      %v2140 = vpop.f32.mrf.mxu0
      %2141 = vmatprep.mubr.bf16.mxu0 %v888
      %2142 = vmatmul.mubr.bf16.gmra.mxu0 %v1195
      %v2143 = vpop.f32.mrf.mxu0
      %v2144 = vadd.f32 %v1983, %v2143
      %v2145 = vpop.f32.mrf.mxu0
      %v2146 = vpop.f32.mrf.mxu0
      %v2147 = vadd.f32 %v1986, %v2146
      %v2148 = vpop.f32.mrf.mxu0
      %2149 = vmatprep.mubr.bf16.mxu0 %v889
      %2150 = vmatmul.mubr.bf16.gmra.mxu0 %v1198
      %v2151 = vpop.f32.mrf.mxu0
      %v2152 = vadd.f32 %v1991, %v2151
      %v2153 = vpop.f32.mrf.mxu0
      %v2154 = vpop.f32.mrf.mxu0
      %v2155 = vadd.f32 %v1994, %v2154
      %v2156 = vpop.f32.mrf.mxu0
      %2157 = vdwg.mxu0
      %2158 = vmatprep.subr.bf16.mxu0 0
      %2159 = vmatpush1.bf16.msra.mxu0 %v1731
      %2160 = vmatprep.subr.bf16.mxu0 0
      %2161 = vmatpush1.bf16.msra.mxu0 %v1730
      %2162 = vmatprep.subr.bf16.mxu0 0
      %2163 = vmatpush1.bf16.msra.mxu0 %v1729
      %2164 = vmatprep.subr.bf16.mxu0 0
      %2165 = vmatpush1.bf16.msra.mxu0 %v1728
      %2166 = vmatprep.subr.bf16.mxu0 0
      %2167 = vmatpush1.bf16.msra.mxu0 %v1727
      %2168 = vmatprep.subr.bf16.mxu0 0
      %2169 = vmatpush1.bf16.msra.mxu0 %v1726
      %2170 = vmatprep.subr.bf16.mxu0 0
      %2171 = vmatpush1.bf16.msra.mxu0 %v1725
      %2172 = vmatprep.subr.bf16.mxu0 0
      %2173 = vmatpush1.bf16.msra.mxu0 %v1724
      %2174 = vmatprep.subr.bf16.mxu0 0
      %2175 = vmatpush2.bf16.msra.mxu0 %v1739
      %2176 = vmatprep.subr.bf16.mxu0 0
      %2177 = vmatpush2.bf16.msra.mxu0 %v1738
      %2178 = vmatprep.subr.bf16.mxu0 0
      %2179 = vmatpush2.bf16.msra.mxu0 %v1737
      %2180 = vmatprep.subr.bf16.mxu0 0
      %2181 = vmatpush2.bf16.msra.mxu0 %v1736
      %2182 = vmatprep.subr.bf16.mxu0 0
      %2183 = vmatpush2.bf16.msra.mxu0 %v1735
      %2184 = vmatprep.subr.bf16.mxu0 0
      %2185 = vmatpush2.bf16.msra.mxu0 %v1734
      %2186 = vmatprep.subr.bf16.mxu0 0
      %2187 = vmatpush2.bf16.msra.mxu0 %v1733
      %2188 = vmatprep.subr.bf16.mxu0 0
      %2189 = vmatpush2.bf16.msra.mxu0 %v1732
      %2190 = vmatprep.mubr.bf16.mxu0 %v1156
      %2191 = vmatmul.mubr.bf16.gmra.mxu0 %v933
      %v2192 = vpop.f32.mrf.mxu0
      %v2193 = vadd.f32 %v2032, %v2192
      %v2194 = vpop.f32.mrf.mxu0
      %v2195 = vpop.f32.mrf.mxu0
      %v2196 = vadd.f32 %v2035, %v2195
      %v2197 = vpop.f32.mrf.mxu0
      %2198 = vmatprep.mubr.bf16.mxu0 %v1159
      %2199 = vmatmul.mubr.bf16.gmra.mxu0 %v945
      %v2200 = vpop.f32.mrf.mxu0
      %v2201 = vadd.f32 %v2040, %v2200
      %v2202 = vpop.f32.mrf.mxu0
      %v2203 = vpop.f32.mrf.mxu0
      %v2204 = vadd.f32 %v2043, %v2203
      %v2205 = vpop.f32.mrf.mxu0
      %2206 = vmatprep.mubr.bf16.mxu0 %v1162
      %2207 = vmatmul.mubr.bf16.gmra.mxu0 %v957
      %v2208 = vpop.f32.mrf.mxu0
      %v2209 = vadd.f32 %v2048, %v2208
      %v2210 = vpop.f32.mrf.mxu0
      %v2211 = vpop.f32.mrf.mxu0
      %v2212 = vadd.f32 %v2051, %v2211
      %v2213 = vpop.f32.mrf.mxu0
      %2214 = vmatprep.mubr.bf16.mxu0 %v1165
      %2215 = vmatmul.mubr.bf16.gmra.mxu0 %v969
      %v2216 = vpop.f32.mrf.mxu0
      %v2217 = vadd.f32 %v2056, %v2216
      %v2218 = vpop.f32.mrf.mxu0
      %v2219 = vpop.f32.mrf.mxu0
      %v2220 = vadd.f32 %v2059, %v2219
      %v2221 = vpop.f32.mrf.mxu0
      %2222 = vmatprep.mubr.bf16.mxu0 %v1168
      %2223 = vmatmul.mubr.bf16.gmra.mxu0 %v981
      %v2224 = vpop.f32.mrf.mxu0
      %v2225 = vadd.f32 %v2064, %v2224
      %v2226 = vpop.f32.mrf.mxu0
      %v2227 = vpop.f32.mrf.mxu0
      %v2228 = vadd.f32 %v2067, %v2227
      %v2229 = vpop.f32.mrf.mxu0
      %2230 = vmatprep.mubr.bf16.mxu0 %v1171
      %2231 = vmatmul.mubr.bf16.gmra.mxu0 %v993
      %v2232 = vpop.f32.mrf.mxu0
      %v2233 = vadd.f32 %v2072, %v2232
      %v2234 = vpop.f32.mrf.mxu0
      %v2235 = vpop.f32.mrf.mxu0
      %v2236 = vadd.f32 %v2075, %v2235
      %v2237 = vpop.f32.mrf.mxu0
      %2238 = vmatprep.mubr.bf16.mxu0 %v1174
      %2239 = vmatmul.mubr.bf16.gmra.mxu0 %v1005
      %v2240 = vpop.f32.mrf.mxu0
      %v2241 = vadd.f32 %v2080, %v2240
      %v2242 = vpop.f32.mrf.mxu0
      %v2243 = vpop.f32.mrf.mxu0
      %v2244 = vadd.f32 %v2083, %v2243
      %v2245 = vpop.f32.mrf.mxu0
      %2246 = vmatprep.mubr.bf16.mxu0 %v1177
      %2247 = vmatmul.mubr.bf16.gmra.mxu0 %v1017
      %v2248 = vpop.f32.mrf.mxu0
      %v2249 = vadd.f32 %v2088, %v2248
      %v2250 = vpop.f32.mrf.mxu0
      %v2251 = vpop.f32.mrf.mxu0
      %v2252 = vadd.f32 %v2091, %v2251
      %v2253 = vpop.f32.mrf.mxu0
      %2254 = vmatprep.mubr.bf16.mxu0 %v1180
      %2255 = vmatmul.mubr.bf16.gmra.mxu0 %v1029
      %v2256 = vpop.f32.mrf.mxu0
      %v2257 = vadd.f32 %v2096, %v2256
      %v2258 = vpop.f32.mrf.mxu0
      %v2259 = vpop.f32.mrf.mxu0
      %v2260 = vadd.f32 %v2099, %v2259
      %v2261 = vpop.f32.mrf.mxu0
      %2262 = vmatprep.mubr.bf16.mxu0 %v1183
      %2263 = vmatmul.mubr.bf16.gmra.mxu0 %v1041
      %v2264 = vpop.f32.mrf.mxu0
      %v2265 = vadd.f32 %v2104, %v2264
      %v2266 = vpop.f32.mrf.mxu0
      %v2267 = vpop.f32.mrf.mxu0
      %v2268 = vadd.f32 %v2107, %v2267
      %v2269 = vpop.f32.mrf.mxu0
      %2270 = vmatprep.mubr.bf16.mxu0 %v1186
      %2271 = vmatmul.mubr.bf16.gmra.mxu0 %v1053
      %v2272 = vpop.f32.mrf.mxu0
      %v2273 = vadd.f32 %v2112, %v2272
      %v2274 = vpop.f32.mrf.mxu0
      %v2275 = vpop.f32.mrf.mxu0
      %v2276 = vadd.f32 %v2115, %v2275
      %v2277 = vpop.f32.mrf.mxu0
      %2278 = vmatprep.mubr.bf16.mxu0 %v1189
      %2279 = vmatmul.mubr.bf16.gmra.mxu0 %v1065
      %v2280 = vpop.f32.mrf.mxu0
      %v2281 = vadd.f32 %v2120, %v2280
      %v2282 = vpop.f32.mrf.mxu0
      %v2283 = vpop.f32.mrf.mxu0
      %v2284 = vadd.f32 %v2123, %v2283
      %v2285 = vpop.f32.mrf.mxu0
      %2286 = vmatprep.mubr.bf16.mxu0 %v1192
      %2287 = vmatmul.mubr.bf16.gmra.mxu0 %v1077
      %v2288 = vpop.f32.mrf.mxu0
      %v2289 = vadd.f32 %v2128, %v2288
      %v2290 = vpop.f32.mrf.mxu0
      %v2291 = vpop.f32.mrf.mxu0
      %v2292 = vadd.f32 %v2131, %v2291
      %v2293 = vpop.f32.mrf.mxu0
      %2294 = vmatprep.mubr.bf16.mxu0 %v1195
      %2295 = vmatmul.mubr.bf16.gmra.mxu0 %v1089
      %v2296 = vpop.f32.mrf.mxu0
      %v2297 = vadd.f32 %v2136, %v2296
      %v2298 = vpop.f32.mrf.mxu0
      %v2299 = vpop.f32.mrf.mxu0
      %v2300 = vadd.f32 %v2139, %v2299
      %v2301 = vpop.f32.mrf.mxu0
      %2302 = vmatprep.mubr.bf16.mxu0 %v1198
      %2303 = vmatmul.mubr.bf16.gmra.mxu0 %v1101
      %v2304 = vpop.f32.mrf.mxu0
      %v2305 = vadd.f32 %v2144, %v2304
      %v2306 = vpop.f32.mrf.mxu0
      %v2307 = vpop.f32.mrf.mxu0
      %v2308 = vadd.f32 %v2147, %v2307
      %v2309 = vpop.f32.mrf.mxu0
      %2310 = vmatprep.mubr.bf16.mxu0 %v1232
      %2311 = vmatmul.mubr.bf16.gmra.mxu0 %v1226
      %v2312 = vpop.f32.mrf.mxu0
      %v2313 = vadd.f32 %v2152, %v2312
      %v2314 = vpop.f32.mrf.mxu0
      %v2315 = vpop.f32.mrf.mxu0
      %v2316 = vadd.f32 %v2155, %v2315
      %v2317 = vpop.f32.mrf.mxu0
      %2318 = vdwg.mxu0
      %2319 = vmatprep.subr.bf16.mxu0 0
      %2320 = vmatpush1.bf16.msra.mxu0 %v1747
      %2321 = vmatprep.subr.bf16.mxu0 0
      %2322 = vmatpush1.bf16.msra.mxu0 %v1746
      %2323 = vmatprep.subr.bf16.mxu0 0
      %2324 = vmatpush1.bf16.msra.mxu0 %v1745
      %2325 = vmatprep.subr.bf16.mxu0 0
      %2326 = vmatpush1.bf16.msra.mxu0 %v1744
      %2327 = vmatprep.subr.bf16.mxu0 0
      %2328 = vmatpush1.bf16.msra.mxu0 %v1743
      %2329 = vmatprep.subr.bf16.mxu0 0
      %2330 = vmatpush1.bf16.msra.mxu0 %v1742
      %2331 = vmatprep.subr.bf16.mxu0 0
      %2332 = vmatpush1.bf16.msra.mxu0 %v1741
      %2333 = vmatprep.subr.bf16.mxu0 0
      %2334 = vmatpush1.bf16.msra.mxu0 %v1740
      %2335 = vmatprep.subr.bf16.mxu0 0
      %2336 = vmatpush2.bf16.msra.mxu0 %v1755
      %2337 = vmatprep.subr.bf16.mxu0 0
      %2338 = vmatpush2.bf16.msra.mxu0 %v1754
      %2339 = vmatprep.subr.bf16.mxu0 0
      %2340 = vmatpush2.bf16.msra.mxu0 %v1753
      %2341 = vmatprep.subr.bf16.mxu0 0
      %2342 = vmatpush2.bf16.msra.mxu0 %v1752
      %2343 = vmatprep.subr.bf16.mxu0 0
      %2344 = vmatpush2.bf16.msra.mxu0 %v1751
      %2345 = vmatprep.subr.bf16.mxu0 0
      %2346 = vmatpush2.bf16.msra.mxu0 %v1750
      %2347 = vmatprep.subr.bf16.mxu0 0
      %2348 = vmatpush2.bf16.msra.mxu0 %v1749
      %2349 = vmatprep.subr.bf16.mxu0 0
      %2350 = vmatpush2.bf16.msra.mxu0 %v1748
      %2351 = vmatprep.mubr.bf16.mxu0 %v945
      %2352 = vmatmul.mubr.bf16.gmra.mxu0 %v875
      %v2353 = vpop.f32.mrf.mxu0
      %v2354 = vadd.f32 %v2193, %v2353
      %v2355 = vpop.f32.mrf.mxu0
      %v2356 = vpop.f32.mrf.mxu0
      %v2357 = vadd.f32 %v2196, %v2356
      %v2358 = vpop.f32.mrf.mxu0
      %2359 = vmatprep.mubr.bf16.mxu0 %v957
      %2360 = vmatmul.mubr.bf16.gmra.mxu0 %v876
      %v2361 = vpop.f32.mrf.mxu0
      %v2362 = vadd.f32 %v2201, %v2361
      %v2363 = vpop.f32.mrf.mxu0
      %v2364 = vpop.f32.mrf.mxu0
      %v2365 = vadd.f32 %v2204, %v2364
      %v2366 = vpop.f32.mrf.mxu0
      %2367 = vmatprep.mubr.bf16.mxu0 %v969
      %2368 = vmatmul.mubr.bf16.gmra.mxu0 %v877
      %v2369 = vpop.f32.mrf.mxu0
      %v2370 = vadd.f32 %v2209, %v2369
      %v2371 = vpop.f32.mrf.mxu0
      %v2372 = vpop.f32.mrf.mxu0
      %v2373 = vadd.f32 %v2212, %v2372
      %v2374 = vpop.f32.mrf.mxu0
      %2375 = vmatprep.mubr.bf16.mxu0 %v981
      %2376 = vmatmul.mubr.bf16.gmra.mxu0 %v878
      %v2377 = vpop.f32.mrf.mxu0
      %v2378 = vadd.f32 %v2217, %v2377
      %v2379 = vpop.f32.mrf.mxu0
      %v2380 = vpop.f32.mrf.mxu0
      %v2381 = vadd.f32 %v2220, %v2380
      %v2382 = vpop.f32.mrf.mxu0
      %2383 = vmatprep.mubr.bf16.mxu0 %v993
      %2384 = vmatmul.mubr.bf16.gmra.mxu0 %v879
      %v2385 = vpop.f32.mrf.mxu0
      %v2386 = vadd.f32 %v2225, %v2385
      %v2387 = vpop.f32.mrf.mxu0
      %v2388 = vpop.f32.mrf.mxu0
      %v2389 = vadd.f32 %v2228, %v2388
      %v2390 = vpop.f32.mrf.mxu0
      %2391 = vmatprep.mubr.bf16.mxu0 %v1005
      %2392 = vmatmul.mubr.bf16.gmra.mxu0 %v880
      %v2393 = vpop.f32.mrf.mxu0
      %v2394 = vadd.f32 %v2233, %v2393
      %v2395 = vpop.f32.mrf.mxu0
      %v2396 = vpop.f32.mrf.mxu0
      %v2397 = vadd.f32 %v2236, %v2396
      %v2398 = vpop.f32.mrf.mxu0
      %2399 = vmatprep.mubr.bf16.mxu0 %v1017
      %2400 = vmatmul.mubr.bf16.gmra.mxu0 %v881
      %v2401 = vpop.f32.mrf.mxu0
      %v2402 = vadd.f32 %v2241, %v2401
      %v2403 = vpop.f32.mrf.mxu0
      %v2404 = vpop.f32.mrf.mxu0
      %v2405 = vadd.f32 %v2244, %v2404
      %v2406 = vpop.f32.mrf.mxu0
      %2407 = vmatprep.mubr.bf16.mxu0 %v1029
      %2408 = vmatmul.mubr.bf16.gmra.mxu0 %v882
      %v2409 = vpop.f32.mrf.mxu0
      %v2410 = vadd.f32 %v2249, %v2409
      %v2411 = vpop.f32.mrf.mxu0
      %v2412 = vpop.f32.mrf.mxu0
      %v2413 = vadd.f32 %v2252, %v2412
      %v2414 = vpop.f32.mrf.mxu0
      %2415 = vmatprep.mubr.bf16.mxu0 %v1041
      %2416 = vmatmul.mubr.bf16.gmra.mxu0 %v883
      %v2417 = vpop.f32.mrf.mxu0
      %v2418 = vadd.f32 %v2257, %v2417
      %v2419 = vpop.f32.mrf.mxu0
      %v2420 = vpop.f32.mrf.mxu0
      %v2421 = vadd.f32 %v2260, %v2420
      %v2422 = vpop.f32.mrf.mxu0
      %2423 = vmatprep.mubr.bf16.mxu0 %v1053
      %2424 = vmatmul.mubr.bf16.gmra.mxu0 %v884
      %v2425 = vpop.f32.mrf.mxu0
      %v2426 = vadd.f32 %v2265, %v2425
      %v2427 = vpop.f32.mrf.mxu0
      %v2428 = vpop.f32.mrf.mxu0
      %v2429 = vadd.f32 %v2268, %v2428
      %v2430 = vpop.f32.mrf.mxu0
      %2431 = vmatprep.mubr.bf16.mxu0 %v1065
      %2432 = vmatmul.mubr.bf16.gmra.mxu0 %v885
      %v2433 = vpop.f32.mrf.mxu0
      %v2434 = vadd.f32 %v2273, %v2433
      %v2435 = vpop.f32.mrf.mxu0
      %v2436 = vpop.f32.mrf.mxu0
      %v2437 = vadd.f32 %v2276, %v2436
      %v2438 = vpop.f32.mrf.mxu0
      %2439 = vmatprep.mubr.bf16.mxu0 %v1077
      %2440 = vmatmul.mubr.bf16.gmra.mxu0 %v886
      %v2441 = vpop.f32.mrf.mxu0
      %v2442 = vadd.f32 %v2281, %v2441
      %v2443 = vpop.f32.mrf.mxu0
      %v2444 = vpop.f32.mrf.mxu0
      %v2445 = vadd.f32 %v2284, %v2444
      %v2446 = vpop.f32.mrf.mxu0
      %2447 = vmatprep.mubr.bf16.mxu0 %v1089
      %2448 = vmatmul.mubr.bf16.gmra.mxu0 %v887
      %v2449 = vpop.f32.mrf.mxu0
      %v2450 = vadd.f32 %v2289, %v2449
      %v2451 = vpop.f32.mrf.mxu0
      %v2452 = vpop.f32.mrf.mxu0
      %v2453 = vadd.f32 %v2292, %v2452
      %v2454 = vpop.f32.mrf.mxu0
      %2455 = vmatprep.mubr.bf16.mxu0 %v1101
      %2456 = vmatmul.mubr.bf16.gmra.mxu0 %v888
      %v2457 = vpop.f32.mrf.mxu0
      %v2458 = vadd.f32 %v2297, %v2457
      %v2459 = vpop.f32.mrf.mxu0
      %v2460 = vpop.f32.mrf.mxu0
      %v2461 = vadd.f32 %v2300, %v2460
      %v2462 = vpop.f32.mrf.mxu0
      %2463 = vmatprep.mubr.bf16.mxu0 %v1226
      %2464 = vmatmul.mubr.bf16.gmra.mxu0 %v889
      %v2465 = vpop.f32.mrf.mxu0
      %v2466 = vadd.f32 %v2305, %v2465
      %v2467 = vpop.f32.mrf.mxu0
      %v2468 = vpop.f32.mrf.mxu0
      %v2469 = vadd.f32 %v2308, %v2468
      %v2470 = vpop.f32.mrf.mxu0
      %2471 = vmatprep.mubr.bf16.mxu0 %v1245
      %2472 = vmatmul.mubr.bf16.gmra.mxu0 %v890
      %v2473 = vpop.f32.mrf.mxu0
      %v2474 = vadd.f32 %v2313, %v2473
      %v2475 = vpop.f32.mrf.mxu0
      %v2476 = vpop.f32.mrf.mxu0
      %v2477 = vadd.f32 %v2316, %v2476
      %v2478 = vpop.f32.mrf.mxu0
      %2479 = vdwg.mxu0
      %2480 = vmatprep.subr.bf16.mxu0 0
      %2481 = vmatpush1.bf16.msra.mxu0 %v1763
      %2482 = vmatprep.subr.bf16.mxu0 0
      %2483 = vmatpush1.bf16.msra.mxu0 %v1762
      %2484 = vmatprep.subr.bf16.mxu0 0
      %2485 = vmatpush1.bf16.msra.mxu0 %v1761
      %2486 = vmatprep.subr.bf16.mxu0 0
      %2487 = vmatpush1.bf16.msra.mxu0 %v1760
      %2488 = vmatprep.subr.bf16.mxu0 0
      %2489 = vmatpush1.bf16.msra.mxu0 %v1759
      %2490 = vmatprep.subr.bf16.mxu0 0
      %2491 = vmatpush1.bf16.msra.mxu0 %v1758
      %2492 = vmatprep.subr.bf16.mxu0 0
      %2493 = vmatpush1.bf16.msra.mxu0 %v1757
      %2494 = vmatprep.subr.bf16.mxu0 0
      %2495 = vmatpush1.bf16.msra.mxu0 %v1756
      %2496 = vmatprep.subr.bf16.mxu0 0
      %2497 = vmatpush2.bf16.msra.mxu0 0
      %2498 = vmatprep.subr.bf16.mxu0 0
      %2499 = vmatpush2.bf16.msra.mxu0 0
      %2500 = vmatprep.subr.bf16.mxu0 0
      %2501 = vmatpush2.bf16.msra.mxu0 0
      %2502 = vmatprep.subr.bf16.mxu0 0
      %2503 = vmatpush2.bf16.msra.mxu0 0
      %2504 = vmatprep.subr.bf16.mxu0 0
      %2505 = vmatpush2.bf16.msra.mxu0 0
      %2506 = vmatprep.subr.bf16.mxu0 0
      %2507 = vmatpush2.bf16.msra.mxu0 0
      %2508 = vmatprep.subr.bf16.mxu0 0
      %2509 = vmatpush2.bf16.msra.mxu0 0
      %2510 = vmatprep.subr.bf16.mxu0 0
      %2511 = vmatpush2.bf16.msra.mxu0 0
      %2512 = vmatprep.mubr.bf16.mxu0 0
      %2513 = vmatmul.mubr.bf16.gmra.mxu0 %v1159
      %v2514 = vpop.f32.mrf.mxu0
      %v2515 = vadd.f32 %v2354, %v2514
      %v2516 = vpop.f32.mrf.mxu0
      %v2517 = vpop.f32.mrf.mxu0
      %v2518 = vadd.f32 %v2357, %v2517
      %v2519 = vpop.f32.mrf.mxu0
      %2520 = vmatprep.mubr.bf16.mxu0 0
      %2521 = vmatmul.mubr.bf16.gmra.mxu0 %v1162
      %v2522 = vpop.f32.mrf.mxu0
      %v2523 = vadd.f32 %v2362, %v2522
      %v2524 = vpop.f32.mrf.mxu0
      %v2525 = vpop.f32.mrf.mxu0
      %v2526 = vadd.f32 %v2365, %v2525
      %v2527 = vpop.f32.mrf.mxu0
      %2528 = vmatprep.mubr.bf16.mxu0 0
      %2529 = vmatmul.mubr.bf16.gmra.mxu0 %v1165
      %v2530 = vpop.f32.mrf.mxu0
      %v2531 = vadd.f32 %v2370, %v2530
      %v2532 = vpop.f32.mrf.mxu0
      %v2533 = vpop.f32.mrf.mxu0
      %v2534 = vadd.f32 %v2373, %v2533
      %v2535 = vpop.f32.mrf.mxu0
      %2536 = vmatprep.mubr.bf16.mxu0 0
      %2537 = vmatmul.mubr.bf16.gmra.mxu0 %v1168
      %v2538 = vpop.f32.mrf.mxu0
      %v2539 = vadd.f32 %v2378, %v2538
      %v2540 = vpop.f32.mrf.mxu0
      %v2541 = vpop.f32.mrf.mxu0
      %v2542 = vadd.f32 %v2381, %v2541
      %v2543 = vpop.f32.mrf.mxu0
      %2544 = vmatprep.mubr.bf16.mxu0 0
      %2545 = vmatmul.mubr.bf16.gmra.mxu0 %v1171
      %v2546 = vpop.f32.mrf.mxu0
      %v2547 = vadd.f32 %v2386, %v2546
      %v2548 = vpop.f32.mrf.mxu0
      %v2549 = vpop.f32.mrf.mxu0
      %v2550 = vadd.f32 %v2389, %v2549
      %v2551 = vpop.f32.mrf.mxu0
      %2552 = vmatprep.mubr.bf16.mxu0 0
      %2553 = vmatmul.mubr.bf16.gmra.mxu0 %v1174
      %v2554 = vpop.f32.mrf.mxu0
      %v2555 = vadd.f32 %v2394, %v2554
      %v2556 = vpop.f32.mrf.mxu0
      %v2557 = vpop.f32.mrf.mxu0
      %v2558 = vadd.f32 %v2397, %v2557
      %v2559 = vpop.f32.mrf.mxu0
      %2560 = vmatprep.mubr.bf16.mxu0 0
      %2561 = vmatmul.mubr.bf16.gmra.mxu0 %v1177
      %v2562 = vpop.f32.mrf.mxu0
      %v2563 = vadd.f32 %v2402, %v2562
      %v2564 = vpop.f32.mrf.mxu0
      %v2565 = vpop.f32.mrf.mxu0
      %v2566 = vadd.f32 %v2405, %v2565
      %v2567 = vpop.f32.mrf.mxu0
      %2568 = vmatprep.mubr.bf16.mxu0 0
      %2569 = vmatmul.mubr.bf16.gmra.mxu0 %v1180
      %v2570 = vpop.f32.mrf.mxu0
      %v2571 = vadd.f32 %v2410, %v2570
      %v2572 = vpop.f32.mrf.mxu0
      %v2573 = vpop.f32.mrf.mxu0
      %v2574 = vadd.f32 %v2413, %v2573
      %v2575 = vpop.f32.mrf.mxu0
      %2576 = vmatprep.mubr.bf16.mxu0 0
      %2577 = vmatmul.mubr.bf16.gmra.mxu0 %v1183
      %v2578 = vpop.f32.mrf.mxu0
      %v2579 = vadd.f32 %v2418, %v2578
      %v2580 = vpop.f32.mrf.mxu0
      %v2581 = vpop.f32.mrf.mxu0
      %v2582 = vadd.f32 %v2421, %v2581
      %v2583 = vpop.f32.mrf.mxu0
      %2584 = vmatprep.mubr.bf16.mxu0 0
      %2585 = vmatmul.mubr.bf16.gmra.mxu0 %v1186
      %v2586 = vpop.f32.mrf.mxu0
      %v2587 = vadd.f32 %v2426, %v2586
      %v2588 = vpop.f32.mrf.mxu0
      %v2589 = vpop.f32.mrf.mxu0
      %v2590 = vadd.f32 %v2429, %v2589
      %v2591 = vpop.f32.mrf.mxu0
      %2592 = vmatprep.mubr.bf16.mxu0 0
      %2593 = vmatmul.mubr.bf16.gmra.mxu0 %v1189
      %v2594 = vpop.f32.mrf.mxu0
      %v2595 = vadd.f32 %v2434, %v2594
      %v2596 = vpop.f32.mrf.mxu0
      %v2597 = vpop.f32.mrf.mxu0
      %v2598 = vadd.f32 %v2437, %v2597
      %v2599 = vpop.f32.mrf.mxu0
      %2600 = vmatprep.mubr.bf16.mxu0 0
      %2601 = vmatmul.mubr.bf16.gmra.mxu0 %v1192
      %v2602 = vpop.f32.mrf.mxu0
      %v2603 = vadd.f32 %v2442, %v2602
      %v2604 = vpop.f32.mrf.mxu0
      %v2605 = vpop.f32.mrf.mxu0
      %v2606 = vadd.f32 %v2445, %v2605
      %v2607 = vpop.f32.mrf.mxu0
      %2608 = vmatprep.mubr.bf16.mxu0 0
      %2609 = vmatmul.mubr.bf16.gmra.mxu0 %v1195
      %v2610 = vpop.f32.mrf.mxu0
      %v2611 = vadd.f32 %v2450, %v2610
      %v2612 = vpop.f32.mrf.mxu0
      %v2613 = vpop.f32.mrf.mxu0
      %v2614 = vadd.f32 %v2453, %v2613
      %v2615 = vpop.f32.mrf.mxu0
      %2616 = vmatprep.mubr.bf16.mxu0 0
      %2617 = vmatmul.mubr.bf16.gmra.mxu0 %v1198
      %v2618 = vpop.f32.mrf.mxu0
      %v2619 = vadd.f32 %v2458, %v2618
      %v2620 = vpop.f32.mrf.mxu0
      %v2621 = vpop.f32.mrf.mxu0
      %v2622 = vadd.f32 %v2461, %v2621
      %v2623 = vpop.f32.mrf.mxu0
      %2624 = vmatprep.mubr.bf16.mxu0 0
      %2625 = vmatmul.mubr.bf16.gmra.mxu0 %v1232
      %v2626 = vpop.f32.mrf.mxu0
      %v2627 = vadd.f32 %v2466, %v2626
      %v2628 = vpop.f32.mrf.mxu0
      %v2629 = vpop.f32.mrf.mxu0
      %v2630 = vadd.f32 %v2469, %v2629
      %v2631 = vpop.f32.mrf.mxu0
      %2632 = vmatprep.mubr.bf16.mxu0 0
      %2633 = vmatmul.mubr.bf16.gmra.mxu0 %v1251
      %v2634 = vpop.f32.mrf.mxu0
      %v2635 = vadd.f32 %v2474, %v2634
      %v2636 = vpop.f32.mrf.mxu0
      %v2637 = vpop.f32.mrf.mxu0
      %v2638 = vadd.f32 %v2477, %v2637
      %v2639 = vpop.f32.mrf.mxu0
      %2640 = vdwg.mxu0
      %v2641 = vpack.c.bf16 %v2518, %v2515
      %v2642 = vpack.c.bf16 %v2526, %v2523
      %v2643 = vpack.c.bf16 %v2534, %v2531
      %v2644 = vpack.c.bf16 %v2542, %v2539
      %v2645 = vpack.c.bf16 %v2550, %v2547
      %v2646 = vpack.c.bf16 %v2558, %v2555
      %v2647 = vpack.c.bf16 %v2566, %v2563
      %v2648 = vpack.c.bf16 %v2574, %v2571
      %v2649 = vpack.c.bf16 %v2582, %v2579
      %v2650 = vpack.c.bf16 %v2590, %v2587
      %v2651 = vpack.c.bf16 %v2598, %v2595
      %v2652 = vpack.c.bf16 %v2606, %v2603
      %v2653 = vpack.c.bf16 %v2614, %v2611
      %v2654 = vpack.c.bf16 %v2622, %v2619
      %v2655 = vpack.c.bf16 %v2630, %v2627
      %v2656 = vpack.c.bf16 %v2638, %v2635
      %v2673 = vunpack.c.l.b16 %v2641
      %v2674 = vunpack.c.h.b16 %v2641
      %v2675 = vunpack.c.l.b16 %v2642
      %v2676 = vunpack.c.h.b16 %v2642
      %v2677 = vunpack.c.l.b16 %v2643
      %v2678 = vunpack.c.h.b16 %v2643
      %v2679 = vunpack.c.l.b16 %v2644
      %v2680 = vunpack.c.h.b16 %v2644
      %v2681 = vunpack.c.l.b16 %v2645
      %v2682 = vunpack.c.h.b16 %v2645
      %v2683 = vunpack.c.l.b16 %v2646
      %v2684 = vunpack.c.h.b16 %v2646
      %v2685 = vunpack.c.l.b16 %v2647
      %v2686 = vunpack.c.h.b16 %v2647
      %v2687 = vunpack.c.l.b16 %v2648
      %v2688 = vunpack.c.h.b16 %v2648
      %v2689 = vunpack.c.l.b16 %v2649
      %v2690 = vunpack.c.h.b16 %v2649
      %v2691 = vunpack.c.l.b16 %v2650
      %v2692 = vunpack.c.h.b16 %v2650
      %v2693 = vunpack.c.l.b16 %v2651
      %v2694 = vunpack.c.h.b16 %v2651
      %v2695 = vunpack.c.l.b16 %v2652
      %v2696 = vunpack.c.h.b16 %v2652
      %v2697 = vunpack.c.l.b16 %v2653
      %v2698 = vunpack.c.h.b16 %v2653
      %v2699 = vunpack.c.l.b16 %v2654
      %v2700 = vunpack.c.h.b16 %v2654
      %v2701 = vunpack.c.l.b16 %v2655
      %v2702 = vunpack.c.h.b16 %v2655
      %v2703 = vunpack.c.l.b16 %v2656
      %v2704 = vunpack.c.h.b16 %v2656
      %v2705 = vpack.c.b16 %v2673, %v2673
      %v2706 = vpack.c.b16 %v2674, %v2674
      %v2707 = vpack.c.b16 %v2675, %v2675
      %v2708 = vpack.c.b16 %v2676, %v2676
      %v2709 = vpack.c.b16 %v2677, %v2677
      %v2710 = vpack.c.b16 %v2678, %v2678
      %v2711 = vpack.c.b16 %v2679, %v2679
      %v2712 = vpack.c.b16 %v2680, %v2680
      %v2713 = vpack.c.b16 %v2681, %v2681
      %v2714 = vpack.c.b16 %v2682, %v2682
      %v2715 = vpack.c.b16 %v2683, %v2683
      %v2716 = vpack.c.b16 %v2684, %v2684
      %v2717 = vpack.c.b16 %v2685, %v2685
      %v2718 = vpack.c.b16 %v2686, %v2686
      %v2719 = vpack.c.b16 %v2687, %v2687
      %v2720 = vpack.c.b16 %v2688, %v2688
      %v2721 = vpack.c.b16 %v2689, %v2689
      %v2722 = vpack.c.b16 %v2690, %v2690
      %v2723 = vpack.c.b16 %v2691, %v2691
      %v2724 = vpack.c.b16 %v2692, %v2692
      %v2725 = vpack.c.b16 %v2693, %v2693
      %v2726 = vpack.c.b16 %v2694, %v2694
      %v2727 = vpack.c.b16 %v2695, %v2695
      %v2728 = vpack.c.b16 %v2696, %v2696
      %v2729 = vpack.c.b16 %v2697, %v2697
      %v2730 = vpack.c.b16 %v2698, %v2698
      %v2731 = vpack.c.b16 %v2699, %v2699
      %v2732 = vpack.c.b16 %v2700, %v2700
      %v2733 = vpack.c.b16 %v2701, %v2701
      %v2734 = vpack.c.b16 %v2702, %v2702
      %v2735 = vpack.c.b16 %v2703, %v2703
      %v2736 = vpack.c.b16 %v2704, %v2704
      %2769 = vst [vmem:[%s479] sm:$0xf] %v2705
      %2770 = vst [vmem:[%s479 + $0x4] sm:$0xf] %v2706
      %2771 = vst [vmem:[%s479 + $0x8] sm:$0xf] %v2707
      %2772 = vst [vmem:[%s479 + $0xc] sm:$0xf] %v2708
      %2773 = vst [vmem:[%s479 + $0x10] sm:$0xf] %v2709
      %2774 = vst [vmem:[%s479 + $0x14] sm:$0xf] %v2710
      %2775 = vst [vmem:[%s479 + $0x18] sm:$0xf] %v2711
      %2776 = vst [vmem:[%s479 + $0x1c] sm:$0xf] %v2712
      %2777 = vst [vmem:[%s479 + $0x20] sm:$0xf] %v2713
      %2778 = vst [vmem:[%s479 + $0x24] sm:$0xf] %v2714
      %2779 = vst [vmem:[%s479 + $0x28] sm:$0xf] %v2715
      %2780 = vst [vmem:[%s479 + $0x2c] sm:$0xf] %v2716
      %2781 = vst [vmem:[%s479 + $0x30] sm:$0xf] %v2717
      %2782 = vst [vmem:[%s479 + $0x34] sm:$0xf] %v2718
      %2783 = vst [vmem:[%s479 + $0x38] sm:$0xf] %v2719
      %2784 = vst [vmem:[%s479 + $0x3c] sm:$0xf] %v2720
      %2785 = vst [vmem:[%s479 + $0x40] sm:$0xf] %v2721
      %2786 = vst [vmem:[%s479 + $0x44] sm:$0xf] %v2722
      %2787 = vst [vmem:[%s479 + $0x48] sm:$0xf] %v2723
      %2788 = vst [vmem:[%s479 + $0x4c] sm:$0xf] %v2724
      %2789 = vst [vmem:[%s479 + $0x50] sm:$0xf] %v2725
      %2790 = vst [vmem:[%s479 + $0x54] sm:$0xf] %v2726
      %2791 = vst [vmem:[%s479 + $0x58] sm:$0xf] %v2727
      %2792 = vst [vmem:[%s479 + $0x5c] sm:$0xf] %v2728
      %2793 = vst [vmem:[%s479 + $0x60] sm:$0xf] %v2729
      %2794 = vst [vmem:[%s479 + $0x64] sm:$0xf] %v2730
      %2795 = vst [vmem:[%s479 + $0x68] sm:$0xf] %v2731
      %2796 = vst [vmem:[%s479 + $0x6c] sm:$0xf] %v2732
      %2797 = vst [vmem:[%s479 + $0x70] sm:$0xf] %v2733
      %2798 = vst [vmem:[%s479 + $0x74] sm:$0xf] %v2734
      %2799 = vst [vmem:[%s479 + $0x78] sm:$0xf] %v2735
      %2800 = vst [vmem:[%s479 + $0x7c] sm:$0xf] %v2736
      %p2801 = scmp.eq.s32.totalorder %s25, 0
      // Predicated region
      $region49: #{conv_block_forward.4} parent=47 // pred_check
        %p2802 = pneg %p2801
      $region50: #{conv_block_forward.4} parent=47 // pred_check_branch
        %2804 = sbr.rel (%p2802) target = $region52
      $region51: #{conv_block_forward.4} parent=47 // pred_region
        %2805 = vst [vmem:[%s484] sm:$0x3] 0.0
      $region52: #{conv_block_forward.4} parent=47 // pred_fallthru
        _
      %v2806 = vadd.f32 %v2515, %v2518
      %v2807 = vadd.f32 %v2806, %v2523
      %v2808 = vadd.f32 %v2807, %v2526
      %v2809 = vadd.f32 %v2808, %v2531
      %v2810 = vadd.f32 %v2809, %v2534
      %v2811 = vadd.f32 %v2810, %v2539
      %v2812 = vadd.f32 %v2811, %v2542
      %v2813 = vadd.f32 %v2812, %v2547
      %v2814 = vadd.f32 %v2813, %v2550
      %v2815 = vadd.f32 %v2814, %v2555
      %v2816 = vadd.f32 %v2815, %v2558
      %v2817 = vadd.f32 %v2816, %v2563
      %v2818 = vadd.f32 %v2817, %v2566
      %v2819 = vadd.f32 %v2818, %v2571
      %v2820 = vadd.f32 %v2819, %v2574
      %v2821 = vadd.f32 %v2820, %v2579
      %v2822 = vadd.f32 %v2821, %v2582
      %v2823 = vadd.f32 %v2822, %v2587
      %v2824 = vadd.f32 %v2823, %v2590
      %v2825 = vadd.f32 %v2824, %v2595
      %v2826 = vadd.f32 %v2825, %v2598
      %v2827 = vadd.f32 %v2826, %v2603
      %v2828 = vadd.f32 %v2827, %v2606
      %v2829 = vadd.f32 %v2828, %v2611
      %v2830 = vadd.f32 %v2829, %v2614
      %v2831 = vadd.f32 %v2830, %v2619
      %v2832 = vadd.f32 %v2831, %v2622
      %v2833 = vadd.f32 %v2832, %v2627
      %v2834 = vadd.f32 %v2833, %v2630
      %v2835 = vadd.f32 %v2834, %v2635
      %v2836 = vadd.f32 %v2835, %v2638
      %v2837 = vrot.slane %v2836, 4
      %v2838 = vadd.f32 %v2836, %v2837
      %v2839 = vrot.slane %v2838, 2
      %v2840 = vadd.f32 %v2838, %v2839
      %v2841 = vrot.slane %v2840, 1
      %v2842 = vadd.f32 %v2840, %v2841
      %v2843 = vmul.f32 %v2515, %v2515
      %v2844 = vmul.f32 %v2518, %v2518
      %v2845 = vmul.f32 %v2523, %v2523
      %v2846 = vmul.f32 %v2526, %v2526
      %v2847 = vmul.f32 %v2531, %v2531
      %v2848 = vmul.f32 %v2534, %v2534
      %v2849 = vmul.f32 %v2539, %v2539
      %v2850 = vmul.f32 %v2542, %v2542
      %v2851 = vmul.f32 %v2547, %v2547
      %v2852 = vmul.f32 %v2550, %v2550
      %v2853 = vmul.f32 %v2555, %v2555
      %v2854 = vmul.f32 %v2558, %v2558
      %v2855 = vmul.f32 %v2563, %v2563
      %v2856 = vmul.f32 %v2566, %v2566
      %v2857 = vmul.f32 %v2571, %v2571
      %v2858 = vmul.f32 %v2574, %v2574
      %v2859 = vmul.f32 %v2579, %v2579
      %v2860 = vmul.f32 %v2582, %v2582
      %v2861 = vmul.f32 %v2587, %v2587
      %v2862 = vmul.f32 %v2590, %v2590
      %v2863 = vmul.f32 %v2595, %v2595
      %v2864 = vmul.f32 %v2598, %v2598
      %v2865 = vmul.f32 %v2603, %v2603
      %v2866 = vmul.f32 %v2606, %v2606
      %v2867 = vmul.f32 %v2611, %v2611
      %v2868 = vmul.f32 %v2614, %v2614
      %v2869 = vmul.f32 %v2619, %v2619
      %v2870 = vmul.f32 %v2622, %v2622
      %v2871 = vmul.f32 %v2627, %v2627
      %v2872 = vmul.f32 %v2630, %v2630
      %v2873 = vmul.f32 %v2635, %v2635
      %v2874 = vmul.f32 %v2638, %v2638
      %v2875 = vadd.f32 %v2843, %v2844
      %v2876 = vadd.f32 %v2875, %v2845
      %v2877 = vadd.f32 %v2876, %v2846
      %v2878 = vadd.f32 %v2877, %v2847
      %v2879 = vadd.f32 %v2878, %v2848
      %v2880 = vadd.f32 %v2879, %v2849
      %v2881 = vadd.f32 %v2880, %v2850
      %v2882 = vadd.f32 %v2881, %v2851
      %v2883 = vadd.f32 %v2882, %v2852
      %v2884 = vadd.f32 %v2883, %v2853
      %v2885 = vadd.f32 %v2884, %v2854
      %v2886 = vadd.f32 %v2885, %v2855
      %v2887 = vadd.f32 %v2886, %v2856
      %v2888 = vadd.f32 %v2887, %v2857
      %v2889 = vadd.f32 %v2888, %v2858
      %v2890 = vadd.f32 %v2889, %v2859
      %v2891 = vadd.f32 %v2890, %v2860
      %v2892 = vadd.f32 %v2891, %v2861
      %v2893 = vadd.f32 %v2892, %v2862
      %v2894 = vadd.f32 %v2893, %v2863
      %v2895 = vadd.f32 %v2894, %v2864
      %v2896 = vadd.f32 %v2895, %v2865
      %v2897 = vadd.f32 %v2896, %v2866
      %v2898 = vadd.f32 %v2897, %v2867
      %v2899 = vadd.f32 %v2898, %v2868
      %v2900 = vadd.f32 %v2899, %v2869
      %v2901 = vadd.f32 %v2900, %v2870
      %v2902 = vadd.f32 %v2901, %v2871
      %v2903 = vadd.f32 %v2902, %v2872
      %v2904 = vadd.f32 %v2903, %v2873
      %v2905 = vadd.f32 %v2904, %v2874
      %v2906 = vrot.slane %v2905, 4
      %v2907 = vadd.f32 %v2905, %v2906
      %v2908 = vrot.slane %v2907, 2
      %v2909 = vadd.f32 %v2907, %v2908
      %v2910 = vrot.slane %v2909, 1
      %v2911 = vadd.f32 %v2909, %v2910
      %vm2912 = vcmask 1040384
      %v2913 = vsel %vm2912, %v2842, %v2911
      %v2914 = vld [vmem:[%s484] sm:$0x3]
      %v2915 = vadd.f32 %v2914, %v2913
      %2916 = vst [vmem:[%s484] sm:$0x3] %v2915
      %s2917 = smul.u32 16, %s25
      %p2918 = scmp.lt.s32.totalorder %s24, 1
      %s2919 = scalar_select %p2918, %s24, 1
      %p2920 = scmp.lt.s32.totalorder %s2917, 15
      %s2921 = scalar_select %p2920, %s2917, 15
      %s2922 = smul.addr %s2921, 2
      %s2923 = smul.addr %s2919, 32
      %s2924 = sadd.s32 %s2922, %s2923
      %s2925 = smul.addr %s2924, 4
      %s2926 = scalar_lea.vmem %s7, %s2925
      %p2927 = scmp.lt.s32.totalorder %s24, 1
      %s2928 = scalar_select %p2927, %s24, 1
      %s2929 = smul.addr %s2928, 2
      %s2930 = scalar_lea.vmem %s8, %s2929
      // Predicated region
      $region53: #{conv_block_forward.4} parent=47 // pred_check
        %p2931 = pneg %p236
      $region54: #{conv_block_forward.4} parent=47 // pred_check_branch
        %2933 = sbr.rel (%p2931) target = $region56
      $region55: #{conv_block_forward.4} parent=47 // pred_region
        %s2934 = smul.u32 16, %s25
      $region56: #{conv_block_forward.4} parent=47 // pred_fallthru
        _
      // Predicated region
      $region57: #{conv_block_forward.4} parent=47 // pred_check
        %p2935 = pneg %p262
      $region58: #{conv_block_forward.4} parent=47 // pred_check_branch
        %2937 = sbr.rel (%p2935) target = $region60
      $region59: #{conv_block_forward.4} parent=47 // pred_region
        _
      $region60: #{conv_block_forward.4} parent=47 // pred_fallthru
        _
    $region48: #{conv_block_forward.4} parent=5 // pred_fallthru
      _
    %p2938 = scmp.le.s32.totalorder 2, %s15
    // Predicated region
    $region61: #{conv_block_forward.4} parent=5 // pred_check
      %p2939 = pneg %p2938
    $region62: #{conv_block_forward.4} parent=5 // pred_check_branch
      %2941 = sbr.rel (%p2939) target = $region64
    $region63: #{conv_block_forward.4} parent=5 // pred_region
      %s2942 = ssub.s32 %s15, 2
      // Predicated region
      $region65: #{conv_block_forward.4} parent=63 // pred_check
        %p2943 = pneg %p242
      $region66: #{conv_block_forward.4} parent=63 // pred_check_branch
        %2945 = sbr.rel (%p2943) target = $region68
      $region67: #{conv_block_forward.4} parent=63 // pred_region
        %s2946 = smul.u32 16, %s27
        %p2947 = scmp.lt.s32.totalorder %s26, 1
        %s2948 = scalar_select %p2947, %s26, 1
        %p2949 = scmp.lt.s32.totalorder %s2946, 15
        %s2950 = scalar_select %p2949, %s2946, 15
        %s2951 = smul.addr %s2950, 2
        %s2952 = smul.addr %s2948, 32
        %s2953 = sadd.s32 %s2951, %s2952
        %s2954 = smul.addr %s2953, 4
        %s2955 = scalar_lea.vmem %s7, %s2954
      $region68: #{conv_block_forward.4} parent=63 // pred_fallthru
        _
      // Predicated region
      $region69: #{conv_block_forward.4} parent=63 // pred_check
        %p2956 = pneg %p268
      $region70: #{conv_block_forward.4} parent=63 // pred_check_branch
        %2958 = sbr.rel (%p2956) target = $region72
      $region71: #{conv_block_forward.4} parent=63 // pred_region
        %p2959 = scmp.lt.s32.totalorder %s26, 1
        %s2960 = scalar_select %p2959, %s26, 1
        %s2961 = smul.addr %s2960, 2
        %s2962 = scalar_lea.vmem %s8, %s2961
      $region72: #{conv_block_forward.4} parent=63 // pred_fallthru
        _
    $region64: #{conv_block_forward.4} parent=5 // pred_fallthru
      _
  $region6: #{conv_block_forward.4} parent=0 // loop_footer
    %s19 = sadd.s32 1, %s15
  $region7: #{conv_block_forward.4} parent=0 // loop_footer_branch
    %14 = sbr.rel target = $region3
  $region8: #{conv_block_forward.4} parent=0 // loop_exit
    _

</llo_original>
